<compile_context>
chip_gen: v5e
topology: v5e:2x2
jax: 0.10.0
libtpu: 0.0.40
codegen_flags: <defaults>
</compile_context>

<pallas_src>
import functools
import math

import jax
import jax.numpy as jnp
from jax.experimental import pallas as pl
from jax.experimental.pallas import tpu as pltpu

# ----------------------------- "Alphabet" ------------------------------------
CLS_IDX, PAD_IDX, SOS_IDX, EOS_IDX, MASK_IDX = 0, 1, 2, 3, 4
VOCAB = 28                                    # len(alphabet.all_toks)
V_PAD = 128                                   # lane-dense padded vocab width
TOKENS_TO_KEEP = tuple(range(5, VOCAB))       # "amino-acid" tokens

# ----------------------------- model config ----------------------------------
EMB_DIM = 32
NUM_HEADS = 4
FFN_DIM = 64
NUM_ATTN_LAYERS = 2                           # encoder depth == decoder depth
NUM_BLOCKS = 2 * NUM_ATTN_LAYERS              # encoder blocks + decoder blocks

_BLOCK_WEIGHT_NAMES = ('ln1_g', 'ln1_b', 'wq', 'wk', 'wv', 'bq', 'bk', 'bv',
                       'wo', 'bo', 'ln2_g', 'ln2_b', 'w1', 'b1', 'w2', 'b2')


def _weight_args(blocks, head):
    return tuple(blocks[n] for n in _BLOCK_WEIGHT_NAMES) + (
        head['ln_g'], head['ln_b'], head['w'], head['b'])


# ------------------------------ kernel helpers --------------------------------
def _mm(a, w):
    """MXU matmul: bf16 operands, f32 accumulation."""
    return jnp.dot(a.astype(jnp.bfloat16), w.astype(jnp.bfloat16),
                   preferred_element_type=jnp.float32)


def _layer_norm(h, g, b, eps=1e-5):
    mu = jnp.mean(h, axis=-1, keepdims=True)
    var = jnp.mean((h - mu) ** 2, axis=-1, keepdims=True)
    return (h - mu) * jax.lax.rsqrt(var + eps) * g + b


def _split_heads(t2, bt, n, num_heads, dh):
    # [BT*N, H*dh] -> [H*BT, N, dh]  (head-major leading batch).  Expressed with
    # lane slices + a leading-axis concat (relayout classes known to lower).
    t3 = t2.reshape(bt, n, num_heads * dh)
    return jnp.concatenate(
        [t3[:, :, h * dh:(h + 1) * dh] for h in range(num_heads)], axis=0)


def _merge_heads(c, bt, n, num_heads, dh):
    # [H*BT, N, dh] -> [BT*N, H*dh]  (leading-axis slices are free).
    parts = [c[h * bt:(h + 1) * bt] for h in range(num_heads)]
    return jnp.concatenate(parts, axis=-1).reshape(bt * n, num_heads * dh)


def _transformer_logits(x_ref, mask_ref, w_refs, num_heads, num_layers):
    """Shared body: embedded tokens -> padded vocab logits [BT*N, V_PAD]."""
    (ln1_g, ln1_b, wq, wk, wv, bq, bk, bv, wo, bo, ln2_g, ln2_b,
     w1, b1, w2, b2, hln_g, hln_b, hw, hb) = w_refs

    x3 = x_ref[...].astype(jnp.float32)            # [BT, N, D]
    BT, N, D = x3.shape
    R = BT * N
    H = num_heads
    dh = D // H
    scale = jnp.float32(1.0 / math.sqrt(dh))

    x = x3.reshape(R, D)                           # lane-dense activation slab

    key_mask = mask_ref[...] > 0.5                 # [BT, 1, N]  (hoisted)
    key_mask_z = jnp.concatenate([key_mask] * H, axis=0)   # [H*BT, 1, N]
    neg = jnp.float32(-1e9)

    for l in range(num_layers):                    # static, fully unrolled
        # ---- pre-norm multi-head self-attention + residual ----
        h = _layer_norm(x, ln1_g[l], ln1_b[l])
        q = _split_heads(_mm(h, wq[l]) + bq[l], BT, N, H, dh)   # [Z, N, dh]
        k = _split_heads(_mm(h, wk[l]) + bk[l], BT, N, H, dh)
        v = _split_heads(_mm(h, wv[l]) + bv[l], BT, N, H, dh)

        # head-batched attention: ONE batched einsum per step (no per-head loop)
        s = jnp.einsum('znd,zmd->znm',
                       q.astype(jnp.bfloat16), k.astype(jnp.bfloat16),
                       preferred_element_type=jnp.float32) * scale
        s = jnp.where(key_mask_z, s, neg)
        s = s - jnp.max(s, axis=-1, keepdims=True)
        p = jnp.exp(s)
        p = p * pl.reciprocal(jnp.sum(p, axis=-1, keepdims=True), approx=True)
        ctx = jnp.einsum('znm,zmd->znd',
                         p.astype(jnp.bfloat16), v.astype(jnp.bfloat16),
                         preferred_element_type=jnp.float32)    # [Z, N, dh]
        attn = _merge_heads(ctx, BT, N, H, dh)                  # [R, D]
        x = x + _mm(attn, wo[l]) + bo[l]

        # ---- pre-norm feed-forward + residual ----
        h2 = _layer_norm(x, ln2_g[l], ln2_b[l])
        ff = _mm(h2, w1[l]) + b1[l]
        # TODO(synk): PyTorch nn.GELU default is exact erf; tanh approx used here.
        ff = jax.nn.gelu(ff, approximate=True)
        x = x + _mm(ff, w2[l]) + b2[l]

    # ---- decoder vocab head (lane-dense V_PAD columns) ----
    hf = _layer_norm(x, hln_g[...], hln_b[...])
    return _mm(hf, hw[...]) + hb[...]              # [R, V_PAD]


# =============================== Pallas kernels ================================
def _loss_kernel(x_ref, mask_ref, labels_ref, *refs,
                 num_heads, num_layers, pad_idx, vocab):
    w_refs = refs[:-2]
    total_ref, count_ref = refs[-2], refs[-1]

    logits = _transformer_logits(x_ref, mask_ref, w_refs, num_heads, num_layers)
    R, VP = logits.shape

    # masked cross-entropy (ignore_index = pad_idx); logits never leave VMEM.
    col = jax.lax.broadcasted_iota(jnp.int32, (R, VP), 1)
    logits = jnp.where(col < vocab, logits, jnp.float32(-1e30))  # drop pad cols
    m = jnp.max(logits, axis=-1, keepdims=True)
    lse = jnp.log(jnp.sum(jnp.exp(logits - m), axis=-1, keepdims=True)) + m
    logp = logits - lse

    labels = labels_ref[...].reshape(R, 1)                       # [R, 1] int32
    nll = -jnp.sum(jnp.where(col == labels, logp, 0.0),
                   axis=-1, keepdims=True)                       # [R, 1]
    valid = (labels != pad_idx).astype(jnp.float32)
    total_ref[0, 0] = jnp.sum(nll * valid)                       # partial sums
    count_ref[0, 0] = jnp.sum(valid)                             # to SMEM


def _logits_kernel(x_ref, mask_ref, *refs, num_heads, num_layers):
    w_refs = refs[:-1]
    out_ref = refs[-1]
    logits = _transformer_logits(x_ref, mask_ref, w_refs, num_heads, num_layers)
    BT, N = x_ref.shape[0], x_ref.shape[1]
    out_ref[...] = logits.reshape(BT, N, -1).astype(out_ref.dtype)


# ============================== Pallas wrappers ================================
def _pick_batch_tile(batch, seqlen, target_rows=256):
    """Largest batch tile giving ~target_rows lane-dense rows per grid step."""
    bt = max(1, min(batch, max(1, target_rows // max(seqlen, 1))))
    while batch % bt != 0:
        bt -= 1
    return bt


def _resident_spec(arr):
    """Whole-array VMEM block pinned to block 0 -> fetched once, stays resident."""
    zeros = (0,) * arr.ndim
    return pl.BlockSpec(arr.shape, lambda i, _z=zeros: _z)


def fused_loss(h_emb, key_mask_f, labels3, blocks, head):
    B, N, D = h_emb.shape
    bt = _pick_batch_tile(B, N)
    nt = B // bt
    weights = _weight_args(blocks, head)
    in_specs = ([pl.BlockSpec((bt, N, D), lambda i: (i, 0, 0)),
                 pl.BlockSpec((bt, 1, N), lambda i: (i, 0, 0)),
                 pl.BlockSpec((bt, N, 1), lambda i: (i, 0, 0))]
                + [_resident_spec(w) for w in weights])
    out_specs = (pl.BlockSpec((1, 1), lambda i: (i, 0),
                              memory_space=pltpu.MemorySpace.SMEM),
                 pl.BlockSpec((1, 1), lambda i: (i, 0),
                              memory_space=pltpu.MemorySpace.SMEM))
    totals, counts = pl.pallas_call(
        functools.partial(_loss_kernel, num_heads=NUM_HEADS,
                          num_layers=blocks['wq'].shape[0],
                          pad_idx=PAD_IDX, vocab=VOCAB),
        grid=(nt,),
        out_shape=(jax.ShapeDtypeStruct((nt, 1), jnp.float32),
                   jax.ShapeDtypeStruct((nt, 1), jnp.float32)),
        in_specs=in_specs,
        out_specs=out_specs,
        compiler_params=pltpu.CompilerParams(dimension_semantics=("parallel",)),
    )(h_emb, key_mask_f, labels3, *weights)
    total = jnp.sum(totals)
    count = jnp.maximum(jnp.sum(counts), 1.0)   # all-PAD -> 0.0 (PyTorch: NaN)
    return total / count


def fused_logits(h_emb, key_mask_f, blocks, head):
    B, N, D = h_emb.shape
    bt = _pick_batch_tile(B, N)
    nt = B // bt
    weights = _weight_args(blocks, head)
    in_specs = ([pl.BlockSpec((bt, N, D), lambda i: (i, 0, 0)),
                 pl.BlockSpec((bt, 1, N), lambda i: (i, 0, 0))]
                + [_resident_spec(w) for w in weights])
    logits = pl.pallas_call(
        functools.partial(_logits_kernel, num_heads=NUM_HEADS,
                          num_layers=blocks['wq'].shape[0]),
        grid=(nt,),
        out_shape=jax.ShapeDtypeStruct((B, N, V_PAD), jnp.float32),
        in_specs=in_specs,
        out_specs=pl.BlockSpec((bt, N, V_PAD), lambda i: (i, 0, 0)),
        compiler_params=pltpu.CompilerParams(dimension_semantics=("parallel",)),
    )(h_emb, key_mask_f, *weights)
    return logits[:, :, :VOCAB]                  # drop lane padding


# ============================ parameter construction ==========================
def _init_block(key, d, f):
    ks = jax.random.split(key, 6)
    s = 0.02
    return dict(
        ln1_g=jnp.ones((1, d), jnp.float32), ln1_b=jnp.zeros((1, d), jnp.float32),
        wq=s * jax.random.normal(ks[0], (d, d), jnp.float32),
        wk=s * jax.random.normal(ks[1], (d, d), jnp.float32),
        wv=s * jax.random.normal(ks[2], (d, d), jnp.float32),
        bq=jnp.zeros((1, d), jnp.float32),
        bk=jnp.zeros((1, d), jnp.float32),
        bv=jnp.zeros((1, d), jnp.float32),
        wo=s * jax.random.normal(ks[3], (d, d), jnp.float32),
        bo=jnp.zeros((1, d), jnp.float32),
        ln2_g=jnp.ones((1, d), jnp.float32), ln2_b=jnp.zeros((1, d), jnp.float32),
        w1=s * jax.random.normal(ks[4], (d, f), jnp.float32),
        b1=jnp.zeros((1, f), jnp.float32),
        w2=s * jax.random.normal(ks[5], (f, d), jnp.float32),
        b2=jnp.zeros((1, d), jnp.float32),
    )


def init_params(key):
    kemb, khead, *kblocks = jax.random.split(key, 2 + NUM_BLOCKS)
    emb = 0.02 * jax.random.normal(kemb, (VOCAB, EMB_DIM), jnp.float32)
    emb = emb.at[PAD_IDX].set(0.0)                # nn.Embedding padding_idx
    block_list = [_init_block(kblocks[i], EMB_DIM, FFN_DIM)
                  for i in range(NUM_BLOCKS)]
    blocks = {name: jnp.stack([blk[name] for blk in block_list])
              for name in block_list[0]}
    head_w = jnp.zeros((EMB_DIM, V_PAD), jnp.float32)
    head_w = head_w.at[:, :VOCAB].set(
        0.02 * jax.random.normal(khead, (EMB_DIM, VOCAB), jnp.float32))
    head = dict(ln_g=jnp.ones((1, EMB_DIM), jnp.float32),
                ln_b=jnp.zeros((1, EMB_DIM), jnp.float32),
                w=head_w, b=jnp.zeros((1, V_PAD), jnp.float32))
    return dict(embedding=emb, blocks=blocks, head=head)


# ============================ forward (BaselineModel) =========================
def mask_protocol(key, sequences, masking_prob, random_token_prob):
    # TODO(synk): get_sequence_mask / apply_random_token_swap / get_attn_mask
    # helper sources are not given; semantics approximated (BERT-style).
    k1, k2, k3 = jax.random.split(key, 3)
    keepable = jnp.isin(sequences, jnp.array(TOKENS_TO_KEEP))
    u = jax.random.uniform(k1, sequences.shape)
    tokens_mask = keepable & (u < masking_prob * (1.0 - random_token_prob))
    masked = jnp.where(tokens_mask, MASK_IDX, sequences)
    if random_token_prob > 0.0:
        u2 = jax.random.uniform(k2, sequences.shape)
        swap_mask = keepable & (~tokens_mask) & (u2 < masking_prob * random_token_prob)
        rand_tok = jax.random.choice(k3, jnp.array(TOKENS_TO_KEEP),
                                     shape=sequences.shape)
        masked = jnp.where(swap_mask, rand_tok, masked)
    # get_attn_mask(..., include_cls_token=False): valid (non-pad), cls excluded
    attn_mask = (masked != PAD_IDX) & (masked != CLS_IDX)
    decoder_labels = jnp.where(tokens_mask, sequences, PAD_IDX)
    return masked, decoder_labels, attn_mask


def forward(params, sequences, key, masking_prob=0.15, random_token_prob=0.1,
            return_logits=False):
    masked, labels, attn_mask = mask_protocol(key, sequences, masking_prob,
                                              random_token_prob)
    h = params['embedding'][masked]                       # embedding gather (glue)
    key_mask_f = attn_mask.astype(jnp.float32)[:, None, :]   # [B, 1, N]
    if return_logits:
        return fused_logits(h, key_mask_f, params['blocks'], params['head'])
    labels3 = labels.astype(jnp.int32)[:, :, None]            # [B, N, 1]
    return fused_loss(h, key_mask_f, labels3,
                      params['blocks'], params['head'])   # ignore_index = PAD


# ==================================== main ====================================
if __name__ == "__main__":
    key = jax.random.PRNGKey(0)
    k_param, k_tok, k_mask = jax.random.split(key, 3)

    B, N = 2, 8
    seqs = jax.random.randint(k_tok, (B, N), 5, VOCAB)    # amino-acid tokens
    seqs = seqs.at[:, 0].set(CLS_IDX)
    seqs = seqs.at[0, N - 1].set(EOS_IDX)
    seqs = seqs.at[1, N - 2].set(EOS_IDX)
    seqs = seqs.at[1, N - 1].set(PAD_IDX)
    seqs = seqs.astype(jnp.int32)

    params = init_params(k_param)

    loss = forward(params, seqs, k_mask, masking_prob=0.15, random_token_prob=0.1)
    loss = jax.block_until_ready(loss)
    assert jnp.isfinite(loss), f"loss not finite: {loss}"

    logits = forward(params, seqs, k_mask, return_logits=True)
    logits = jax.block_until_ready(logits)
    assert logits.shape == (B, N, VOCAB), logits.shape

    print("KERNEL_OK")
</pallas_src>

<mosaic_0001>
module attributes {stable_mosaic.version = 11 : i64} {
  func.func @_loss_kernel(%arg0: i32, %arg1: memref<2x8x32xf32, #tpu.memory_space<vmem>>, %arg2: memref<2x1x8xf32, #tpu.memory_space<vmem>>, %arg3: memref<2x8x1xi32, #tpu.memory_space<vmem>>, %arg4: memref<4x1x32xf32, #tpu.memory_space<vmem>>, %arg5: memref<4x1x32xf32, #tpu.memory_space<vmem>>, %arg6: memref<4x32x32xf32, #tpu.memory_space<vmem>>, %arg7: memref<4x32x32xf32, #tpu.memory_space<vmem>>, %arg8: memref<4x32x32xf32, #tpu.memory_space<vmem>>, %arg9: memref<4x1x32xf32, #tpu.memory_space<vmem>>, %arg10: memref<4x1x32xf32, #tpu.memory_space<vmem>>, %arg11: memref<4x1x32xf32, #tpu.memory_space<vmem>>, %arg12: memref<4x32x32xf32, #tpu.memory_space<vmem>>, %arg13: memref<4x1x32xf32, #tpu.memory_space<vmem>>, %arg14: memref<4x1x32xf32, #tpu.memory_space<vmem>>, %arg15: memref<4x1x32xf32, #tpu.memory_space<vmem>>, %arg16: memref<4x32x64xf32, #tpu.memory_space<vmem>>, %arg17: memref<4x1x64xf32, #tpu.memory_space<vmem>>, %arg18: memref<4x64x32xf32, #tpu.memory_space<vmem>>, %arg19: memref<4x1x32xf32, #tpu.memory_space<vmem>>, %arg20: memref<1x32xf32, #tpu.memory_space<vmem>>, %arg21: memref<1x32xf32, #tpu.memory_space<vmem>>, %arg22: memref<32x128xf32, #tpu.memory_space<vmem>>, %arg23: memref<1x128xf32, #tpu.memory_space<vmem>>, %arg24: memref<1x1xf32, #tpu.memory_space<smem>>, %arg25: memref<1x1xf32, #tpu.memory_space<smem>>) attributes {dimension_semantics = [#tpu.dimension_semantics<parallel>], iteration_bounds = array<i64: 1>, scalar_prefetch = 0 : i64, scratch_operands = 0 : i64, tpu.core_type = #tpu.core_type<tc>, window_params = [{transform_indices = @transform_0, window_bounds = array<i64: 2, 8, 32>}, {transform_indices = @transform_1, window_bounds = array<i64: 2, 1, 8>}, {transform_indices = @transform_2, window_bounds = array<i64: 2, 8, 1>}, {pipeline_mode = #tpu.pipeline_mode<synchronous>, transform_indices = @transform_3, window_bounds = array<i64: 4, 1, 32>}, {pipeline_mode = #tpu.pipeline_mode<synchronous>, transform_indices = @transform_4, window_bounds = array<i64: 4, 1, 32>}, {pipeline_mode = #tpu.pipeline_mode<synchronous>, transform_indices = @transform_5, window_bounds = array<i64: 4, 32, 32>}, {pipeline_mode = #tpu.pipeline_mode<synchronous>, transform_indices = @transform_6, window_bounds = array<i64: 4, 32, 32>}, {pipeline_mode = #tpu.pipeline_mode<synchronous>, transform_indices = @transform_7, window_bounds = array<i64: 4, 32, 32>}, {pipeline_mode = #tpu.pipeline_mode<synchronous>, transform_indices = @transform_8, window_bounds = array<i64: 4, 1, 32>}, {pipeline_mode = #tpu.pipeline_mode<synchronous>, transform_indices = @transform_9, window_bounds = array<i64: 4, 1, 32>}, {pipeline_mode = #tpu.pipeline_mode<synchronous>, transform_indices = @transform_10, window_bounds = array<i64: 4, 1, 32>}, {pipeline_mode = #tpu.pipeline_mode<synchronous>, transform_indices = @transform_11, window_bounds = array<i64: 4, 32, 32>}, {pipeline_mode = #tpu.pipeline_mode<synchronous>, transform_indices = @transform_12, window_bounds = array<i64: 4, 1, 32>}, {pipeline_mode = #tpu.pipeline_mode<synchronous>, transform_indices = @transform_13, window_bounds = array<i64: 4, 1, 32>}, {pipeline_mode = #tpu.pipeline_mode<synchronous>, transform_indices = @transform_14, window_bounds = array<i64: 4, 1, 32>}, {pipeline_mode = #tpu.pipeline_mode<synchronous>, transform_indices = @transform_15, window_bounds = array<i64: 4, 32, 64>}, {pipeline_mode = #tpu.pipeline_mode<synchronous>, transform_indices = @transform_16, window_bounds = array<i64: 4, 1, 64>}, {pipeline_mode = #tpu.pipeline_mode<synchronous>, transform_indices = @transform_17, window_bounds = array<i64: 4, 64, 32>}, {pipeline_mode = #tpu.pipeline_mode<synchronous>, transform_indices = @transform_18, window_bounds = array<i64: 4, 1, 32>}, {pipeline_mode = #tpu.pipeline_mode<synchronous>, transform_indices = @transform_19, window_bounds = array<i64: 1, 32>}, {pipeline_mode = #tpu.pipeline_mode<synchronous>, transform_indices = @transform_20, window_bounds = array<i64: 1, 32>}, {pipeline_mode = #tpu.pipeline_mode<synchronous>, transform_indices = @transform_21, window_bounds = array<i64: 32, 128>}, {pipeline_mode = #tpu.pipeline_mode<synchronous>, transform_indices = @transform_22, window_bounds = array<i64: 1, 128>}, {transform_indices = @transform_23, window_bounds = array<i64: 1, 1>}, {transform_indices = @transform_24, window_bounds = array<i64: 1, 1>}]} {
    %c0 = arith.constant 0 : index
    %c0_0 = arith.constant 0 : index
    %c0_1 = arith.constant 0 : index
    %0 = vector.load %arg1[%c0, %c0_0, %c0_1] : memref<2x8x32xf32, #tpu.memory_space<vmem>>, vector<2x8x32xf32>
    %1 = vector.shape_cast %0 : vector<2x8x32xf32> to vector<16x32xf32>
    %c0_2 = arith.constant 0 : index
    %c0_3 = arith.constant 0 : index
    %c0_4 = arith.constant 0 : index
    %2 = vector.load %arg2[%c0_2, %c0_3, %c0_4] : memref<2x1x8xf32, #tpu.memory_space<vmem>>, vector<2x1x8xf32>
    %cst = arith.constant 5.000000e-01 : f32
    %3 = vector.broadcast %cst : f32 to vector<2x1x8xf32>
    %4 = arith.cmpf ogt, %2, %3 : vector<2x1x8xf32>
    %5 = tpu.concatenate %4, %4, %4, %4 in 0 : vector<2x1x8xi1>, vector<2x1x8xi1>, vector<2x1x8xi1>, vector<2x1x8xi1> -> vector<8x1x8xi1>
    %c0_5 = arith.constant 0 : index
    %c0_6 = arith.constant 0 : index
    %c0_7 = arith.constant 0 : index
    %6 = vector.load %arg4[%c0_5, %c0_6, %c0_7] : memref<4x1x32xf32, #tpu.memory_space<vmem>>, vector<1x1x32xf32>
    %7 = vector.shape_cast %6 : vector<1x1x32xf32> to vector<1x32xf32>
    %c0_8 = arith.constant 0 : index
    %c0_9 = arith.constant 0 : index
    %c0_10 = arith.constant 0 : index
    %8 = vector.load %arg5[%c0_8, %c0_9, %c0_10] : memref<4x1x32xf32, #tpu.memory_space<vmem>>, vector<1x1x32xf32>
    %9 = vector.shape_cast %8 : vector<1x1x32xf32> to vector<1x32xf32>
    %cst_11 = arith.constant dense<0.000000e+00> : vector<16xf32>
    %10 = vector.multi_reduction <add>, %1, %cst_11 [1] : vector<16x32xf32> to vector<16xf32>
    %11 = vector.shape_cast %10 : vector<16xf32> to vector<16x1xf32>
    %cst_12 = arith.constant 3.200000e+01 : f32
    %12 = vector.broadcast %cst_12 : f32 to vector<16x1xf32>
    %13 = arith.divf %11, %12 : vector<16x1xf32>
    %14 = vector.broadcast %13 : vector<16x1xf32> to vector<16x32xf32>
    %15 = arith.subf %1, %14 : vector<16x32xf32>
    %16 = arith.mulf %15, %15 : vector<16x32xf32>
    %cst_13 = arith.constant dense<0.000000e+00> : vector<16xf32>
    %17 = vector.multi_reduction <add>, %16, %cst_13 [1] : vector<16x32xf32> to vector<16xf32>
    %18 = vector.shape_cast %17 : vector<16xf32> to vector<16x1xf32>
    %cst_14 = arith.constant 3.200000e+01 : f32
    %19 = vector.broadcast %cst_14 : f32 to vector<16x1xf32>
    %20 = arith.divf %18, %19 : vector<16x1xf32>
    %21 = vector.broadcast %13 : vector<16x1xf32> to vector<16x32xf32>
    %22 = arith.subf %1, %21 : vector<16x32xf32>
    %cst_15 = arith.constant 9.99999974E-6 : f32
    %23 = vector.broadcast %cst_15 : f32 to vector<16x1xf32>
    %24 = arith.addf %20, %23 : vector<16x1xf32>
    %25 = math.rsqrt %24 : vector<16x1xf32>
    %26 = vector.broadcast %25 : vector<16x1xf32> to vector<16x32xf32>
    %27 = arith.mulf %22, %26 : vector<16x32xf32>
    %28 = vector.broadcast %7 : vector<1x32xf32> to vector<16x32xf32>
    %29 = arith.mulf %27, %28 : vector<16x32xf32>
    %30 = vector.broadcast %9 : vector<1x32xf32> to vector<16x32xf32>
    %31 = arith.addf %29, %30 : vector<16x32xf32>
    %c0_16 = arith.constant 0 : index
    %c0_17 = arith.constant 0 : index
    %c0_18 = arith.constant 0 : index
    %32 = vector.load %arg6[%c0_16, %c0_17, %c0_18] : memref<4x32x32xf32, #tpu.memory_space<vmem>>, vector<1x32x32xf32>
    %33 = vector.shape_cast %32 : vector<1x32x32xf32> to vector<32x32xf32>
    %34 = arith.truncf %31 : vector<16x32xf32> to vector<16x32xbf16>
    %35 = arith.truncf %33 : vector<32x32xf32> to vector<32x32xbf16>
    %cst_19 = arith.constant dense<0.000000e+00> : vector<16x32xf32>
    %36 = tpu.matmul %34, %35, %cst_19 {dimension_numbers = #tpu.dot_dimension_numbers<[1], [0], [0], [1], [0, 0, 1, 1], [], []>} : vector<16x32xbf16>, vector<32x32xbf16>, vector<16x32xf32> -> vector<16x32xf32>
    %c0_20 = arith.constant 0 : index
    %c0_21 = arith.constant 0 : index
    %c0_22 = arith.constant 0 : index
    %37 = vector.load %arg9[%c0_20, %c0_21, %c0_22] : memref<4x1x32xf32, #tpu.memory_space<vmem>>, vector<1x1x32xf32>
    %38 = vector.shape_cast %37 : vector<1x1x32xf32> to vector<1x32xf32>
    %39 = vector.broadcast %38 : vector<1x32xf32> to vector<16x32xf32>
    %40 = arith.addf %36, %39 : vector<16x32xf32>
    %41 = vector.shape_cast %40 : vector<16x32xf32> to vector<2x8x32xf32>
    %42 = vector.extract_strided_slice %41 {offsets = [0, 0, 0], sizes = [2, 8, 8], strides = [1, 1, 1]} : vector<2x8x32xf32> to vector<2x8x8xf32>
    %43 = vector.extract_strided_slice %41 {offsets = [0, 0, 8], sizes = [2, 8, 8], strides = [1, 1, 1]} : vector<2x8x32xf32> to vector<2x8x8xf32>
    %44 = vector.extract_strided_slice %41 {offsets = [0, 0, 16], sizes = [2, 8, 8], strides = [1, 1, 1]} : vector<2x8x32xf32> to vector<2x8x8xf32>
    %45 = vector.extract_strided_slice %41 {offsets = [0, 0, 24], sizes = [2, 8, 8], strides = [1, 1, 1]} : vector<2x8x32xf32> to vector<2x8x8xf32>
    %46 = tpu.concatenate %42, %43, %44, %45 in 0 : vector<2x8x8xf32>, vector<2x8x8xf32>, vector<2x8x8xf32>, vector<2x8x8xf32> -> vector<8x8x8xf32>
    %c0_23 = arith.constant 0 : index
    %c0_24 = arith.constant 0 : index
    %c0_25 = arith.constant 0 : index
    %47 = vector.load %arg7[%c0_23, %c0_24, %c0_25] : memref<4x32x32xf32, #tpu.memory_space<vmem>>, vector<1x32x32xf32>
    %48 = vector.shape_cast %47 : vector<1x32x32xf32> to vector<32x32xf32>
    %49 = arith.truncf %31 : vector<16x32xf32> to vector<16x32xbf16>
    %50 = arith.truncf %48 : vector<32x32xf32> to vector<32x32xbf16>
    %cst_26 = arith.constant dense<0.000000e+00> : vector<16x32xf32>
    %51 = tpu.matmul %49, %50, %cst_26 {dimension_numbers = #tpu.dot_dimension_numbers<[1], [0], [0], [1], [0, 0, 1, 1], [], []>} : vector<16x32xbf16>, vector<32x32xbf16>, vector<16x32xf32> -> vector<16x32xf32>
    %c0_27 = arith.constant 0 : index
    %c0_28 = arith.constant 0 : index
    %c0_29 = arith.constant 0 : index
    %52 = vector.load %arg10[%c0_27, %c0_28, %c0_29] : memref<4x1x32xf32, #tpu.memory_space<vmem>>, vector<1x1x32xf32>
    %53 = vector.shape_cast %52 : vector<1x1x32xf32> to vector<1x32xf32>
    %54 = vector.broadcast %53 : vector<1x32xf32> to vector<16x32xf32>
    %55 = arith.addf %51, %54 : vector<16x32xf32>
    %56 = vector.shape_cast %55 : vector<16x32xf32> to vector<2x8x32xf32>
    %57 = vector.extract_strided_slice %56 {offsets = [0, 0, 0], sizes = [2, 8, 8], strides = [1, 1, 1]} : vector<2x8x32xf32> to vector<2x8x8xf32>
    %58 = vector.extract_strided_slice %56 {offsets = [0, 0, 8], sizes = [2, 8, 8], strides = [1, 1, 1]} : vector<2x8x32xf32> to vector<2x8x8xf32>
    %59 = vector.extract_strided_slice %56 {offsets = [0, 0, 16], sizes = [2, 8, 8], strides = [1, 1, 1]} : vector<2x8x32xf32> to vector<2x8x8xf32>
    %60 = vector.extract_strided_slice %56 {offsets = [0, 0, 24], sizes = [2, 8, 8], strides = [1, 1, 1]} : vector<2x8x32xf32> to vector<2x8x8xf32>
    %61 = tpu.concatenate %57, %58, %59, %60 in 0 : vector<2x8x8xf32>, vector<2x8x8xf32>, vector<2x8x8xf32>, vector<2x8x8xf32> -> vector<8x8x8xf32>
    %c0_30 = arith.constant 0 : index
    %c0_31 = arith.constant 0 : index
    %c0_32 = arith.constant 0 : index
    %62 = vector.load %arg8[%c0_30, %c0_31, %c0_32] : memref<4x32x32xf32, #tpu.memory_space<vmem>>, vector<1x32x32xf32>
    %63 = vector.shape_cast %62 : vector<1x32x32xf32> to vector<32x32xf32>
    %64 = arith.truncf %31 : vector<16x32xf32> to vector<16x32xbf16>
    %65 = arith.truncf %63 : vector<32x32xf32> to vector<32x32xbf16>
    %cst_33 = arith.constant dense<0.000000e+00> : vector<16x32xf32>
    %66 = tpu.matmul %64, %65, %cst_33 {dimension_numbers = #tpu.dot_dimension_numbers<[1], [0], [0], [1], [0, 0, 1, 1], [], []>} : vector<16x32xbf16>, vector<32x32xbf16>, vector<16x32xf32> -> vector<16x32xf32>
    %c0_34 = arith.constant 0 : index
    %c0_35 = arith.constant 0 : index
    %c0_36 = arith.constant 0 : index
    %67 = vector.load %arg11[%c0_34, %c0_35, %c0_36] : memref<4x1x32xf32, #tpu.memory_space<vmem>>, vector<1x1x32xf32>
    %68 = vector.shape_cast %67 : vector<1x1x32xf32> to vector<1x32xf32>
    %69 = vector.broadcast %68 : vector<1x32xf32> to vector<16x32xf32>
    %70 = arith.addf %66, %69 : vector<16x32xf32>
    %71 = vector.shape_cast %70 : vector<16x32xf32> to vector<2x8x32xf32>
    %72 = vector.extract_strided_slice %71 {offsets = [0, 0, 0], sizes = [2, 8, 8], strides = [1, 1, 1]} : vector<2x8x32xf32> to vector<2x8x8xf32>
    %73 = vector.extract_strided_slice %71 {offsets = [0, 0, 8], sizes = [2, 8, 8], strides = [1, 1, 1]} : vector<2x8x32xf32> to vector<2x8x8xf32>
    %74 = vector.extract_strided_slice %71 {offsets = [0, 0, 16], sizes = [2, 8, 8], strides = [1, 1, 1]} : vector<2x8x32xf32> to vector<2x8x8xf32>
    %75 = vector.extract_strided_slice %71 {offsets = [0, 0, 24], sizes = [2, 8, 8], strides = [1, 1, 1]} : vector<2x8x32xf32> to vector<2x8x8xf32>
    %76 = tpu.concatenate %72, %73, %74, %75 in 0 : vector<2x8x8xf32>, vector<2x8x8xf32>, vector<2x8x8xf32>, vector<2x8x8xf32> -> vector<8x8x8xf32>
    %77 = arith.truncf %46 : vector<8x8x8xf32> to vector<8x8x8xbf16>
    %78 = arith.truncf %61 : vector<8x8x8xf32> to vector<8x8x8xbf16>
    "tpu.trace_start"() <{level = 10 : i32, message = "znd,zmd->znm"}> : () -> ()
    %cst_37 = arith.constant dense<0.000000e+00> : vector<8x8x8xf32>
    %79 = tpu.matmul %77, %78, %cst_37 {dimension_numbers = #tpu.dot_dimension_numbers<[2], [2], [1], [1], [0, 0, 0, 1, 1, 1], [0], [0]>} : vector<8x8x8xbf16>, vector<8x8x8xbf16>, vector<8x8x8xf32> -> vector<8x8x8xf32>
    "tpu.trace_stop"() : () -> ()
    %cst_38 = arith.constant 0.353553385 : f32
    %80 = vector.broadcast %cst_38 : f32 to vector<8x8x8xf32>
    %81 = arith.mulf %79, %80 : vector<8x8x8xf32>
    %cst_39 = arith.constant -1.000000e+09 : f32
    %82 = vector.shape_cast %5 : vector<8x1x8xi1> to vector<8x1x8xi1>
    %83 = vector.broadcast %82 : vector<8x1x8xi1> to vector<8x8x8xi1>
    %84 = vector.broadcast %cst_39 : f32 to vector<8x8x8xf32>
    %85 = arith.select %83, %81, %84 : vector<8x8x8xi1>, vector<8x8x8xf32>
    %cst_40 = arith.constant dense<0xFF800000> : vector<8x8xf32>
    %86 = vector.multi_reduction <maximumf>, %85, %cst_40 [2] : vector<8x8x8xf32> to vector<8x8xf32>
    %87 = vector.shape_cast %86 : vector<8x8xf32> to vector<8x8x1xf32>
    %88 = vector.broadcast %87 : vector<8x8x1xf32> to vector<8x8x8xf32>
    %89 = arith.subf %85, %88 : vector<8x8x8xf32>
    %90 = math.exp %89 : vector<8x8x8xf32>
    %cst_41 = arith.constant dense<0.000000e+00> : vector<8x8xf32>
    %91 = vector.multi_reduction <add>, %90, %cst_41 [2] : vector<8x8x8xf32> to vector<8x8xf32>
    %92 = vector.shape_cast %91 : vector<8x8xf32> to vector<8x8x1xf32>
    %93 = tpu.reciprocal %92 {approx = true} : vector<8x8x1xf32> -> vector<8x8x1xf32>
    %94 = vector.broadcast %93 : vector<8x8x1xf32> to vector<8x8x8xf32>
    %95 = arith.mulf %90, %94 : vector<8x8x8xf32>
    %96 = arith.truncf %95 : vector<8x8x8xf32> to vector<8x8x8xbf16>
    %97 = arith.truncf %76 : vector<8x8x8xf32> to vector<8x8x8xbf16>
    "tpu.trace_start"() <{level = 10 : i32, message = "znm,zmd->znd"}> : () -> ()
    %cst_42 = arith.constant dense<0.000000e+00> : vector<8x8x8xf32>
    %98 = tpu.matmul %96, %97, %cst_42 {dimension_numbers = #tpu.dot_dimension_numbers<[2], [1], [1], [2], [0, 0, 0, 1, 1, 2], [0], [0]>} : vector<8x8x8xbf16>, vector<8x8x8xbf16>, vector<8x8x8xf32> -> vector<8x8x8xf32>
    "tpu.trace_stop"() : () -> ()
    %99 = vector.extract_strided_slice %98 {offsets = [0, 0, 0], sizes = [2, 8, 8], strides = [1, 1, 1]} : vector<8x8x8xf32> to vector<2x8x8xf32>
    %100 = vector.extract_strided_slice %98 {offsets = [2, 0, 0], sizes = [2, 8, 8], strides = [1, 1, 1]} : vector<8x8x8xf32> to vector<2x8x8xf32>
    %101 = vector.extract_strided_slice %98 {offsets = [4, 0, 0], sizes = [2, 8, 8], strides = [1, 1, 1]} : vector<8x8x8xf32> to vector<2x8x8xf32>
    %102 = vector.extract_strided_slice %98 {offsets = [6, 0, 0], sizes = [2, 8, 8], strides = [1, 1, 1]} : vector<8x8x8xf32> to vector<2x8x8xf32>
    %103 = tpu.concatenate %99, %100, %101, %102 in 2 : vector<2x8x8xf32>, vector<2x8x8xf32>, vector<2x8x8xf32>, vector<2x8x8xf32> -> vector<2x8x32xf32>
    %104 = vector.shape_cast %103 : vector<2x8x32xf32> to vector<16x32xf32>
    %c0_43 = arith.constant 0 : index
    %c0_44 = arith.constant 0 : index
    %c0_45 = arith.constant 0 : index
    %105 = vector.load %arg12[%c0_43, %c0_44, %c0_45] : memref<4x32x32xf32, #tpu.memory_space<vmem>>, vector<1x32x32xf32>
    %106 = vector.shape_cast %105 : vector<1x32x32xf32> to vector<32x32xf32>
    %107 = arith.truncf %104 : vector<16x32xf32> to vector<16x32xbf16>
    %108 = arith.truncf %106 : vector<32x32xf32> to vector<32x32xbf16>
    %cst_46 = arith.constant dense<0.000000e+00> : vector<16x32xf32>
    %109 = tpu.matmul %107, %108, %cst_46 {dimension_numbers = #tpu.dot_dimension_numbers<[1], [0], [0], [1], [0, 0, 1, 1], [], []>} : vector<16x32xbf16>, vector<32x32xbf16>, vector<16x32xf32> -> vector<16x32xf32>
    %110 = arith.addf %1, %109 : vector<16x32xf32>
    %c0_47 = arith.constant 0 : index
    %c0_48 = arith.constant 0 : index
    %c0_49 = arith.constant 0 : index
    %111 = vector.load %arg13[%c0_47, %c0_48, %c0_49] : memref<4x1x32xf32, #tpu.memory_space<vmem>>, vector<1x1x32xf32>
    %112 = vector.shape_cast %111 : vector<1x1x32xf32> to vector<1x32xf32>
    %113 = vector.broadcast %112 : vector<1x32xf32> to vector<16x32xf32>
    %114 = arith.addf %110, %113 : vector<16x32xf32>
    %c0_50 = arith.constant 0 : index
    %c0_51 = arith.constant 0 : index
    %c0_52 = arith.constant 0 : index
    %115 = vector.load %arg14[%c0_50, %c0_51, %c0_52] : memref<4x1x32xf32, #tpu.memory_space<vmem>>, vector<1x1x32xf32>
    %116 = vector.shape_cast %115 : vector<1x1x32xf32> to vector<1x32xf32>
    %c0_53 = arith.constant 0 : index
    %c0_54 = arith.constant 0 : index
    %c0_55 = arith.constant 0 : index
    %117 = vector.load %arg15[%c0_53, %c0_54, %c0_55] : memref<4x1x32xf32, #tpu.memory_space<vmem>>, vector<1x1x32xf32>
    %118 = vector.shape_cast %117 : vector<1x1x32xf32> to vector<1x32xf32>
    %cst_56 = arith.constant dense<0.000000e+00> : vector<16xf32>
    %119 = vector.multi_reduction <add>, %114, %cst_56 [1] : vector<16x32xf32> to vector<16xf32>
    %120 = vector.shape_cast %119 : vector<16xf32> to vector<16x1xf32>
    %cst_57 = arith.constant 3.200000e+01 : f32
    %121 = vector.broadcast %cst_57 : f32 to vector<16x1xf32>
    %122 = arith.divf %120, %121 : vector<16x1xf32>
    %123 = vector.broadcast %122 : vector<16x1xf32> to vector<16x32xf32>
    %124 = arith.subf %114, %123 : vector<16x32xf32>
    %125 = arith.mulf %124, %124 : vector<16x32xf32>
    %cst_58 = arith.constant dense<0.000000e+00> : vector<16xf32>
    %126 = vector.multi_reduction <add>, %125, %cst_58 [1] : vector<16x32xf32> to vector<16xf32>
    %127 = vector.shape_cast %126 : vector<16xf32> to vector<16x1xf32>
    %cst_59 = arith.constant 3.200000e+01 : f32
    %128 = vector.broadcast %cst_59 : f32 to vector<16x1xf32>
    %129 = arith.divf %127, %128 : vector<16x1xf32>
    %130 = vector.broadcast %122 : vector<16x1xf32> to vector<16x32xf32>
    %131 = arith.subf %114, %130 : vector<16x32xf32>
    %cst_60 = arith.constant 9.99999974E-6 : f32
    %132 = vector.broadcast %cst_60 : f32 to vector<16x1xf32>
    %133 = arith.addf %129, %132 : vector<16x1xf32>
    %134 = math.rsqrt %133 : vector<16x1xf32>
    %135 = vector.broadcast %134 : vector<16x1xf32> to vector<16x32xf32>
    %136 = arith.mulf %131, %135 : vector<16x32xf32>
    %137 = vector.broadcast %116 : vector<1x32xf32> to vector<16x32xf32>
    %138 = arith.mulf %136, %137 : vector<16x32xf32>
    %139 = vector.broadcast %118 : vector<1x32xf32> to vector<16x32xf32>
    %140 = arith.addf %138, %139 : vector<16x32xf32>
    %c0_61 = arith.constant 0 : index
    %c0_62 = arith.constant 0 : index
    %c0_63 = arith.constant 0 : index
    %141 = vector.load %arg16[%c0_61, %c0_62, %c0_63] : memref<4x32x64xf32, #tpu.memory_space<vmem>>, vector<1x32x64xf32>
    %142 = vector.shape_cast %141 : vector<1x32x64xf32> to vector<32x64xf32>
    %143 = arith.truncf %140 : vector<16x32xf32> to vector<16x32xbf16>
    %144 = arith.truncf %142 : vector<32x64xf32> to vector<32x64xbf16>
    %cst_64 = arith.constant dense<0.000000e+00> : vector<16x64xf32>
    %145 = tpu.matmul %143, %144, %cst_64 {dimension_numbers = #tpu.dot_dimension_numbers<[1], [0], [0], [1], [0, 0, 1, 1], [], []>} : vector<16x32xbf16>, vector<32x64xbf16>, vector<16x64xf32> -> vector<16x64xf32>
    %c0_65 = arith.constant 0 : index
    %c0_66 = arith.constant 0 : index
    %c0_67 = arith.constant 0 : index
    %146 = vector.load %arg17[%c0_65, %c0_66, %c0_67] : memref<4x1x64xf32, #tpu.memory_space<vmem>>, vector<1x1x64xf32>
    %147 = vector.shape_cast %146 : vector<1x1x64xf32> to vector<1x64xf32>
    %148 = vector.broadcast %147 : vector<1x64xf32> to vector<16x64xf32>
    %149 = arith.addf %145, %148 : vector<16x64xf32>
    %150 = arith.mulf %149, %149 : vector<16x64xf32>
    %151 = arith.mulf %149, %150 : vector<16x64xf32>
    %cst_68 = arith.constant 4.471500e-02 : f32
    %152 = vector.broadcast %cst_68 : f32 to vector<16x64xf32>
    %153 = arith.mulf %152, %151 : vector<16x64xf32>
    %154 = arith.addf %149, %153 : vector<16x64xf32>
    %cst_69 = arith.constant 0.797884583 : f32
    %155 = vector.broadcast %cst_69 : f32 to vector<16x64xf32>
    %156 = arith.mulf %155, %154 : vector<16x64xf32>
    %157 = math.tanh %156 : vector<16x64xf32>
    %cst_70 = arith.constant 1.000000e+00 : f32
    %158 = vector.broadcast %cst_70 : f32 to vector<16x64xf32>
    %159 = arith.addf %158, %157 : vector<16x64xf32>
    %cst_71 = arith.constant 5.000000e-01 : f32
    %160 = vector.broadcast %cst_71 : f32 to vector<16x64xf32>
    %161 = arith.mulf %160, %159 : vector<16x64xf32>
    %162 = arith.mulf %149, %161 : vector<16x64xf32>
    %c0_72 = arith.constant 0 : index
    %c0_73 = arith.constant 0 : index
    %c0_74 = arith.constant 0 : index
    %163 = vector.load %arg18[%c0_72, %c0_73, %c0_74] : memref<4x64x32xf32, #tpu.memory_space<vmem>>, vector<1x64x32xf32>
    %164 = vector.shape_cast %163 : vector<1x64x32xf32> to vector<64x32xf32>
    %165 = arith.truncf %162 : vector<16x64xf32> to vector<16x64xbf16>
    %166 = arith.truncf %164 : vector<64x32xf32> to vector<64x32xbf16>
    %cst_75 = arith.constant dense<0.000000e+00> : vector<16x32xf32>
    %167 = tpu.matmul %165, %166, %cst_75 {dimension_numbers = #tpu.dot_dimension_numbers<[1], [0], [0], [1], [0, 0, 1, 1], [], []>} : vector<16x64xbf16>, vector<64x32xbf16>, vector<16x32xf32> -> vector<16x32xf32>
    %168 = arith.addf %114, %167 : vector<16x32xf32>
    %c0_76 = arith.constant 0 : index
    %c0_77 = arith.constant 0 : index
    %c0_78 = arith.constant 0 : index
    %169 = vector.load %arg19[%c0_76, %c0_77, %c0_78] : memref<4x1x32xf32, #tpu.memory_space<vmem>>, vector<1x1x32xf32>
    %170 = vector.shape_cast %169 : vector<1x1x32xf32> to vector<1x32xf32>
    %171 = vector.broadcast %170 : vector<1x32xf32> to vector<16x32xf32>
    %172 = arith.addf %168, %171 : vector<16x32xf32>
    %c1 = arith.constant 1 : index
    %c0_79 = arith.constant 0 : index
    %c0_80 = arith.constant 0 : index
    %173 = vector.load %arg4[%c1, %c0_79, %c0_80] : memref<4x1x32xf32, #tpu.memory_space<vmem>>, vector<1x1x32xf32>
    %174 = vector.shape_cast %173 : vector<1x1x32xf32> to vector<1x32xf32>
    %c1_81 = arith.constant 1 : index
    %c0_82 = arith.constant 0 : index
    %c0_83 = arith.constant 0 : index
    %175 = vector.load %arg5[%c1_81, %c0_82, %c0_83] : memref<4x1x32xf32, #tpu.memory_space<vmem>>, vector<1x1x32xf32>
    %176 = vector.shape_cast %175 : vector<1x1x32xf32> to vector<1x32xf32>
    %cst_84 = arith.constant dense<0.000000e+00> : vector<16xf32>
    %177 = vector.multi_reduction <add>, %172, %cst_84 [1] : vector<16x32xf32> to vector<16xf32>
    %178 = vector.shape_cast %177 : vector<16xf32> to vector<16x1xf32>
    %cst_85 = arith.constant 3.200000e+01 : f32
    %179 = vector.broadcast %cst_85 : f32 to vector<16x1xf32>
    %180 = arith.divf %178, %179 : vector<16x1xf32>
    %181 = vector.broadcast %180 : vector<16x1xf32> to vector<16x32xf32>
    %182 = arith.subf %172, %181 : vector<16x32xf32>
    %183 = arith.mulf %182, %182 : vector<16x32xf32>
    %cst_86 = arith.constant dense<0.000000e+00> : vector<16xf32>
    %184 = vector.multi_reduction <add>, %183, %cst_86 [1] : vector<16x32xf32> to vector<16xf32>
    %185 = vector.shape_cast %184 : vector<16xf32> to vector<16x1xf32>
    %cst_87 = arith.constant 3.200000e+01 : f32
    %186 = vector.broadcast %cst_87 : f32 to vector<16x1xf32>
    %187 = arith.divf %185, %186 : vector<16x1xf32>
    %188 = vector.broadcast %180 : vector<16x1xf32> to vector<16x32xf32>
    %189 = arith.subf %172, %188 : vector<16x32xf32>
    %cst_88 = arith.constant 9.99999974E-6 : f32
    %190 = vector.broadcast %cst_88 : f32 to vector<16x1xf32>
    %191 = arith.addf %187, %190 : vector<16x1xf32>
    %192 = math.rsqrt %191 : vector<16x1xf32>
    %193 = vector.broadcast %192 : vector<16x1xf32> to vector<16x32xf32>
    %194 = arith.mulf %189, %193 : vector<16x32xf32>
    %195 = vector.broadcast %174 : vector<1x32xf32> to vector<16x32xf32>
    %196 = arith.mulf %194, %195 : vector<16x32xf32>
    %197 = vector.broadcast %176 : vector<1x32xf32> to vector<16x32xf32>
    %198 = arith.addf %196, %197 : vector<16x32xf32>
    %c1_89 = arith.constant 1 : index
    %c0_90 = arith.constant 0 : index
    %c0_91 = arith.constant 0 : index
    %199 = vector.load %arg6[%c1_89, %c0_90, %c0_91] : memref<4x32x32xf32, #tpu.memory_space<vmem>>, vector<1x32x32xf32>
    %200 = vector.shape_cast %199 : vector<1x32x32xf32> to vector<32x32xf32>
    %201 = arith.truncf %198 : vector<16x32xf32> to vector<16x32xbf16>
    %202 = arith.truncf %200 : vector<32x32xf32> to vector<32x32xbf16>
    %cst_92 = arith.constant dense<0.000000e+00> : vector<16x32xf32>
    %203 = tpu.matmul %201, %202, %cst_92 {dimension_numbers = #tpu.dot_dimension_numbers<[1], [0], [0], [1], [0, 0, 1, 1], [], []>} : vector<16x32xbf16>, vector<32x32xbf16>, vector<16x32xf32> -> vector<16x32xf32>
    %c1_93 = arith.constant 1 : index
    %c0_94 = arith.constant 0 : index
    %c0_95 = arith.constant 0 : index
    %204 = vector.load %arg9[%c1_93, %c0_94, %c0_95] : memref<4x1x32xf32, #tpu.memory_space<vmem>>, vector<1x1x32xf32>
    %205 = vector.shape_cast %204 : vector<1x1x32xf32> to vector<1x32xf32>
    %206 = vector.broadcast %205 : vector<1x32xf32> to vector<16x32xf32>
    %207 = arith.addf %203, %206 : vector<16x32xf32>
    %208 = vector.shape_cast %207 : vector<16x32xf32> to vector<2x8x32xf32>
    %209 = vector.extract_strided_slice %208 {offsets = [0, 0, 0], sizes = [2, 8, 8], strides = [1, 1, 1]} : vector<2x8x32xf32> to vector<2x8x8xf32>
    %210 = vector.extract_strided_slice %208 {offsets = [0, 0, 8], sizes = [2, 8, 8], strides = [1, 1, 1]} : vector<2x8x32xf32> to vector<2x8x8xf32>
    %211 = vector.extract_strided_slice %208 {offsets = [0, 0, 16], sizes = [2, 8, 8], strides = [1, 1, 1]} : vector<2x8x32xf32> to vector<2x8x8xf32>
    %212 = vector.extract_strided_slice %208 {offsets = [0, 0, 24], sizes = [2, 8, 8], strides = [1, 1, 1]} : vector<2x8x32xf32> to vector<2x8x8xf32>
    %213 = tpu.concatenate %209, %210, %211, %212 in 0 : vector<2x8x8xf32>, vector<2x8x8xf32>, vector<2x8x8xf32>, vector<2x8x8xf32> -> vector<8x8x8xf32>
    %c1_96 = arith.constant 1 : index
    %c0_97 = arith.constant 0 : index
    %c0_98 = arith.constant 0 : index
    %214 = vector.load %arg7[%c1_96, %c0_97, %c0_98] : memref<4x32x32xf32, #tpu.memory_space<vmem>>, vector<1x32x32xf32>
    %215 = vector.shape_cast %214 : vector<1x32x32xf32> to vector<32x32xf32>
    %216 = arith.truncf %198 : vector<16x32xf32> to vector<16x32xbf16>
    %217 = arith.truncf %215 : vector<32x32xf32> to vector<32x32xbf16>
    %cst_99 = arith.constant dense<0.000000e+00> : vector<16x32xf32>
    %218 = tpu.matmul %216, %217, %cst_99 {dimension_numbers = #tpu.dot_dimension_numbers<[1], [0], [0], [1], [0, 0, 1, 1], [], []>} : vector<16x32xbf16>, vector<32x32xbf16>, vector<16x32xf32> -> vector<16x32xf32>
    %c1_100 = arith.constant 1 : index
    %c0_101 = arith.constant 0 : index
    %c0_102 = arith.constant 0 : index
    %219 = vector.load %arg10[%c1_100, %c0_101, %c0_102] : memref<4x1x32xf32, #tpu.memory_space<vmem>>, vector<1x1x32xf32>
    %220 = vector.shape_cast %219 : vector<1x1x32xf32> to vector<1x32xf32>
    %221 = vector.broadcast %220 : vector<1x32xf32> to vector<16x32xf32>
    %222 = arith.addf %218, %221 : vector<16x32xf32>
    %223 = vector.shape_cast %222 : vector<16x32xf32> to vector<2x8x32xf32>
    %224 = vector.extract_strided_slice %223 {offsets = [0, 0, 0], sizes = [2, 8, 8], strides = [1, 1, 1]} : vector<2x8x32xf32> to vector<2x8x8xf32>
    %225 = vector.extract_strided_slice %223 {offsets = [0, 0, 8], sizes = [2, 8, 8], strides = [1, 1, 1]} : vector<2x8x32xf32> to vector<2x8x8xf32>
    %226 = vector.extract_strided_slice %223 {offsets = [0, 0, 16], sizes = [2, 8, 8], strides = [1, 1, 1]} : vector<2x8x32xf32> to vector<2x8x8xf32>
    %227 = vector.extract_strided_slice %223 {offsets = [0, 0, 24], sizes = [2, 8, 8], strides = [1, 1, 1]} : vector<2x8x32xf32> to vector<2x8x8xf32>
    %228 = tpu.concatenate %224, %225, %226, %227 in 0 : vector<2x8x8xf32>, vector<2x8x8xf32>, vector<2x8x8xf32>, vector<2x8x8xf32> -> vector<8x8x8xf32>
    %c1_103 = arith.constant 1 : index
    %c0_104 = arith.constant 0 : index
    %c0_105 = arith.constant 0 : index
    %229 = vector.load %arg8[%c1_103, %c0_104, %c0_105] : memref<4x32x32xf32, #tpu.memory_space<vmem>>, vector<1x32x32xf32>
    %230 = vector.shape_cast %229 : vector<1x32x32xf32> to vector<32x32xf32>
    %231 = arith.truncf %198 : vector<16x32xf32> to vector<16x32xbf16>
    %232 = arith.truncf %230 : vector<32x32xf32> to vector<32x32xbf16>
    %cst_106 = arith.constant dense<0.000000e+00> : vector<16x32xf32>
    %233 = tpu.matmul %231, %232, %cst_106 {dimension_numbers = #tpu.dot_dimension_numbers<[1], [0], [0], [1], [0, 0, 1, 1], [], []>} : vector<16x32xbf16>, vector<32x32xbf16>, vector<16x32xf32> -> vector<16x32xf32>
    %c1_107 = arith.constant 1 : index
    %c0_108 = arith.constant 0 : index
    %c0_109 = arith.constant 0 : index
    %234 = vector.load %arg11[%c1_107, %c0_108, %c0_109] : memref<4x1x32xf32, #tpu.memory_space<vmem>>, vector<1x1x32xf32>
    %235 = vector.shape_cast %234 : vector<1x1x32xf32> to vector<1x32xf32>
    %236 = vector.broadcast %235 : vector<1x32xf32> to vector<16x32xf32>
    %237 = arith.addf %233, %236 : vector<16x32xf32>
    %238 = vector.shape_cast %237 : vector<16x32xf32> to vector<2x8x32xf32>
    %239 = vector.extract_strided_slice %238 {offsets = [0, 0, 0], sizes = [2, 8, 8], strides = [1, 1, 1]} : vector<2x8x32xf32> to vector<2x8x8xf32>
    %240 = vector.extract_strided_slice %238 {offsets = [0, 0, 8], sizes = [2, 8, 8], strides = [1, 1, 1]} : vector<2x8x32xf32> to vector<2x8x8xf32>
    %241 = vector.extract_strided_slice %238 {offsets = [0, 0, 16], sizes = [2, 8, 8], strides = [1, 1, 1]} : vector<2x8x32xf32> to vector<2x8x8xf32>
    %242 = vector.extract_strided_slice %238 {offsets = [0, 0, 24], sizes = [2, 8, 8], strides = [1, 1, 1]} : vector<2x8x32xf32> to vector<2x8x8xf32>
    %243 = tpu.concatenate %239, %240, %241, %242 in 0 : vector<2x8x8xf32>, vector<2x8x8xf32>, vector<2x8x8xf32>, vector<2x8x8xf32> -> vector<8x8x8xf32>
    %244 = arith.truncf %213 : vector<8x8x8xf32> to vector<8x8x8xbf16>
    %245 = arith.truncf %228 : vector<8x8x8xf32> to vector<8x8x8xbf16>
    "tpu.trace_start"() <{level = 10 : i32, message = "znd,zmd->znm"}> : () -> ()
    %cst_110 = arith.constant dense<0.000000e+00> : vector<8x8x8xf32>
    %246 = tpu.matmul %244, %245, %cst_110 {dimension_numbers = #tpu.dot_dimension_numbers<[2], [2], [1], [1], [0, 0, 0, 1, 1, 1], [0], [0]>} : vector<8x8x8xbf16>, vector<8x8x8xbf16>, vector<8x8x8xf32> -> vector<8x8x8xf32>
    "tpu.trace_stop"() : () -> ()
    %cst_111 = arith.constant 0.353553385 : f32
    %247 = vector.broadcast %cst_111 : f32 to vector<8x8x8xf32>
    %248 = arith.mulf %246, %247 : vector<8x8x8xf32>
    %cst_112 = arith.constant -1.000000e+09 : f32
    %249 = vector.shape_cast %5 : vector<8x1x8xi1> to vector<8x1x8xi1>
    %250 = vector.broadcast %249 : vector<8x1x8xi1> to vector<8x8x8xi1>
    %251 = vector.broadcast %cst_112 : f32 to vector<8x8x8xf32>
    %252 = arith.select %250, %248, %251 : vector<8x8x8xi1>, vector<8x8x8xf32>
    %cst_113 = arith.constant dense<0xFF800000> : vector<8x8xf32>
    %253 = vector.multi_reduction <maximumf>, %252, %cst_113 [2] : vector<8x8x8xf32> to vector<8x8xf32>
    %254 = vector.shape_cast %253 : vector<8x8xf32> to vector<8x8x1xf32>
    %255 = vector.broadcast %254 : vector<8x8x1xf32> to vector<8x8x8xf32>
    %256 = arith.subf %252, %255 : vector<8x8x8xf32>
    %257 = math.exp %256 : vector<8x8x8xf32>
    %cst_114 = arith.constant dense<0.000000e+00> : vector<8x8xf32>
    %258 = vector.multi_reduction <add>, %257, %cst_114 [2] : vector<8x8x8xf32> to vector<8x8xf32>
    %259 = vector.shape_cast %258 : vector<8x8xf32> to vector<8x8x1xf32>
    %260 = tpu.reciprocal %259 {approx = true} : vector<8x8x1xf32> -> vector<8x8x1xf32>
    %261 = vector.broadcast %260 : vector<8x8x1xf32> to vector<8x8x8xf32>
    %262 = arith.mulf %257, %261 : vector<8x8x8xf32>
    %263 = arith.truncf %262 : vector<8x8x8xf32> to vector<8x8x8xbf16>
    %264 = arith.truncf %243 : vector<8x8x8xf32> to vector<8x8x8xbf16>
    "tpu.trace_start"() <{level = 10 : i32, message = "znm,zmd->znd"}> : () -> ()
    %cst_115 = arith.constant dense<0.000000e+00> : vector<8x8x8xf32>
    %265 = tpu.matmul %263, %264, %cst_115 {dimension_numbers = #tpu.dot_dimension_numbers<[2], [1], [1], [2], [0, 0, 0, 1, 1, 2], [0], [0]>} : vector<8x8x8xbf16>, vector<8x8x8xbf16>, vector<8x8x8xf32> -> vector<8x8x8xf32>
    "tpu.trace_stop"() : () -> ()
    %266 = vector.extract_strided_slice %265 {offsets = [0, 0, 0], sizes = [2, 8, 8], strides = [1, 1, 1]} : vector<8x8x8xf32> to vector<2x8x8xf32>
    %267 = vector.extract_strided_slice %265 {offsets = [2, 0, 0], sizes = [2, 8, 8], strides = [1, 1, 1]} : vector<8x8x8xf32> to vector<2x8x8xf32>
    %268 = vector.extract_strided_slice %265 {offsets = [4, 0, 0], sizes = [2, 8, 8], strides = [1, 1, 1]} : vector<8x8x8xf32> to vector<2x8x8xf32>
    %269 = vector.extract_strided_slice %265 {offsets = [6, 0, 0], sizes = [2, 8, 8], strides = [1, 1, 1]} : vector<8x8x8xf32> to vector<2x8x8xf32>
    %270 = tpu.concatenate %266, %267, %268, %269 in 2 : vector<2x8x8xf32>, vector<2x8x8xf32>, vector<2x8x8xf32>, vector<2x8x8xf32> -> vector<2x8x32xf32>
    %271 = vector.shape_cast %270 : vector<2x8x32xf32> to vector<16x32xf32>
    %c1_116 = arith.constant 1 : index
    %c0_117 = arith.constant 0 : index
    %c0_118 = arith.constant 0 : index
    %272 = vector.load %arg12[%c1_116, %c0_117, %c0_118] : memref<4x32x32xf32, #tpu.memory_space<vmem>>, vector<1x32x32xf32>
    %273 = vector.shape_cast %272 : vector<1x32x32xf32> to vector<32x32xf32>
    %274 = arith.truncf %271 : vector<16x32xf32> to vector<16x32xbf16>
    %275 = arith.truncf %273 : vector<32x32xf32> to vector<32x32xbf16>
    %cst_119 = arith.constant dense<0.000000e+00> : vector<16x32xf32>
    %276 = tpu.matmul %274, %275, %cst_119 {dimension_numbers = #tpu.dot_dimension_numbers<[1], [0], [0], [1], [0, 0, 1, 1], [], []>} : vector<16x32xbf16>, vector<32x32xbf16>, vector<16x32xf32> -> vector<16x32xf32>
    %277 = arith.addf %172, %276 : vector<16x32xf32>
    %c1_120 = arith.constant 1 : index
    %c0_121 = arith.constant 0 : index
    %c0_122 = arith.constant 0 : index
    %278 = vector.load %arg13[%c1_120, %c0_121, %c0_122] : memref<4x1x32xf32, #tpu.memory_space<vmem>>, vector<1x1x32xf32>
    %279 = vector.shape_cast %278 : vector<1x1x32xf32> to vector<1x32xf32>
    %280 = vector.broadcast %279 : vector<1x32xf32> to vector<16x32xf32>
    %281 = arith.addf %277, %280 : vector<16x32xf32>
    %c1_123 = arith.constant 1 : index
    %c0_124 = arith.constant 0 : index
    %c0_125 = arith.constant 0 : index
    %282 = vector.load %arg14[%c1_123, %c0_124, %c0_125] : memref<4x1x32xf32, #tpu.memory_space<vmem>>, vector<1x1x32xf32>
    %283 = vector.shape_cast %282 : vector<1x1x32xf32> to vector<1x32xf32>
    %c1_126 = arith.constant 1 : index
    %c0_127 = arith.constant 0 : index
    %c0_128 = arith.constant 0 : index
    %284 = vector.load %arg15[%c1_126, %c0_127, %c0_128] : memref<4x1x32xf32, #tpu.memory_space<vmem>>, vector<1x1x32xf32>
    %285 = vector.shape_cast %284 : vector<1x1x32xf32> to vector<1x32xf32>
    %cst_129 = arith.constant dense<0.000000e+00> : vector<16xf32>
    %286 = vector.multi_reduction <add>, %281, %cst_129 [1] : vector<16x32xf32> to vector<16xf32>
    %287 = vector.shape_cast %286 : vector<16xf32> to vector<16x1xf32>
    %cst_130 = arith.constant 3.200000e+01 : f32
    %288 = vector.broadcast %cst_130 : f32 to vector<16x1xf32>
    %289 = arith.divf %287, %288 : vector<16x1xf32>
    %290 = vector.broadcast %289 : vector<16x1xf32> to vector<16x32xf32>
    %291 = arith.subf %281, %290 : vector<16x32xf32>
    %292 = arith.mulf %291, %291 : vector<16x32xf32>
    %cst_131 = arith.constant dense<0.000000e+00> : vector<16xf32>
    %293 = vector.multi_reduction <add>, %292, %cst_131 [1] : vector<16x32xf32> to vector<16xf32>
    %294 = vector.shape_cast %293 : vector<16xf32> to vector<16x1xf32>
    %cst_132 = arith.constant 3.200000e+01 : f32
    %295 = vector.broadcast %cst_132 : f32 to vector<16x1xf32>
    %296 = arith.divf %294, %295 : vector<16x1xf32>
    %297 = vector.broadcast %289 : vector<16x1xf32> to vector<16x32xf32>
    %298 = arith.subf %281, %297 : vector<16x32xf32>
    %cst_133 = arith.constant 9.99999974E-6 : f32
    %299 = vector.broadcast %cst_133 : f32 to vector<16x1xf32>
    %300 = arith.addf %296, %299 : vector<16x1xf32>
    %301 = math.rsqrt %300 : vector<16x1xf32>
    %302 = vector.broadcast %301 : vector<16x1xf32> to vector<16x32xf32>
    %303 = arith.mulf %298, %302 : vector<16x32xf32>
    %304 = vector.broadcast %283 : vector<1x32xf32> to vector<16x32xf32>
    %305 = arith.mulf %303, %304 : vector<16x32xf32>
    %306 = vector.broadcast %285 : vector<1x32xf32> to vector<16x32xf32>
    %307 = arith.addf %305, %306 : vector<16x32xf32>
    %c1_134 = arith.constant 1 : index
    %c0_135 = arith.constant 0 : index
    %c0_136 = arith.constant 0 : index
    %308 = vector.load %arg16[%c1_134, %c0_135, %c0_136] : memref<4x32x64xf32, #tpu.memory_space<vmem>>, vector<1x32x64xf32>
    %309 = vector.shape_cast %308 : vector<1x32x64xf32> to vector<32x64xf32>
    %310 = arith.truncf %307 : vector<16x32xf32> to vector<16x32xbf16>
    %311 = arith.truncf %309 : vector<32x64xf32> to vector<32x64xbf16>
    %cst_137 = arith.constant dense<0.000000e+00> : vector<16x64xf32>
    %312 = tpu.matmul %310, %311, %cst_137 {dimension_numbers = #tpu.dot_dimension_numbers<[1], [0], [0], [1], [0, 0, 1, 1], [], []>} : vector<16x32xbf16>, vector<32x64xbf16>, vector<16x64xf32> -> vector<16x64xf32>
    %c1_138 = arith.constant 1 : index
    %c0_139 = arith.constant 0 : index
    %c0_140 = arith.constant 0 : index
    %313 = vector.load %arg17[%c1_138, %c0_139, %c0_140] : memref<4x1x64xf32, #tpu.memory_space<vmem>>, vector<1x1x64xf32>
    %314 = vector.shape_cast %313 : vector<1x1x64xf32> to vector<1x64xf32>
    %315 = vector.broadcast %314 : vector<1x64xf32> to vector<16x64xf32>
    %316 = arith.addf %312, %315 : vector<16x64xf32>
    %317 = arith.mulf %316, %316 : vector<16x64xf32>
    %318 = arith.mulf %316, %317 : vector<16x64xf32>
    %cst_141 = arith.constant 4.471500e-02 : f32
    %319 = vector.broadcast %cst_141 : f32 to vector<16x64xf32>
    %320 = arith.mulf %319, %318 : vector<16x64xf32>
    %321 = arith.addf %316, %320 : vector<16x64xf32>
    %cst_142 = arith.constant 0.797884583 : f32
    %322 = vector.broadcast %cst_142 : f32 to vector<16x64xf32>
    %323 = arith.mulf %322, %321 : vector<16x64xf32>
    %324 = math.tanh %323 : vector<16x64xf32>
    %cst_143 = arith.constant 1.000000e+00 : f32
    %325 = vector.broadcast %cst_143 : f32 to vector<16x64xf32>
    %326 = arith.addf %325, %324 : vector<16x64xf32>
    %cst_144 = arith.constant 5.000000e-01 : f32
    %327 = vector.broadcast %cst_144 : f32 to vector<16x64xf32>
    %328 = arith.mulf %327, %326 : vector<16x64xf32>
    %329 = arith.mulf %316, %328 : vector<16x64xf32>
    %c1_145 = arith.constant 1 : index
    %c0_146 = arith.constant 0 : index
    %c0_147 = arith.constant 0 : index
    %330 = vector.load %arg18[%c1_145, %c0_146, %c0_147] : memref<4x64x32xf32, #tpu.memory_space<vmem>>, vector<1x64x32xf32>
    %331 = vector.shape_cast %330 : vector<1x64x32xf32> to vector<64x32xf32>
    %332 = arith.truncf %329 : vector<16x64xf32> to vector<16x64xbf16>
    %333 = arith.truncf %331 : vector<64x32xf32> to vector<64x32xbf16>
    %cst_148 = arith.constant dense<0.000000e+00> : vector<16x32xf32>
    %334 = tpu.matmul %332, %333, %cst_148 {dimension_numbers = #tpu.dot_dimension_numbers<[1], [0], [0], [1], [0, 0, 1, 1], [], []>} : vector<16x64xbf16>, vector<64x32xbf16>, vector<16x32xf32> -> vector<16x32xf32>
    %335 = arith.addf %281, %334 : vector<16x32xf32>
    %c1_149 = arith.constant 1 : index
    %c0_150 = arith.constant 0 : index
    %c0_151 = arith.constant 0 : index
    %336 = vector.load %arg19[%c1_149, %c0_150, %c0_151] : memref<4x1x32xf32, #tpu.memory_space<vmem>>, vector<1x1x32xf32>
    %337 = vector.shape_cast %336 : vector<1x1x32xf32> to vector<1x32xf32>
    %338 = vector.broadcast %337 : vector<1x32xf32> to vector<16x32xf32>
    %339 = arith.addf %335, %338 : vector<16x32xf32>
    %c2 = arith.constant 2 : index
    %c0_152 = arith.constant 0 : index
    %c0_153 = arith.constant 0 : index
    %340 = vector.load %arg4[%c2, %c0_152, %c0_153] : memref<4x1x32xf32, #tpu.memory_space<vmem>>, vector<1x1x32xf32>
    %341 = vector.shape_cast %340 : vector<1x1x32xf32> to vector<1x32xf32>
    %c2_154 = arith.constant 2 : index
    %c0_155 = arith.constant 0 : index
    %c0_156 = arith.constant 0 : index
    %342 = vector.load %arg5[%c2_154, %c0_155, %c0_156] : memref<4x1x32xf32, #tpu.memory_space<vmem>>, vector<1x1x32xf32>
    %343 = vector.shape_cast %342 : vector<1x1x32xf32> to vector<1x32xf32>
    %cst_157 = arith.constant dense<0.000000e+00> : vector<16xf32>
    %344 = vector.multi_reduction <add>, %339, %cst_157 [1] : vector<16x32xf32> to vector<16xf32>
    %345 = vector.shape_cast %344 : vector<16xf32> to vector<16x1xf32>
    %cst_158 = arith.constant 3.200000e+01 : f32
    %346 = vector.broadcast %cst_158 : f32 to vector<16x1xf32>
    %347 = arith.divf %345, %346 : vector<16x1xf32>
    %348 = vector.broadcast %347 : vector<16x1xf32> to vector<16x32xf32>
    %349 = arith.subf %339, %348 : vector<16x32xf32>
    %350 = arith.mulf %349, %349 : vector<16x32xf32>
    %cst_159 = arith.constant dense<0.000000e+00> : vector<16xf32>
    %351 = vector.multi_reduction <add>, %350, %cst_159 [1] : vector<16x32xf32> to vector<16xf32>
    %352 = vector.shape_cast %351 : vector<16xf32> to vector<16x1xf32>
    %cst_160 = arith.constant 3.200000e+01 : f32
    %353 = vector.broadcast %cst_160 : f32 to vector<16x1xf32>
    %354 = arith.divf %352, %353 : vector<16x1xf32>
    %355 = vector.broadcast %347 : vector<16x1xf32> to vector<16x32xf32>
    %356 = arith.subf %339, %355 : vector<16x32xf32>
    %cst_161 = arith.constant 9.99999974E-6 : f32
    %357 = vector.broadcast %cst_161 : f32 to vector<16x1xf32>
    %358 = arith.addf %354, %357 : vector<16x1xf32>
    %359 = math.rsqrt %358 : vector<16x1xf32>
    %360 = vector.broadcast %359 : vector<16x1xf32> to vector<16x32xf32>
    %361 = arith.mulf %356, %360 : vector<16x32xf32>
    %362 = vector.broadcast %341 : vector<1x32xf32> to vector<16x32xf32>
    %363 = arith.mulf %361, %362 : vector<16x32xf32>
    %364 = vector.broadcast %343 : vector<1x32xf32> to vector<16x32xf32>
    %365 = arith.addf %363, %364 : vector<16x32xf32>
    %c2_162 = arith.constant 2 : index
    %c0_163 = arith.constant 0 : index
    %c0_164 = arith.constant 0 : index
    %366 = vector.load %arg6[%c2_162, %c0_163, %c0_164] : memref<4x32x32xf32, #tpu.memory_space<vmem>>, vector<1x32x32xf32>
    %367 = vector.shape_cast %366 : vector<1x32x32xf32> to vector<32x32xf32>
    %368 = arith.truncf %365 : vector<16x32xf32> to vector<16x32xbf16>
    %369 = arith.truncf %367 : vector<32x32xf32> to vector<32x32xbf16>
    %cst_165 = arith.constant dense<0.000000e+00> : vector<16x32xf32>
    %370 = tpu.matmul %368, %369, %cst_165 {dimension_numbers = #tpu.dot_dimension_numbers<[1], [0], [0], [1], [0, 0, 1, 1], [], []>} : vector<16x32xbf16>, vector<32x32xbf16>, vector<16x32xf32> -> vector<16x32xf32>
    %c2_166 = arith.constant 2 : index
    %c0_167 = arith.constant 0 : index
    %c0_168 = arith.constant 0 : index
    %371 = vector.load %arg9[%c2_166, %c0_167, %c0_168] : memref<4x1x32xf32, #tpu.memory_space<vmem>>, vector<1x1x32xf32>
    %372 = vector.shape_cast %371 : vector<1x1x32xf32> to vector<1x32xf32>
    %373 = vector.broadcast %372 : vector<1x32xf32> to vector<16x32xf32>
    %374 = arith.addf %370, %373 : vector<16x32xf32>
    %375 = vector.shape_cast %374 : vector<16x32xf32> to vector<2x8x32xf32>
    %376 = vector.extract_strided_slice %375 {offsets = [0, 0, 0], sizes = [2, 8, 8], strides = [1, 1, 1]} : vector<2x8x32xf32> to vector<2x8x8xf32>
    %377 = vector.extract_strided_slice %375 {offsets = [0, 0, 8], sizes = [2, 8, 8], strides = [1, 1, 1]} : vector<2x8x32xf32> to vector<2x8x8xf32>
    %378 = vector.extract_strided_slice %375 {offsets = [0, 0, 16], sizes = [2, 8, 8], strides = [1, 1, 1]} : vector<2x8x32xf32> to vector<2x8x8xf32>
    %379 = vector.extract_strided_slice %375 {offsets = [0, 0, 24], sizes = [2, 8, 8], strides = [1, 1, 1]} : vector<2x8x32xf32> to vector<2x8x8xf32>
    %380 = tpu.concatenate %376, %377, %378, %379 in 0 : vector<2x8x8xf32>, vector<2x8x8xf32>, vector<2x8x8xf32>, vector<2x8x8xf32> -> vector<8x8x8xf32>
    %c2_169 = arith.constant 2 : index
    %c0_170 = arith.constant 0 : index
    %c0_171 = arith.constant 0 : index
    %381 = vector.load %arg7[%c2_169, %c0_170, %c0_171] : memref<4x32x32xf32, #tpu.memory_space<vmem>>, vector<1x32x32xf32>
    %382 = vector.shape_cast %381 : vector<1x32x32xf32> to vector<32x32xf32>
    %383 = arith.truncf %365 : vector<16x32xf32> to vector<16x32xbf16>
    %384 = arith.truncf %382 : vector<32x32xf32> to vector<32x32xbf16>
    %cst_172 = arith.constant dense<0.000000e+00> : vector<16x32xf32>
    %385 = tpu.matmul %383, %384, %cst_172 {dimension_numbers = #tpu.dot_dimension_numbers<[1], [0], [0], [1], [0, 0, 1, 1], [], []>} : vector<16x32xbf16>, vector<32x32xbf16>, vector<16x32xf32> -> vector<16x32xf32>
    %c2_173 = arith.constant 2 : index
    %c0_174 = arith.constant 0 : index
    %c0_175 = arith.constant 0 : index
    %386 = vector.load %arg10[%c2_173, %c0_174, %c0_175] : memref<4x1x32xf32, #tpu.memory_space<vmem>>, vector<1x1x32xf32>
    %387 = vector.shape_cast %386 : vector<1x1x32xf32> to vector<1x32xf32>
    %388 = vector.broadcast %387 : vector<1x32xf32> to vector<16x32xf32>
    %389 = arith.addf %385, %388 : vector<16x32xf32>
    %390 = vector.shape_cast %389 : vector<16x32xf32> to vector<2x8x32xf32>
    %391 = vector.extract_strided_slice %390 {offsets = [0, 0, 0], sizes = [2, 8, 8], strides = [1, 1, 1]} : vector<2x8x32xf32> to vector<2x8x8xf32>
    %392 = vector.extract_strided_slice %390 {offsets = [0, 0, 8], sizes = [2, 8, 8], strides = [1, 1, 1]} : vector<2x8x32xf32> to vector<2x8x8xf32>
    %393 = vector.extract_strided_slice %390 {offsets = [0, 0, 16], sizes = [2, 8, 8], strides = [1, 1, 1]} : vector<2x8x32xf32> to vector<2x8x8xf32>
    %394 = vector.extract_strided_slice %390 {offsets = [0, 0, 24], sizes = [2, 8, 8], strides = [1, 1, 1]} : vector<2x8x32xf32> to vector<2x8x8xf32>
    %395 = tpu.concatenate %391, %392, %393, %394 in 0 : vector<2x8x8xf32>, vector<2x8x8xf32>, vector<2x8x8xf32>, vector<2x8x8xf32> -> vector<8x8x8xf32>
    %c2_176 = arith.constant 2 : index
    %c0_177 = arith.constant 0 : index
    %c0_178 = arith.constant 0 : index
    %396 = vector.load %arg8[%c2_176, %c0_177, %c0_178] : memref<4x32x32xf32, #tpu.memory_space<vmem>>, vector<1x32x32xf32>
    %397 = vector.shape_cast %396 : vector<1x32x32xf32> to vector<32x32xf32>
    %398 = arith.truncf %365 : vector<16x32xf32> to vector<16x32xbf16>
    %399 = arith.truncf %397 : vector<32x32xf32> to vector<32x32xbf16>
    %cst_179 = arith.constant dense<0.000000e+00> : vector<16x32xf32>
    %400 = tpu.matmul %398, %399, %cst_179 {dimension_numbers = #tpu.dot_dimension_numbers<[1], [0], [0], [1], [0, 0, 1, 1], [], []>} : vector<16x32xbf16>, vector<32x32xbf16>, vector<16x32xf32> -> vector<16x32xf32>
    %c2_180 = arith.constant 2 : index
    %c0_181 = arith.constant 0 : index
    %c0_182 = arith.constant 0 : index
    %401 = vector.load %arg11[%c2_180, %c0_181, %c0_182] : memref<4x1x32xf32, #tpu.memory_space<vmem>>, vector<1x1x32xf32>
    %402 = vector.shape_cast %401 : vector<1x1x32xf32> to vector<1x32xf32>
    %403 = vector.broadcast %402 : vector<1x32xf32> to vector<16x32xf32>
    %404 = arith.addf %400, %403 : vector<16x32xf32>
    %405 = vector.shape_cast %404 : vector<16x32xf32> to vector<2x8x32xf32>
    %406 = vector.extract_strided_slice %405 {offsets = [0, 0, 0], sizes = [2, 8, 8], strides = [1, 1, 1]} : vector<2x8x32xf32> to vector<2x8x8xf32>
    %407 = vector.extract_strided_slice %405 {offsets = [0, 0, 8], sizes = [2, 8, 8], strides = [1, 1, 1]} : vector<2x8x32xf32> to vector<2x8x8xf32>
    %408 = vector.extract_strided_slice %405 {offsets = [0, 0, 16], sizes = [2, 8, 8], strides = [1, 1, 1]} : vector<2x8x32xf32> to vector<2x8x8xf32>
    %409 = vector.extract_strided_slice %405 {offsets = [0, 0, 24], sizes = [2, 8, 8], strides = [1, 1, 1]} : vector<2x8x32xf32> to vector<2x8x8xf32>
    %410 = tpu.concatenate %406, %407, %408, %409 in 0 : vector<2x8x8xf32>, vector<2x8x8xf32>, vector<2x8x8xf32>, vector<2x8x8xf32> -> vector<8x8x8xf32>
    %411 = arith.truncf %380 : vector<8x8x8xf32> to vector<8x8x8xbf16>
    %412 = arith.truncf %395 : vector<8x8x8xf32> to vector<8x8x8xbf16>
    "tpu.trace_start"() <{level = 10 : i32, message = "znd,zmd->znm"}> : () -> ()
    %cst_183 = arith.constant dense<0.000000e+00> : vector<8x8x8xf32>
    %413 = tpu.matmul %411, %412, %cst_183 {dimension_numbers = #tpu.dot_dimension_numbers<[2], [2], [1], [1], [0, 0, 0, 1, 1, 1], [0], [0]>} : vector<8x8x8xbf16>, vector<8x8x8xbf16>, vector<8x8x8xf32> -> vector<8x8x8xf32>
    "tpu.trace_stop"() : () -> ()
    %cst_184 = arith.constant 0.353553385 : f32
    %414 = vector.broadcast %cst_184 : f32 to vector<8x8x8xf32>
    %415 = arith.mulf %413, %414 : vector<8x8x8xf32>
    %cst_185 = arith.constant -1.000000e+09 : f32
    %416 = vector.shape_cast %5 : vector<8x1x8xi1> to vector<8x1x8xi1>
    %417 = vector.broadcast %416 : vector<8x1x8xi1> to vector<8x8x8xi1>
    %418 = vector.broadcast %cst_185 : f32 to vector<8x8x8xf32>
    %419 = arith.select %417, %415, %418 : vector<8x8x8xi1>, vector<8x8x8xf32>
    %cst_186 = arith.constant dense<0xFF800000> : vector<8x8xf32>
    %420 = vector.multi_reduction <maximumf>, %419, %cst_186 [2] : vector<8x8x8xf32> to vector<8x8xf32>
    %421 = vector.shape_cast %420 : vector<8x8xf32> to vector<8x8x1xf32>
    %422 = vector.broadcast %421 : vector<8x8x1xf32> to vector<8x8x8xf32>
    %423 = arith.subf %419, %422 : vector<8x8x8xf32>
    %424 = math.exp %423 : vector<8x8x8xf32>
    %cst_187 = arith.constant dense<0.000000e+00> : vector<8x8xf32>
    %425 = vector.multi_reduction <add>, %424, %cst_187 [2] : vector<8x8x8xf32> to vector<8x8xf32>
    %426 = vector.shape_cast %425 : vector<8x8xf32> to vector<8x8x1xf32>
    %427 = tpu.reciprocal %426 {approx = true} : vector<8x8x1xf32> -> vector<8x8x1xf32>
    %428 = vector.broadcast %427 : vector<8x8x1xf32> to vector<8x8x8xf32>
    %429 = arith.mulf %424, %428 : vector<8x8x8xf32>
    %430 = arith.truncf %429 : vector<8x8x8xf32> to vector<8x8x8xbf16>
    %431 = arith.truncf %410 : vector<8x8x8xf32> to vector<8x8x8xbf16>
    "tpu.trace_start"() <{level = 10 : i32, message = "znm,zmd->znd"}> : () -> ()
    %cst_188 = arith.constant dense<0.000000e+00> : vector<8x8x8xf32>
    %432 = tpu.matmul %430, %431, %cst_188 {dimension_numbers = #tpu.dot_dimension_numbers<[2], [1], [1], [2], [0, 0, 0, 1, 1, 2], [0], [0]>} : vector<8x8x8xbf16>, vector<8x8x8xbf16>, vector<8x8x8xf32> -> vector<8x8x8xf32>
    "tpu.trace_stop"() : () -> ()
    %433 = vector.extract_strided_slice %432 {offsets = [0, 0, 0], sizes = [2, 8, 8], strides = [1, 1, 1]} : vector<8x8x8xf32> to vector<2x8x8xf32>
    %434 = vector.extract_strided_slice %432 {offsets = [2, 0, 0], sizes = [2, 8, 8], strides = [1, 1, 1]} : vector<8x8x8xf32> to vector<2x8x8xf32>
    %435 = vector.extract_strided_slice %432 {offsets = [4, 0, 0], sizes = [2, 8, 8], strides = [1, 1, 1]} : vector<8x8x8xf32> to vector<2x8x8xf32>
    %436 = vector.extract_strided_slice %432 {offsets = [6, 0, 0], sizes = [2, 8, 8], strides = [1, 1, 1]} : vector<8x8x8xf32> to vector<2x8x8xf32>
    %437 = tpu.concatenate %433, %434, %435, %436 in 2 : vector<2x8x8xf32>, vector<2x8x8xf32>, vector<2x8x8xf32>, vector<2x8x8xf32> -> vector<2x8x32xf32>
    %438 = vector.shape_cast %437 : vector<2x8x32xf32> to vector<16x32xf32>
    %c2_189 = arith.constant 2 : index
    %c0_190 = arith.constant 0 : index
    %c0_191 = arith.constant 0 : index
    %439 = vector.load %arg12[%c2_189, %c0_190, %c0_191] : memref<4x32x32xf32, #tpu.memory_space<vmem>>, vector<1x32x32xf32>
    %440 = vector.shape_cast %439 : vector<1x32x32xf32> to vector<32x32xf32>
    %441 = arith.truncf %438 : vector<16x32xf32> to vector<16x32xbf16>
    %442 = arith.truncf %440 : vector<32x32xf32> to vector<32x32xbf16>
    %cst_192 = arith.constant dense<0.000000e+00> : vector<16x32xf32>
    %443 = tpu.matmul %441, %442, %cst_192 {dimension_numbers = #tpu.dot_dimension_numbers<[1], [0], [0], [1], [0, 0, 1, 1], [], []>} : vector<16x32xbf16>, vector<32x32xbf16>, vector<16x32xf32> -> vector<16x32xf32>
    %444 = arith.addf %339, %443 : vector<16x32xf32>
    %c2_193 = arith.constant 2 : index
    %c0_194 = arith.constant 0 : index
    %c0_195 = arith.constant 0 : index
    %445 = vector.load %arg13[%c2_193, %c0_194, %c0_195] : memref<4x1x32xf32, #tpu.memory_space<vmem>>, vector<1x1x32xf32>
    %446 = vector.shape_cast %445 : vector<1x1x32xf32> to vector<1x32xf32>
    %447 = vector.broadcast %446 : vector<1x32xf32> to vector<16x32xf32>
    %448 = arith.addf %444, %447 : vector<16x32xf32>
    %c2_196 = arith.constant 2 : index
    %c0_197 = arith.constant 0 : index
    %c0_198 = arith.constant 0 : index
    %449 = vector.load %arg14[%c2_196, %c0_197, %c0_198] : memref<4x1x32xf32, #tpu.memory_space<vmem>>, vector<1x1x32xf32>
    %450 = vector.shape_cast %449 : vector<1x1x32xf32> to vector<1x32xf32>
    %c2_199 = arith.constant 2 : index
    %c0_200 = arith.constant 0 : index
    %c0_201 = arith.constant 0 : index
    %451 = vector.load %arg15[%c2_199, %c0_200, %c0_201] : memref<4x1x32xf32, #tpu.memory_space<vmem>>, vector<1x1x32xf32>
    %452 = vector.shape_cast %451 : vector<1x1x32xf32> to vector<1x32xf32>
    %cst_202 = arith.constant dense<0.000000e+00> : vector<16xf32>
    %453 = vector.multi_reduction <add>, %448, %cst_202 [1] : vector<16x32xf32> to vector<16xf32>
    %454 = vector.shape_cast %453 : vector<16xf32> to vector<16x1xf32>
    %cst_203 = arith.constant 3.200000e+01 : f32
    %455 = vector.broadcast %cst_203 : f32 to vector<16x1xf32>
    %456 = arith.divf %454, %455 : vector<16x1xf32>
    %457 = vector.broadcast %456 : vector<16x1xf32> to vector<16x32xf32>
    %458 = arith.subf %448, %457 : vector<16x32xf32>
    %459 = arith.mulf %458, %458 : vector<16x32xf32>
    %cst_204 = arith.constant dense<0.000000e+00> : vector<16xf32>
    %460 = vector.multi_reduction <add>, %459, %cst_204 [1] : vector<16x32xf32> to vector<16xf32>
    %461 = vector.shape_cast %460 : vector<16xf32> to vector<16x1xf32>
    %cst_205 = arith.constant 3.200000e+01 : f32
    %462 = vector.broadcast %cst_205 : f32 to vector<16x1xf32>
    %463 = arith.divf %461, %462 : vector<16x1xf32>
    %464 = vector.broadcast %456 : vector<16x1xf32> to vector<16x32xf32>
    %465 = arith.subf %448, %464 : vector<16x32xf32>
    %cst_206 = arith.constant 9.99999974E-6 : f32
    %466 = vector.broadcast %cst_206 : f32 to vector<16x1xf32>
    %467 = arith.addf %463, %466 : vector<16x1xf32>
    %468 = math.rsqrt %467 : vector<16x1xf32>
    %469 = vector.broadcast %468 : vector<16x1xf32> to vector<16x32xf32>
    %470 = arith.mulf %465, %469 : vector<16x32xf32>
    %471 = vector.broadcast %450 : vector<1x32xf32> to vector<16x32xf32>
    %472 = arith.mulf %470, %471 : vector<16x32xf32>
    %473 = vector.broadcast %452 : vector<1x32xf32> to vector<16x32xf32>
    %474 = arith.addf %472, %473 : vector<16x32xf32>
    %c2_207 = arith.constant 2 : index
    %c0_208 = arith.constant 0 : index
    %c0_209 = arith.constant 0 : index
    %475 = vector.load %arg16[%c2_207, %c0_208, %c0_209] : memref<4x32x64xf32, #tpu.memory_space<vmem>>, vector<1x32x64xf32>
    %476 = vector.shape_cast %475 : vector<1x32x64xf32> to vector<32x64xf32>
    %477 = arith.truncf %474 : vector<16x32xf32> to vector<16x32xbf16>
    %478 = arith.truncf %476 : vector<32x64xf32> to vector<32x64xbf16>
    %cst_210 = arith.constant dense<0.000000e+00> : vector<16x64xf32>
    %479 = tpu.matmul %477, %478, %cst_210 {dimension_numbers = #tpu.dot_dimension_numbers<[1], [0], [0], [1], [0, 0, 1, 1], [], []>} : vector<16x32xbf16>, vector<32x64xbf16>, vector<16x64xf32> -> vector<16x64xf32>
    %c2_211 = arith.constant 2 : index
    %c0_212 = arith.constant 0 : index
    %c0_213 = arith.constant 0 : index
    %480 = vector.load %arg17[%c2_211, %c0_212, %c0_213] : memref<4x1x64xf32, #tpu.memory_space<vmem>>, vector<1x1x64xf32>
    %481 = vector.shape_cast %480 : vector<1x1x64xf32> to vector<1x64xf32>
    %482 = vector.broadcast %481 : vector<1x64xf32> to vector<16x64xf32>
    %483 = arith.addf %479, %482 : vector<16x64xf32>
    %484 = arith.mulf %483, %483 : vector<16x64xf32>
    %485 = arith.mulf %483, %484 : vector<16x64xf32>
    %cst_214 = arith.constant 4.471500e-02 : f32
    %486 = vector.broadcast %cst_214 : f32 to vector<16x64xf32>
    %487 = arith.mulf %486, %485 : vector<16x64xf32>
    %488 = arith.addf %483, %487 : vector<16x64xf32>
    %cst_215 = arith.constant 0.797884583 : f32
    %489 = vector.broadcast %cst_215 : f32 to vector<16x64xf32>
    %490 = arith.mulf %489, %488 : vector<16x64xf32>
    %491 = math.tanh %490 : vector<16x64xf32>
    %cst_216 = arith.constant 1.000000e+00 : f32
    %492 = vector.broadcast %cst_216 : f32 to vector<16x64xf32>
    %493 = arith.addf %492, %491 : vector<16x64xf32>
    %cst_217 = arith.constant 5.000000e-01 : f32
    %494 = vector.broadcast %cst_217 : f32 to vector<16x64xf32>
    %495 = arith.mulf %494, %493 : vector<16x64xf32>
    %496 = arith.mulf %483, %495 : vector<16x64xf32>
    %c2_218 = arith.constant 2 : index
    %c0_219 = arith.constant 0 : index
    %c0_220 = arith.constant 0 : index
    %497 = vector.load %arg18[%c2_218, %c0_219, %c0_220] : memref<4x64x32xf32, #tpu.memory_space<vmem>>, vector<1x64x32xf32>
    %498 = vector.shape_cast %497 : vector<1x64x32xf32> to vector<64x32xf32>
    %499 = arith.truncf %496 : vector<16x64xf32> to vector<16x64xbf16>
    %500 = arith.truncf %498 : vector<64x32xf32> to vector<64x32xbf16>
    %cst_221 = arith.constant dense<0.000000e+00> : vector<16x32xf32>
    %501 = tpu.matmul %499, %500, %cst_221 {dimension_numbers = #tpu.dot_dimension_numbers<[1], [0], [0], [1], [0, 0, 1, 1], [], []>} : vector<16x64xbf16>, vector<64x32xbf16>, vector<16x32xf32> -> vector<16x32xf32>
    %502 = arith.addf %448, %501 : vector<16x32xf32>
    %c2_222 = arith.constant 2 : index
    %c0_223 = arith.constant 0 : index
    %c0_224 = arith.constant 0 : index
    %503 = vector.load %arg19[%c2_222, %c0_223, %c0_224] : memref<4x1x32xf32, #tpu.memory_space<vmem>>, vector<1x1x32xf32>
    %504 = vector.shape_cast %503 : vector<1x1x32xf32> to vector<1x32xf32>
    %505 = vector.broadcast %504 : vector<1x32xf32> to vector<16x32xf32>
    %506 = arith.addf %502, %505 : vector<16x32xf32>
    %c3 = arith.constant 3 : index
    %c0_225 = arith.constant 0 : index
    %c0_226 = arith.constant 0 : index
    %507 = vector.load %arg4[%c3, %c0_225, %c0_226] : memref<4x1x32xf32, #tpu.memory_space<vmem>>, vector<1x1x32xf32>
    %508 = vector.shape_cast %507 : vector<1x1x32xf32> to vector<1x32xf32>
    %c3_227 = arith.constant 3 : index
    %c0_228 = arith.constant 0 : index
    %c0_229 = arith.constant 0 : index
    %509 = vector.load %arg5[%c3_227, %c0_228, %c0_229] : memref<4x1x32xf32, #tpu.memory_space<vmem>>, vector<1x1x32xf32>
    %510 = vector.shape_cast %509 : vector<1x1x32xf32> to vector<1x32xf32>
    %cst_230 = arith.constant dense<0.000000e+00> : vector<16xf32>
    %511 = vector.multi_reduction <add>, %506, %cst_230 [1] : vector<16x32xf32> to vector<16xf32>
    %512 = vector.shape_cast %511 : vector<16xf32> to vector<16x1xf32>
    %cst_231 = arith.constant 3.200000e+01 : f32
    %513 = vector.broadcast %cst_231 : f32 to vector<16x1xf32>
    %514 = arith.divf %512, %513 : vector<16x1xf32>
    %515 = vector.broadcast %514 : vector<16x1xf32> to vector<16x32xf32>
    %516 = arith.subf %506, %515 : vector<16x32xf32>
    %517 = arith.mulf %516, %516 : vector<16x32xf32>
    %cst_232 = arith.constant dense<0.000000e+00> : vector<16xf32>
    %518 = vector.multi_reduction <add>, %517, %cst_232 [1] : vector<16x32xf32> to vector<16xf32>
    %519 = vector.shape_cast %518 : vector<16xf32> to vector<16x1xf32>
    %cst_233 = arith.constant 3.200000e+01 : f32
    %520 = vector.broadcast %cst_233 : f32 to vector<16x1xf32>
    %521 = arith.divf %519, %520 : vector<16x1xf32>
    %522 = vector.broadcast %514 : vector<16x1xf32> to vector<16x32xf32>
    %523 = arith.subf %506, %522 : vector<16x32xf32>
    %cst_234 = arith.constant 9.99999974E-6 : f32
    %524 = vector.broadcast %cst_234 : f32 to vector<16x1xf32>
    %525 = arith.addf %521, %524 : vector<16x1xf32>
    %526 = math.rsqrt %525 : vector<16x1xf32>
    %527 = vector.broadcast %526 : vector<16x1xf32> to vector<16x32xf32>
    %528 = arith.mulf %523, %527 : vector<16x32xf32>
    %529 = vector.broadcast %508 : vector<1x32xf32> to vector<16x32xf32>
    %530 = arith.mulf %528, %529 : vector<16x32xf32>
    %531 = vector.broadcast %510 : vector<1x32xf32> to vector<16x32xf32>
    %532 = arith.addf %530, %531 : vector<16x32xf32>
    %c3_235 = arith.constant 3 : index
    %c0_236 = arith.constant 0 : index
    %c0_237 = arith.constant 0 : index
    %533 = vector.load %arg6[%c3_235, %c0_236, %c0_237] : memref<4x32x32xf32, #tpu.memory_space<vmem>>, vector<1x32x32xf32>
    %534 = vector.shape_cast %533 : vector<1x32x32xf32> to vector<32x32xf32>
    %535 = arith.truncf %532 : vector<16x32xf32> to vector<16x32xbf16>
    %536 = arith.truncf %534 : vector<32x32xf32> to vector<32x32xbf16>
    %cst_238 = arith.constant dense<0.000000e+00> : vector<16x32xf32>
    %537 = tpu.matmul %535, %536, %cst_238 {dimension_numbers = #tpu.dot_dimension_numbers<[1], [0], [0], [1], [0, 0, 1, 1], [], []>} : vector<16x32xbf16>, vector<32x32xbf16>, vector<16x32xf32> -> vector<16x32xf32>
    %c3_239 = arith.constant 3 : index
    %c0_240 = arith.constant 0 : index
    %c0_241 = arith.constant 0 : index
    %538 = vector.load %arg9[%c3_239, %c0_240, %c0_241] : memref<4x1x32xf32, #tpu.memory_space<vmem>>, vector<1x1x32xf32>
    %539 = vector.shape_cast %538 : vector<1x1x32xf32> to vector<1x32xf32>
    %540 = vector.broadcast %539 : vector<1x32xf32> to vector<16x32xf32>
    %541 = arith.addf %537, %540 : vector<16x32xf32>
    %542 = vector.shape_cast %541 : vector<16x32xf32> to vector<2x8x32xf32>
    %543 = vector.extract_strided_slice %542 {offsets = [0, 0, 0], sizes = [2, 8, 8], strides = [1, 1, 1]} : vector<2x8x32xf32> to vector<2x8x8xf32>
    %544 = vector.extract_strided_slice %542 {offsets = [0, 0, 8], sizes = [2, 8, 8], strides = [1, 1, 1]} : vector<2x8x32xf32> to vector<2x8x8xf32>
    %545 = vector.extract_strided_slice %542 {offsets = [0, 0, 16], sizes = [2, 8, 8], strides = [1, 1, 1]} : vector<2x8x32xf32> to vector<2x8x8xf32>
    %546 = vector.extract_strided_slice %542 {offsets = [0, 0, 24], sizes = [2, 8, 8], strides = [1, 1, 1]} : vector<2x8x32xf32> to vector<2x8x8xf32>
    %547 = tpu.concatenate %543, %544, %545, %546 in 0 : vector<2x8x8xf32>, vector<2x8x8xf32>, vector<2x8x8xf32>, vector<2x8x8xf32> -> vector<8x8x8xf32>
    %c3_242 = arith.constant 3 : index
    %c0_243 = arith.constant 0 : index
    %c0_244 = arith.constant 0 : index
    %548 = vector.load %arg7[%c3_242, %c0_243, %c0_244] : memref<4x32x32xf32, #tpu.memory_space<vmem>>, vector<1x32x32xf32>
    %549 = vector.shape_cast %548 : vector<1x32x32xf32> to vector<32x32xf32>
    %550 = arith.truncf %532 : vector<16x32xf32> to vector<16x32xbf16>
    %551 = arith.truncf %549 : vector<32x32xf32> to vector<32x32xbf16>
    %cst_245 = arith.constant dense<0.000000e+00> : vector<16x32xf32>
    %552 = tpu.matmul %550, %551, %cst_245 {dimension_numbers = #tpu.dot_dimension_numbers<[1], [0], [0], [1], [0, 0, 1, 1], [], []>} : vector<16x32xbf16>, vector<32x32xbf16>, vector<16x32xf32> -> vector<16x32xf32>
    %c3_246 = arith.constant 3 : index
    %c0_247 = arith.constant 0 : index
    %c0_248 = arith.constant 0 : index
    %553 = vector.load %arg10[%c3_246, %c0_247, %c0_248] : memref<4x1x32xf32, #tpu.memory_space<vmem>>, vector<1x1x32xf32>
    %554 = vector.shape_cast %553 : vector<1x1x32xf32> to vector<1x32xf32>
    %555 = vector.broadcast %554 : vector<1x32xf32> to vector<16x32xf32>
    %556 = arith.addf %552, %555 : vector<16x32xf32>
    %557 = vector.shape_cast %556 : vector<16x32xf32> to vector<2x8x32xf32>
    %558 = vector.extract_strided_slice %557 {offsets = [0, 0, 0], sizes = [2, 8, 8], strides = [1, 1, 1]} : vector<2x8x32xf32> to vector<2x8x8xf32>
    %559 = vector.extract_strided_slice %557 {offsets = [0, 0, 8], sizes = [2, 8, 8], strides = [1, 1, 1]} : vector<2x8x32xf32> to vector<2x8x8xf32>
    %560 = vector.extract_strided_slice %557 {offsets = [0, 0, 16], sizes = [2, 8, 8], strides = [1, 1, 1]} : vector<2x8x32xf32> to vector<2x8x8xf32>
    %561 = vector.extract_strided_slice %557 {offsets = [0, 0, 24], sizes = [2, 8, 8], strides = [1, 1, 1]} : vector<2x8x32xf32> to vector<2x8x8xf32>
    %562 = tpu.concatenate %558, %559, %560, %561 in 0 : vector<2x8x8xf32>, vector<2x8x8xf32>, vector<2x8x8xf32>, vector<2x8x8xf32> -> vector<8x8x8xf32>
    %c3_249 = arith.constant 3 : index
    %c0_250 = arith.constant 0 : index
    %c0_251 = arith.constant 0 : index
    %563 = vector.load %arg8[%c3_249, %c0_250, %c0_251] : memref<4x32x32xf32, #tpu.memory_space<vmem>>, vector<1x32x32xf32>
    %564 = vector.shape_cast %563 : vector<1x32x32xf32> to vector<32x32xf32>
    %565 = arith.truncf %532 : vector<16x32xf32> to vector<16x32xbf16>
    %566 = arith.truncf %564 : vector<32x32xf32> to vector<32x32xbf16>
    %cst_252 = arith.constant dense<0.000000e+00> : vector<16x32xf32>
    %567 = tpu.matmul %565, %566, %cst_252 {dimension_numbers = #tpu.dot_dimension_numbers<[1], [0], [0], [1], [0, 0, 1, 1], [], []>} : vector<16x32xbf16>, vector<32x32xbf16>, vector<16x32xf32> -> vector<16x32xf32>
    %c3_253 = arith.constant 3 : index
    %c0_254 = arith.constant 0 : index
    %c0_255 = arith.constant 0 : index
    %568 = vector.load %arg11[%c3_253, %c0_254, %c0_255] : memref<4x1x32xf32, #tpu.memory_space<vmem>>, vector<1x1x32xf32>
    %569 = vector.shape_cast %568 : vector<1x1x32xf32> to vector<1x32xf32>
    %570 = vector.broadcast %569 : vector<1x32xf32> to vector<16x32xf32>
    %571 = arith.addf %567, %570 : vector<16x32xf32>
    %572 = vector.shape_cast %571 : vector<16x32xf32> to vector<2x8x32xf32>
    %573 = vector.extract_strided_slice %572 {offsets = [0, 0, 0], sizes = [2, 8, 8], strides = [1, 1, 1]} : vector<2x8x32xf32> to vector<2x8x8xf32>
    %574 = vector.extract_strided_slice %572 {offsets = [0, 0, 8], sizes = [2, 8, 8], strides = [1, 1, 1]} : vector<2x8x32xf32> to vector<2x8x8xf32>
    %575 = vector.extract_strided_slice %572 {offsets = [0, 0, 16], sizes = [2, 8, 8], strides = [1, 1, 1]} : vector<2x8x32xf32> to vector<2x8x8xf32>
    %576 = vector.extract_strided_slice %572 {offsets = [0, 0, 24], sizes = [2, 8, 8], strides = [1, 1, 1]} : vector<2x8x32xf32> to vector<2x8x8xf32>
    %577 = tpu.concatenate %573, %574, %575, %576 in 0 : vector<2x8x8xf32>, vector<2x8x8xf32>, vector<2x8x8xf32>, vector<2x8x8xf32> -> vector<8x8x8xf32>
    %578 = arith.truncf %547 : vector<8x8x8xf32> to vector<8x8x8xbf16>
    %579 = arith.truncf %562 : vector<8x8x8xf32> to vector<8x8x8xbf16>
    "tpu.trace_start"() <{level = 10 : i32, message = "znd,zmd->znm"}> : () -> ()
    %cst_256 = arith.constant dense<0.000000e+00> : vector<8x8x8xf32>
    %580 = tpu.matmul %578, %579, %cst_256 {dimension_numbers = #tpu.dot_dimension_numbers<[2], [2], [1], [1], [0, 0, 0, 1, 1, 1], [0], [0]>} : vector<8x8x8xbf16>, vector<8x8x8xbf16>, vector<8x8x8xf32> -> vector<8x8x8xf32>
    "tpu.trace_stop"() : () -> ()
    %cst_257 = arith.constant 0.353553385 : f32
    %581 = vector.broadcast %cst_257 : f32 to vector<8x8x8xf32>
    %582 = arith.mulf %580, %581 : vector<8x8x8xf32>
    %cst_258 = arith.constant -1.000000e+09 : f32
    %583 = vector.shape_cast %5 : vector<8x1x8xi1> to vector<8x1x8xi1>
    %584 = vector.broadcast %583 : vector<8x1x8xi1> to vector<8x8x8xi1>
    %585 = vector.broadcast %cst_258 : f32 to vector<8x8x8xf32>
    %586 = arith.select %584, %582, %585 : vector<8x8x8xi1>, vector<8x8x8xf32>
    %cst_259 = arith.constant dense<0xFF800000> : vector<8x8xf32>
    %587 = vector.multi_reduction <maximumf>, %586, %cst_259 [2] : vector<8x8x8xf32> to vector<8x8xf32>
    %588 = vector.shape_cast %587 : vector<8x8xf32> to vector<8x8x1xf32>
    %589 = vector.broadcast %588 : vector<8x8x1xf32> to vector<8x8x8xf32>
    %590 = arith.subf %586, %589 : vector<8x8x8xf32>
    %591 = math.exp %590 : vector<8x8x8xf32>
    %cst_260 = arith.constant dense<0.000000e+00> : vector<8x8xf32>
    %592 = vector.multi_reduction <add>, %591, %cst_260 [2] : vector<8x8x8xf32> to vector<8x8xf32>
    %593 = vector.shape_cast %592 : vector<8x8xf32> to vector<8x8x1xf32>
    %594 = tpu.reciprocal %593 {approx = true} : vector<8x8x1xf32> -> vector<8x8x1xf32>
    %595 = vector.broadcast %594 : vector<8x8x1xf32> to vector<8x8x8xf32>
    %596 = arith.mulf %591, %595 : vector<8x8x8xf32>
    %597 = arith.truncf %596 : vector<8x8x8xf32> to vector<8x8x8xbf16>
    %598 = arith.truncf %577 : vector<8x8x8xf32> to vector<8x8x8xbf16>
    "tpu.trace_start"() <{level = 10 : i32, message = "znm,zmd->znd"}> : () -> ()
    %cst_261 = arith.constant dense<0.000000e+00> : vector<8x8x8xf32>
    %599 = tpu.matmul %597, %598, %cst_261 {dimension_numbers = #tpu.dot_dimension_numbers<[2], [1], [1], [2], [0, 0, 0, 1, 1, 2], [0], [0]>} : vector<8x8x8xbf16>, vector<8x8x8xbf16>, vector<8x8x8xf32> -> vector<8x8x8xf32>
    "tpu.trace_stop"() : () -> ()
    %600 = vector.extract_strided_slice %599 {offsets = [0, 0, 0], sizes = [2, 8, 8], strides = [1, 1, 1]} : vector<8x8x8xf32> to vector<2x8x8xf32>
    %601 = vector.extract_strided_slice %599 {offsets = [2, 0, 0], sizes = [2, 8, 8], strides = [1, 1, 1]} : vector<8x8x8xf32> to vector<2x8x8xf32>
    %602 = vector.extract_strided_slice %599 {offsets = [4, 0, 0], sizes = [2, 8, 8], strides = [1, 1, 1]} : vector<8x8x8xf32> to vector<2x8x8xf32>
    %603 = vector.extract_strided_slice %599 {offsets = [6, 0, 0], sizes = [2, 8, 8], strides = [1, 1, 1]} : vector<8x8x8xf32> to vector<2x8x8xf32>
    %604 = tpu.concatenate %600, %601, %602, %603 in 2 : vector<2x8x8xf32>, vector<2x8x8xf32>, vector<2x8x8xf32>, vector<2x8x8xf32> -> vector<2x8x32xf32>
    %605 = vector.shape_cast %604 : vector<2x8x32xf32> to vector<16x32xf32>
    %c3_262 = arith.constant 3 : index
    %c0_263 = arith.constant 0 : index
    %c0_264 = arith.constant 0 : index
    %606 = vector.load %arg12[%c3_262, %c0_263, %c0_264] : memref<4x32x32xf32, #tpu.memory_space<vmem>>, vector<1x32x32xf32>
    %607 = vector.shape_cast %606 : vector<1x32x32xf32> to vector<32x32xf32>
    %608 = arith.truncf %605 : vector<16x32xf32> to vector<16x32xbf16>
    %609 = arith.truncf %607 : vector<32x32xf32> to vector<32x32xbf16>
    %cst_265 = arith.constant dense<0.000000e+00> : vector<16x32xf32>
    %610 = tpu.matmul %608, %609, %cst_265 {dimension_numbers = #tpu.dot_dimension_numbers<[1], [0], [0], [1], [0, 0, 1, 1], [], []>} : vector<16x32xbf16>, vector<32x32xbf16>, vector<16x32xf32> -> vector<16x32xf32>
    %611 = arith.addf %506, %610 : vector<16x32xf32>
    %c3_266 = arith.constant 3 : index
    %c0_267 = arith.constant 0 : index
    %c0_268 = arith.constant 0 : index
    %612 = vector.load %arg13[%c3_266, %c0_267, %c0_268] : memref<4x1x32xf32, #tpu.memory_space<vmem>>, vector<1x1x32xf32>
    %613 = vector.shape_cast %612 : vector<1x1x32xf32> to vector<1x32xf32>
    %614 = vector.broadcast %613 : vector<1x32xf32> to vector<16x32xf32>
    %615 = arith.addf %611, %614 : vector<16x32xf32>
    %c3_269 = arith.constant 3 : index
    %c0_270 = arith.constant 0 : index
    %c0_271 = arith.constant 0 : index
    %616 = vector.load %arg14[%c3_269, %c0_270, %c0_271] : memref<4x1x32xf32, #tpu.memory_space<vmem>>, vector<1x1x32xf32>
    %617 = vector.shape_cast %616 : vector<1x1x32xf32> to vector<1x32xf32>
    %c3_272 = arith.constant 3 : index
    %c0_273 = arith.constant 0 : index
    %c0_274 = arith.constant 0 : index
    %618 = vector.load %arg15[%c3_272, %c0_273, %c0_274] : memref<4x1x32xf32, #tpu.memory_space<vmem>>, vector<1x1x32xf32>
    %619 = vector.shape_cast %618 : vector<1x1x32xf32> to vector<1x32xf32>
    %cst_275 = arith.constant dense<0.000000e+00> : vector<16xf32>
    %620 = vector.multi_reduction <add>, %615, %cst_275 [1] : vector<16x32xf32> to vector<16xf32>
    %621 = vector.shape_cast %620 : vector<16xf32> to vector<16x1xf32>
    %cst_276 = arith.constant 3.200000e+01 : f32
    %622 = vector.broadcast %cst_276 : f32 to vector<16x1xf32>
    %623 = arith.divf %621, %622 : vector<16x1xf32>
    %624 = vector.broadcast %623 : vector<16x1xf32> to vector<16x32xf32>
    %625 = arith.subf %615, %624 : vector<16x32xf32>
    %626 = arith.mulf %625, %625 : vector<16x32xf32>
    %cst_277 = arith.constant dense<0.000000e+00> : vector<16xf32>
    %627 = vector.multi_reduction <add>, %626, %cst_277 [1] : vector<16x32xf32> to vector<16xf32>
    %628 = vector.shape_cast %627 : vector<16xf32> to vector<16x1xf32>
    %cst_278 = arith.constant 3.200000e+01 : f32
    %629 = vector.broadcast %cst_278 : f32 to vector<16x1xf32>
    %630 = arith.divf %628, %629 : vector<16x1xf32>
    %631 = vector.broadcast %623 : vector<16x1xf32> to vector<16x32xf32>
    %632 = arith.subf %615, %631 : vector<16x32xf32>
    %cst_279 = arith.constant 9.99999974E-6 : f32
    %633 = vector.broadcast %cst_279 : f32 to vector<16x1xf32>
    %634 = arith.addf %630, %633 : vector<16x1xf32>
    %635 = math.rsqrt %634 : vector<16x1xf32>
    %636 = vector.broadcast %635 : vector<16x1xf32> to vector<16x32xf32>
    %637 = arith.mulf %632, %636 : vector<16x32xf32>
    %638 = vector.broadcast %617 : vector<1x32xf32> to vector<16x32xf32>
    %639 = arith.mulf %637, %638 : vector<16x32xf32>
    %640 = vector.broadcast %619 : vector<1x32xf32> to vector<16x32xf32>
    %641 = arith.addf %639, %640 : vector<16x32xf32>
    %c3_280 = arith.constant 3 : index
    %c0_281 = arith.constant 0 : index
    %c0_282 = arith.constant 0 : index
    %642 = vector.load %arg16[%c3_280, %c0_281, %c0_282] : memref<4x32x64xf32, #tpu.memory_space<vmem>>, vector<1x32x64xf32>
    %643 = vector.shape_cast %642 : vector<1x32x64xf32> to vector<32x64xf32>
    %644 = arith.truncf %641 : vector<16x32xf32> to vector<16x32xbf16>
    %645 = arith.truncf %643 : vector<32x64xf32> to vector<32x64xbf16>
    %cst_283 = arith.constant dense<0.000000e+00> : vector<16x64xf32>
    %646 = tpu.matmul %644, %645, %cst_283 {dimension_numbers = #tpu.dot_dimension_numbers<[1], [0], [0], [1], [0, 0, 1, 1], [], []>} : vector<16x32xbf16>, vector<32x64xbf16>, vector<16x64xf32> -> vector<16x64xf32>
    %c3_284 = arith.constant 3 : index
    %c0_285 = arith.constant 0 : index
    %c0_286 = arith.constant 0 : index
    %647 = vector.load %arg17[%c3_284, %c0_285, %c0_286] : memref<4x1x64xf32, #tpu.memory_space<vmem>>, vector<1x1x64xf32>
    %648 = vector.shape_cast %647 : vector<1x1x64xf32> to vector<1x64xf32>
    %649 = vector.broadcast %648 : vector<1x64xf32> to vector<16x64xf32>
    %650 = arith.addf %646, %649 : vector<16x64xf32>
    %651 = arith.mulf %650, %650 : vector<16x64xf32>
    %652 = arith.mulf %650, %651 : vector<16x64xf32>
    %cst_287 = arith.constant 4.471500e-02 : f32
    %653 = vector.broadcast %cst_287 : f32 to vector<16x64xf32>
    %654 = arith.mulf %653, %652 : vector<16x64xf32>
    %655 = arith.addf %650, %654 : vector<16x64xf32>
    %cst_288 = arith.constant 0.797884583 : f32
    %656 = vector.broadcast %cst_288 : f32 to vector<16x64xf32>
    %657 = arith.mulf %656, %655 : vector<16x64xf32>
    %658 = math.tanh %657 : vector<16x64xf32>
    %cst_289 = arith.constant 1.000000e+00 : f32
    %659 = vector.broadcast %cst_289 : f32 to vector<16x64xf32>
    %660 = arith.addf %659, %658 : vector<16x64xf32>
    %cst_290 = arith.constant 5.000000e-01 : f32
    %661 = vector.broadcast %cst_290 : f32 to vector<16x64xf32>
    %662 = arith.mulf %661, %660 : vector<16x64xf32>
    %663 = arith.mulf %650, %662 : vector<16x64xf32>
    %c3_291 = arith.constant 3 : index
    %c0_292 = arith.constant 0 : index
    %c0_293 = arith.constant 0 : index
    %664 = vector.load %arg18[%c3_291, %c0_292, %c0_293] : memref<4x64x32xf32, #tpu.memory_space<vmem>>, vector<1x64x32xf32>
    %665 = vector.shape_cast %664 : vector<1x64x32xf32> to vector<64x32xf32>
    %666 = arith.truncf %663 : vector<16x64xf32> to vector<16x64xbf16>
    %667 = arith.truncf %665 : vector<64x32xf32> to vector<64x32xbf16>
    %cst_294 = arith.constant dense<0.000000e+00> : vector<16x32xf32>
    %668 = tpu.matmul %666, %667, %cst_294 {dimension_numbers = #tpu.dot_dimension_numbers<[1], [0], [0], [1], [0, 0, 1, 1], [], []>} : vector<16x64xbf16>, vector<64x32xbf16>, vector<16x32xf32> -> vector<16x32xf32>
    %669 = arith.addf %615, %668 : vector<16x32xf32>
    %c3_295 = arith.constant 3 : index
    %c0_296 = arith.constant 0 : index
    %c0_297 = arith.constant 0 : index
    %670 = vector.load %arg19[%c3_295, %c0_296, %c0_297] : memref<4x1x32xf32, #tpu.memory_space<vmem>>, vector<1x1x32xf32>
    %671 = vector.shape_cast %670 : vector<1x1x32xf32> to vector<1x32xf32>
    %672 = vector.broadcast %671 : vector<1x32xf32> to vector<16x32xf32>
    %673 = arith.addf %669, %672 : vector<16x32xf32>
    %c0_298 = arith.constant 0 : index
    %c0_299 = arith.constant 0 : index
    %674 = vector.load %arg20[%c0_298, %c0_299] : memref<1x32xf32, #tpu.memory_space<vmem>>, vector<1x32xf32>
    %c0_300 = arith.constant 0 : index
    %c0_301 = arith.constant 0 : index
    %675 = vector.load %arg21[%c0_300, %c0_301] : memref<1x32xf32, #tpu.memory_space<vmem>>, vector<1x32xf32>
    %cst_302 = arith.constant dense<0.000000e+00> : vector<16xf32>
    %676 = vector.multi_reduction <add>, %673, %cst_302 [1] : vector<16x32xf32> to vector<16xf32>
    %677 = vector.shape_cast %676 : vector<16xf32> to vector<16x1xf32>
    %cst_303 = arith.constant 3.200000e+01 : f32
    %678 = vector.broadcast %cst_303 : f32 to vector<16x1xf32>
    %679 = arith.divf %677, %678 : vector<16x1xf32>
    %680 = vector.broadcast %679 : vector<16x1xf32> to vector<16x32xf32>
    %681 = arith.subf %673, %680 : vector<16x32xf32>
    %682 = arith.mulf %681, %681 : vector<16x32xf32>
    %cst_304 = arith.constant dense<0.000000e+00> : vector<16xf32>
    %683 = vector.multi_reduction <add>, %682, %cst_304 [1] : vector<16x32xf32> to vector<16xf32>
    %684 = vector.shape_cast %683 : vector<16xf32> to vector<16x1xf32>
    %cst_305 = arith.constant 3.200000e+01 : f32
    %685 = vector.broadcast %cst_305 : f32 to vector<16x1xf32>
    %686 = arith.divf %684, %685 : vector<16x1xf32>
    %687 = vector.broadcast %679 : vector<16x1xf32> to vector<16x32xf32>
    %688 = arith.subf %673, %687 : vector<16x32xf32>
    %cst_306 = arith.constant 9.99999974E-6 : f32
    %689 = vector.broadcast %cst_306 : f32 to vector<16x1xf32>
    %690 = arith.addf %686, %689 : vector<16x1xf32>
    %691 = math.rsqrt %690 : vector<16x1xf32>
    %692 = vector.broadcast %691 : vector<16x1xf32> to vector<16x32xf32>
    %693 = arith.mulf %688, %692 : vector<16x32xf32>
    %694 = vector.broadcast %674 : vector<1x32xf32> to vector<16x32xf32>
    %695 = arith.mulf %693, %694 : vector<16x32xf32>
    %696 = vector.broadcast %675 : vector<1x32xf32> to vector<16x32xf32>
    %697 = arith.addf %695, %696 : vector<16x32xf32>
    %c0_307 = arith.constant 0 : index
    %c0_308 = arith.constant 0 : index
    %698 = vector.load %arg22[%c0_307, %c0_308] : memref<32x128xf32, #tpu.memory_space<vmem>>, vector<32x128xf32>
    %699 = arith.truncf %697 : vector<16x32xf32> to vector<16x32xbf16>
    %700 = arith.truncf %698 : vector<32x128xf32> to vector<32x128xbf16>
    %cst_309 = arith.constant dense<0.000000e+00> : vector<16x128xf32>
    %701 = tpu.matmul %699, %700, %cst_309 {dimension_numbers = #tpu.dot_dimension_numbers<[1], [0], [0], [1], [0, 0, 1, 1], [], []>} : vector<16x32xbf16>, vector<32x128xbf16>, vector<16x128xf32> -> vector<16x128xf32>
    %c0_310 = arith.constant 0 : index
    %c0_311 = arith.constant 0 : index
    %702 = vector.load %arg23[%c0_310, %c0_311] : memref<1x128xf32, #tpu.memory_space<vmem>>, vector<1x128xf32>
    %703 = vector.broadcast %702 : vector<1x128xf32> to vector<16x128xf32>
    %704 = arith.addf %701, %703 : vector<16x128xf32>
    %705 = tpu.iota {dimensions = array<i32: 1>} : vector<16x128xi32>
    %c28_i32 = arith.constant 28 : i32
    %706 = vector.broadcast %c28_i32 : i32 to vector<16x128xi32>
    %707 = arith.cmpi slt, %705, %706 : vector<16x128xi32>
    %cst_312 = arith.constant -1.000000e+30 : f32
    %708 = vector.broadcast %cst_312 : f32 to vector<16x128xf32>
    %709 = arith.select %707, %704, %708 : vector<16x128xi1>, vector<16x128xf32>
    %cst_313 = arith.constant dense<0xFF800000> : vector<16xf32>
    %710 = vector.multi_reduction <maximumf>, %709, %cst_313 [1] : vector<16x128xf32> to vector<16xf32>
    %711 = vector.shape_cast %710 : vector<16xf32> to vector<16x1xf32>
    %712 = vector.broadcast %711 : vector<16x1xf32> to vector<16x128xf32>
    %713 = arith.subf %709, %712 : vector<16x128xf32>
    %714 = math.exp %713 : vector<16x128xf32>
    %cst_314 = arith.constant dense<0.000000e+00> : vector<16xf32>
    %715 = vector.multi_reduction <add>, %714, %cst_314 [1] : vector<16x128xf32> to vector<16xf32>
    %716 = vector.shape_cast %715 : vector<16xf32> to vector<16x1xf32>
    %717 = math.log %716 : vector<16x1xf32>
    %718 = arith.addf %717, %711 : vector<16x1xf32>
    %719 = vector.broadcast %718 : vector<16x1xf32> to vector<16x128xf32>
    %720 = arith.subf %709, %719 : vector<16x128xf32>
    %c0_315 = arith.constant 0 : index
    %c0_316 = arith.constant 0 : index
    %c0_317 = arith.constant 0 : index
    %721 = vector.load %arg3[%c0_315, %c0_316, %c0_317] : memref<2x8x1xi32, #tpu.memory_space<vmem>>, vector<2x8x1xi32>
    %722 = vector.shape_cast %721 : vector<2x8x1xi32> to vector<16x1xi32>
    %723 = vector.broadcast %722 : vector<16x1xi32> to vector<16x128xi32>
    %724 = arith.cmpi eq, %705, %723 : vector<16x128xi32>
    %cst_318 = arith.constant 0.000000e+00 : f32
    %725 = vector.broadcast %cst_318 : f32 to vector<16x128xf32>
    %726 = arith.select %724, %720, %725 : vector<16x128xi1>, vector<16x128xf32>
    %cst_319 = arith.constant dense<0.000000e+00> : vector<16xf32>
    %727 = vector.multi_reduction <add>, %726, %cst_319 [1] : vector<16x128xf32> to vector<16xf32>
    %728 = vector.shape_cast %727 : vector<16xf32> to vector<16x1xf32>
    %cst_320 = arith.constant 0.000000e+00 : f32
    %729 = vector.broadcast %cst_320 : f32 to vector<16x1xf32>
    %730 = arith.subf %729, %728 : vector<16x1xf32>
    %c1_i32 = arith.constant 1 : i32
    %731 = vector.broadcast %c1_i32 : i32 to vector<16x1xi32>
    %732 = arith.cmpi ne, %722, %731 : vector<16x1xi32>
    %733 = arith.extui %732 : vector<16x1xi1> to vector<16x1xi32>
    %734 = arith.sitofp %733 : vector<16x1xi32> to vector<16x1xf32>
    %735 = arith.mulf %730, %734 : vector<16x1xf32>
    %736 = vector.shape_cast %735 : vector<16x1xf32> to vector<1x16x1xf32>
    %cst_321 = arith.constant dense<0.000000e+00> : vector<1xf32>
    %737 = vector.multi_reduction <add>, %736, %cst_321 [1, 2] : vector<1x16x1xf32> to vector<1xf32>
    %738 = vector.shape_cast %737 : vector<1xf32> to vector<1x1x1xf32>
    %739 = vector.extract %738[0, 0, 0] : f32 from vector<1x1x1xf32>
    %c0_322 = arith.constant 0 : index
    %c0_323 = arith.constant 0 : index
    %740 = memref.load %arg24[%c0_322, %c0_323] : memref<1x1xf32, #tpu.memory_space<smem>>
    memref.store %739, %arg24[%c0_322, %c0_323] : memref<1x1xf32, #tpu.memory_space<smem>>
    %741 = vector.shape_cast %734 : vector<16x1xf32> to vector<1x16x1xf32>
    %cst_324 = arith.constant dense<0.000000e+00> : vector<1xf32>
    %742 = vector.multi_reduction <add>, %741, %cst_324 [1, 2] : vector<1x16x1xf32> to vector<1xf32>
    %743 = vector.shape_cast %742 : vector<1xf32> to vector<1x1x1xf32>
    %744 = vector.extract %743[0, 0, 0] : f32 from vector<1x1x1xf32>
    %c0_325 = arith.constant 0 : index
    %c0_326 = arith.constant 0 : index
    %745 = memref.load %arg25[%c0_325, %c0_326] : memref<1x1xf32, #tpu.memory_space<smem>>
    memref.store %744, %arg25[%c0_325, %c0_326] : memref<1x1xf32, #tpu.memory_space<smem>>
    return
  }
  func.func @transform_0(%arg0: i32) -> (i32, i32, i32) {
    %c0_i32 = arith.constant 0 : i32
    %c0_i32_0 = arith.constant 0 : i32
    %c0_i32_1 = arith.constant 0 : i32
    return %arg0, %c0_i32, %c0_i32_0 : i32, i32, i32
  }
  func.func @transform_1(%arg0: i32) -> (i32, i32, i32) {
    %c0_i32 = arith.constant 0 : i32
    %c0_i32_0 = arith.constant 0 : i32
    %c0_i32_1 = arith.constant 0 : i32
    return %arg0, %c0_i32, %c0_i32_0 : i32, i32, i32
  }
  func.func @transform_2(%arg0: i32) -> (i32, i32, i32) {
    %c0_i32 = arith.constant 0 : i32
    %c0_i32_0 = arith.constant 0 : i32
    %c0_i32_1 = arith.constant 0 : i32
    return %arg0, %c0_i32, %c0_i32_0 : i32, i32, i32
  }
  func.func @transform_3(%arg0: i32) -> (i32, i32, i32) {
    %c0_i32 = arith.constant 0 : i32
    %c0_i32_0 = arith.constant 0 : i32
    %c0_i32_1 = arith.constant 0 : i32
    %c0_i32_2 = arith.constant 0 : i32
    return %c0_i32, %c0_i32_0, %c0_i32_1 : i32, i32, i32
  }
  func.func @transform_4(%arg0: i32) -> (i32, i32, i32) {
    %c0_i32 = arith.constant 0 : i32
    %c0_i32_0 = arith.constant 0 : i32
    %c0_i32_1 = arith.constant 0 : i32
    %c0_i32_2 = arith.constant 0 : i32
    return %c0_i32, %c0_i32_0, %c0_i32_1 : i32, i32, i32
  }
  func.func @transform_5(%arg0: i32) -> (i32, i32, i32) {
    %c0_i32 = arith.constant 0 : i32
    %c0_i32_0 = arith.constant 0 : i32
    %c0_i32_1 = arith.constant 0 : i32
    %c0_i32_2 = arith.constant 0 : i32
    return %c0_i32, %c0_i32_0, %c0_i32_1 : i32, i32, i32
  }
  func.func @transform_6(%arg0: i32) -> (i32, i32, i32) {
    %c0_i32 = arith.constant 0 : i32
    %c0_i32_0 = arith.constant 0 : i32
    %c0_i32_1 = arith.constant 0 : i32
    %c0_i32_2 = arith.constant 0 : i32
    return %c0_i32, %c0_i32_0, %c0_i32_1 : i32, i32, i32
  }
  func.func @transform_7(%arg0: i32) -> (i32, i32, i32) {
    %c0_i32 = arith.constant 0 : i32
    %c0_i32_0 = arith.constant 0 : i32
    %c0_i32_1 = arith.constant 0 : i32
    %c0_i32_2 = arith.constant 0 : i32
    return %c0_i32, %c0_i32_0, %c0_i32_1 : i32, i32, i32
  }
  func.func @transform_8(%arg0: i32) -> (i32, i32, i32) {
    %c0_i32 = arith.constant 0 : i32
    %c0_i32_0 = arith.constant 0 : i32
    %c0_i32_1 = arith.constant 0 : i32
    %c0_i32_2 = arith.constant 0 : i32
    return %c0_i32, %c0_i32_0, %c0_i32_1 : i32, i32, i32
  }
  func.func @transform_9(%arg0: i32) -> (i32, i32, i32) {
    %c0_i32 = arith.constant 0 : i32
    %c0_i32_0 = arith.constant 0 : i32
    %c0_i32_1 = arith.constant 0 : i32
    %c0_i32_2 = arith.constant 0 : i32
    return %c0_i32, %c0_i32_0, %c0_i32_1 : i32, i32, i32
  }
  func.func @transform_10(%arg0: i32) -> (i32, i32, i32) {
    %c0_i32 = arith.constant 0 : i32
    %c0_i32_0 = arith.constant 0 : i32
    %c0_i32_1 = arith.constant 0 : i32
    %c0_i32_2 = arith.constant 0 : i32
    return %c0_i32, %c0_i32_0, %c0_i32_1 : i32, i32, i32
  }
  func.func @transform_11(%arg0: i32) -> (i32, i32, i32) {
    %c0_i32 = arith.constant 0 : i32
    %c0_i32_0 = arith.constant 0 : i32
    %c0_i32_1 = arith.constant 0 : i32
    %c0_i32_2 = arith.constant 0 : i32
    return %c0_i32, %c0_i32_0, %c0_i32_1 : i32, i32, i32
  }
  func.func @transform_12(%arg0: i32) -> (i32, i32, i32) {
    %c0_i32 = arith.constant 0 : i32
    %c0_i32_0 = arith.constant 0 : i32
    %c0_i32_1 = arith.constant 0 : i32
    %c0_i32_2 = arith.constant 0 : i32
    return %c0_i32, %c0_i32_0, %c0_i32_1 : i32, i32, i32
  }
  func.func @transform_13(%arg0: i32) -> (i32, i32, i32) {
    %c0_i32 = arith.constant 0 : i32
    %c0_i32_0 = arith.constant 0 : i32
    %c0_i32_1 = arith.constant 0 : i32
    %c0_i32_2 = arith.constant 0 : i32
    return %c0_i32, %c0_i32_0, %c0_i32_1 : i32, i32, i32
  }
  func.func @transform_14(%arg0: i32) -> (i32, i32, i32) {
    %c0_i32 = arith.constant 0 : i32
    %c0_i32_0 = arith.constant 0 : i32
    %c0_i32_1 = arith.constant 0 : i32
    %c0_i32_2 = arith.constant 0 : i32
    return %c0_i32, %c0_i32_0, %c0_i32_1 : i32, i32, i32
  }
  func.func @transform_15(%arg0: i32) -> (i32, i32, i32) {
    %c0_i32 = arith.constant 0 : i32
    %c0_i32_0 = arith.constant 0 : i32
    %c0_i32_1 = arith.constant 0 : i32
    %c0_i32_2 = arith.constant 0 : i32
    return %c0_i32, %c0_i32_0, %c0_i32_1 : i32, i32, i32
  }
  func.func @transform_16(%arg0: i32) -> (i32, i32, i32) {
    %c0_i32 = arith.constant 0 : i32
    %c0_i32_0 = arith.constant 0 : i32
    %c0_i32_1 = arith.constant 0 : i32
    %c0_i32_2 = arith.constant 0 : i32
    return %c0_i32, %c0_i32_0, %c0_i32_1 : i32, i32, i32
  }
  func.func @transform_17(%arg0: i32) -> (i32, i32, i32) {
    %c0_i32 = arith.constant 0 : i32
    %c0_i32_0 = arith.constant 0 : i32
    %c0_i32_1 = arith.constant 0 : i32
    %c0_i32_2 = arith.constant 0 : i32
    return %c0_i32, %c0_i32_0, %c0_i32_1 : i32, i32, i32
  }
  func.func @transform_18(%arg0: i32) -> (i32, i32, i32) {
    %c0_i32 = arith.constant 0 : i32
    %c0_i32_0 = arith.constant 0 : i32
    %c0_i32_1 = arith.constant 0 : i32
    %c0_i32_2 = arith.constant 0 : i32
    return %c0_i32, %c0_i32_0, %c0_i32_1 : i32, i32, i32
  }
  func.func @transform_19(%arg0: i32) -> (i32, i32) {
    %c0_i32 = arith.constant 0 : i32
    %c0_i32_0 = arith.constant 0 : i32
    %c0_i32_1 = arith.constant 0 : i32
    return %c0_i32, %c0_i32_0 : i32, i32
  }
  func.func @transform_20(%arg0: i32) -> (i32, i32) {
    %c0_i32 = arith.constant 0 : i32
    %c0_i32_0 = arith.constant 0 : i32
    %c0_i32_1 = arith.constant 0 : i32
    return %c0_i32, %c0_i32_0 : i32, i32
  }
  func.func @transform_21(%arg0: i32) -> (i32, i32) {
    %c0_i32 = arith.constant 0 : i32
    %c0_i32_0 = arith.constant 0 : i32
    %c0_i32_1 = arith.constant 0 : i32
    return %c0_i32, %c0_i32_0 : i32, i32
  }
  func.func @transform_22(%arg0: i32) -> (i32, i32) {
    %c0_i32 = arith.constant 0 : i32
    %c0_i32_0 = arith.constant 0 : i32
    %c0_i32_1 = arith.constant 0 : i32
    return %c0_i32, %c0_i32_0 : i32, i32
  }
  func.func @transform_23(%arg0: i32) -> (i32, i32) {
    %c0_i32 = arith.constant 0 : i32
    %c0_i32_0 = arith.constant 0 : i32
    return %arg0, %c0_i32 : i32, i32
  }
  func.func @transform_24(%arg0: i32) -> (i32, i32) {
    %c0_i32 = arith.constant 0 : i32
    %c0_i32_0 = arith.constant 0 : i32
    return %arg0, %c0_i32 : i32, i32
  }
}

</mosaic_0001>

<llo_original>
// kernel: tpu_custom_call.1
$region0: #{tpu_custom_call.1}
  #allocation0 [shape = 'u32[]', space=smem, size = 0x4, offset = 0x4, fixed_abs, tag = 'smem constant byte address 0x4 - core index']
  #allocation1 [shape = 'u32[72,128]{1,0:T(1,128)}', space=vmem, size = 0x9000, scoped, tag = 'internal scratch']
  %s0 = inlined_call_operand.hbm [shape: f32[2,8,32], index: 0, kind: input, shape index: {}]
  %s1 = inlined_call_operand.hbm [shape: f32[2,1,8], index: 1, kind: input, shape index: {}]
  %s2 = inlined_call_operand.vmem [shape: s32[2,8,1], index: 2, kind: input, shape index: {}]
  %s3 = inlined_call_operand.hbm [shape: f32[4,1,32], index: 3, kind: input, shape index: {}]
  %s4 = inlined_call_operand.hbm [shape: f32[4,1,32], index: 4, kind: input, shape index: {}]
  %s5 = inlined_call_operand.vmem [shape: f32[4,32,32], index: 5, kind: input, shape index: {}]
  %s6 = inlined_call_operand.vmem [shape: f32[4,32,32], index: 6, kind: input, shape index: {}]
  %s7 = inlined_call_operand.vmem [shape: f32[4,32,32], index: 7, kind: input, shape index: {}]
  %s8 = inlined_call_operand.hbm [shape: f32[4,1,32], index: 8, kind: input, shape index: {}]
  %s9 = inlined_call_operand.hbm [shape: f32[4,1,32], index: 9, kind: input, shape index: {}]
  %s10 = inlined_call_operand.hbm [shape: f32[4,1,32], index: 10, kind: input, shape index: {}]
  %s11 = inlined_call_operand.hbm [shape: f32[4,32,32], index: 11, kind: input, shape index: {}]
  %s12 = inlined_call_operand.hbm [shape: f32[4,1,32], index: 12, kind: input, shape index: {}]
  %s13 = inlined_call_operand.hbm [shape: f32[4,1,32], index: 13, kind: input, shape index: {}]
  %s14 = inlined_call_operand.hbm [shape: f32[4,1,32], index: 14, kind: input, shape index: {}]
  %s15 = inlined_call_operand.hbm [shape: f32[4,32,64], index: 15, kind: input, shape index: {}]
  %s16 = inlined_call_operand.hbm [shape: f32[4,1,64], index: 16, kind: input, shape index: {}]
  %s17 = inlined_call_operand.vmem [shape: f32[4,64,32], index: 17, kind: input, shape index: {}]
  %s18 = inlined_call_operand.hbm [shape: f32[4,1,32], index: 18, kind: input, shape index: {}]
  %s19 = inlined_call_operand.hbm [shape: f32[1,32], index: 19, kind: input, shape index: {}]
  %s20 = inlined_call_operand.vmem [shape: f32[1,32], index: 20, kind: input, shape index: {}]
  %s21 = inlined_call_operand.vmem [shape: f32[32,128], index: 21, kind: input, shape index: {}]
  %s22 = inlined_call_operand.vmem [shape: f32[1,128], index: 22, kind: input, shape index: {}]
  %s23 = inlined_call_operand.hbm [shape: f32[1,1], index: 23, kind: output, shape index: {0}]
  %s24 = inlined_call_operand.hbm [shape: f32[1,1], index: 24, kind: output, shape index: {1}]
  %25 = xla_tuple %s23, %s24
  %s26 = sld [smem:[#allocation0]]
  $region170: #{tpu_custom_call.1} parent=0
    _
  %s28 = ssub.s32 1, %s26
  %s29 = scalar_select 0, %s28, %s26
  $region1: #{tpu_custom_call.1} parent=0
    #allocation2 [shape = 'u8[8192]{0}', space=vmem, size = 0x2000, scoped, tag = 'input window, operand 0, single buffered']
    #allocation3 [shape = 's32[1]{0}', space=sflag, size = 0x4, scoped, tag = 'scoped memory for tpu_custom_call.1']
    #allocation4 [shape = 's32[1]{0}', space=sflag, size = 0x4, scoped, tag = 'scoped memory for tpu_custom_call.1']
    #allocation5 [shape = 'u8[1024]{0}', space=vmem, size = 0x400, scoped, tag = 'input window, operand 1, single buffered']
    #allocation6 [shape = 's32[1]{0}', space=sflag, size = 0x4, scoped, tag = 'scoped memory for tpu_custom_call.1']
    #allocation7 [shape = 'u8[2048]{0}', space=vmem, size = 0x800, scoped, tag = 'input window, operand 3, single buffered']
    #allocation8 [shape = 'u8[2048]{0}', space=vmem, size = 0x800, scoped, tag = 'input window, operand 4, single buffered']
    #allocation9 [shape = 's32[1]{0}', space=sflag, size = 0x4, scoped, tag = 'scoped memory for tpu_custom_call.1']
    #allocation10 [shape = 'u8[2048]{0}', space=vmem, size = 0x800, scoped, tag = 'input window, operand 8, single buffered']
    #allocation11 [shape = 'u8[2048]{0}', space=vmem, size = 0x800, scoped, tag = 'input window, operand 9, single buffered']
    #allocation12 [shape = 's32[1]{0}', space=sflag, size = 0x4, scoped, tag = 'scoped memory for tpu_custom_call.1']
    #allocation13 [shape = 'u8[2048]{0}', space=vmem, size = 0x800, scoped, tag = 'input window, operand 10, single buffered']
    #allocation14 [shape = 'u8[65536]{0}', space=vmem, size = 0x10000, scoped, tag = 'input window, operand 11, single buffered']
    #allocation15 [shape = 's32[1]{0}', space=sflag, size = 0x4, scoped, tag = 'scoped memory for tpu_custom_call.1']
    #allocation16 [shape = 'u8[2048]{0}', space=vmem, size = 0x800, scoped, tag = 'input window, operand 12, single buffered']
    #allocation17 [shape = 'u8[2048]{0}', space=vmem, size = 0x800, scoped, tag = 'input window, operand 13, single buffered']
    #allocation18 [shape = 's32[1]{0}', space=sflag, size = 0x4, scoped, tag = 'scoped memory for tpu_custom_call.1']
    #allocation19 [shape = 'u8[2048]{0}', space=vmem, size = 0x800, scoped, tag = 'input window, operand 14, single buffered']
    #allocation20 [shape = 'u8[65536]{0}', space=vmem, size = 0x10000, scoped, tag = 'input window, operand 15, single buffered']
    #allocation21 [shape = 's32[1]{0}', space=sflag, size = 0x4, scoped, tag = 'scoped memory for tpu_custom_call.1']
    #allocation22 [shape = 'u8[2048]{0}', space=vmem, size = 0x800, scoped, tag = 'input window, operand 16, single buffered']
    #allocation23 [shape = 'u8[2048]{0}', space=vmem, size = 0x800, scoped, tag = 'input window, operand 18, single buffered']
    #allocation24 [shape = 's32[1]{0}', space=sflag, size = 0x4, scoped, tag = 'scoped memory for tpu_custom_call.1']
    #allocation25 [shape = 'u8[512]{0}', space=vmem, size = 0x400, scoped, tag = 'input window, operand 19, single buffered']
    #allocation26 [shape = 'u8[512]{0}', space=smem, size = 0x200, scoped, tag = 'output window, operand 0, single buffered']
    #allocation27 [shape = 'u8[512]{0}', space=smem, size = 0x200, scoped, tag = 'output window, operand 1, single buffered']
    #allocation28 [shape = 's32[1]{0}', space=sflag, size = 0x4, scoped, tag = 'scoped memory for tpu_custom_call.1']
    %30 = vsyncpa [#allocation3], 0
    %31 = vsyncpa [#allocation6], 0
    %32 = vsyncpa [#allocation9], 0
    %33 = vsyncpa [#allocation12], 0
    %34 = vsyncpa [#allocation15], 0
    %35 = vsyncpa [#allocation18], 0
    %36 = vsyncpa [#allocation21], 0
    %37 = vsyncpa [#allocation24], 0
    %38 = vsyncpa [#allocation4], 0
    %39 = vsyncpa [#allocation28], 0
    // Predicated region
    $region2: #{tpu_custom_call.1} parent=1 // pred_check
      _
    $region3: #{tpu_custom_call.1} parent=1 // pred_check_branch
      %41 = sbr.rel (0) target = $region5
    $region4: #{tpu_custom_call.1} parent=1 // pred_region
      %43 = vsyncadd [#allocation3], 0
      %s44 = sshll.u32 %s0, 4
      %s45 = int_to_ptr.hbm [resolvable:$true] %s44
      %s46 = sshll.u32 [#allocation2], 4
      %s47 = int_to_ptr.vmem [resolvable:$true] %s46
      %52 = dma.hbm_to_vmem [thread:$0]  %s45, 256, %s47, [#allocation3], 128, 128, 8
    $region5: #{tpu_custom_call.1} parent=1 // pred_fallthru
      _
    // Predicated region
    $region6: #{tpu_custom_call.1} parent=1 // pred_check
      _
    $region7: #{tpu_custom_call.1} parent=1 // pred_check_branch
      %54 = sbr.rel (0) target = $region9
    $region8: #{tpu_custom_call.1} parent=1 // pred_region
      %56 = vsyncadd [#allocation6], 0
      %s57 = sshll.u32 %s1, 4
      %s58 = int_to_ptr.hbm [resolvable:$true] %s57
      %s59 = sshll.u32 [#allocation5], 4
      %s60 = int_to_ptr.vmem [resolvable:$true] %s59
      %65 = dma.hbm_to_vmem [thread:$0]  %s58, 32, %s60, [#allocation6], 16, 16, 1
    $region9: #{tpu_custom_call.1} parent=1 // pred_fallthru
      _
    // Predicated region
    $region10: #{tpu_custom_call.1} parent=1 // pred_check
      _
    $region11: #{tpu_custom_call.1} parent=1 // pred_check_branch
      %67 = sbr.rel (0) target = $region13
    $region12: #{tpu_custom_call.1} parent=1 // pred_region
      _
    $region13: #{tpu_custom_call.1} parent=1 // pred_fallthru
      _
    // Predicated region
    $region14: #{tpu_custom_call.1} parent=1 // pred_check
      _
    $region15: #{tpu_custom_call.1} parent=1 // pred_check_branch
      %69 = sbr.rel (0) target = $region17
    $region16: #{tpu_custom_call.1} parent=1 // pred_region
      %71 = vsyncadd [#allocation6], 0
      %s72 = sshll.u32 %s3, 4
      %s73 = int_to_ptr.hbm [resolvable:$true] %s72
      %s74 = sshll.u32 [#allocation7], 4
      %s75 = int_to_ptr.vmem [resolvable:$true] %s74
      %80 = dma.hbm_to_vmem [thread:$0]  %s73, 64, %s75, [#allocation6], 16, 16, 1
    $region17: #{tpu_custom_call.1} parent=1 // pred_fallthru
      _
    // Predicated region
    $region18: #{tpu_custom_call.1} parent=1 // pred_check
      _
    $region19: #{tpu_custom_call.1} parent=1 // pred_check_branch
      %82 = sbr.rel (0) target = $region21
    $region20: #{tpu_custom_call.1} parent=1 // pred_region
      %84 = vsyncadd [#allocation9], 0
      %s85 = sshll.u32 %s4, 4
      %s86 = int_to_ptr.hbm [resolvable:$true] %s85
      %s87 = sshll.u32 [#allocation8], 4
      %s88 = int_to_ptr.vmem [resolvable:$true] %s87
      %93 = dma.hbm_to_vmem [thread:$0]  %s86, 64, %s88, [#allocation9], 16, 16, 1
    $region21: #{tpu_custom_call.1} parent=1 // pred_fallthru
      _
    // Predicated region
    $region22: #{tpu_custom_call.1} parent=1 // pred_check
      _
    $region23: #{tpu_custom_call.1} parent=1 // pred_check_branch
      %95 = sbr.rel (0) target = $region25
    $region24: #{tpu_custom_call.1} parent=1 // pred_region
      _
    $region25: #{tpu_custom_call.1} parent=1 // pred_fallthru
      _
    // Predicated region
    $region26: #{tpu_custom_call.1} parent=1 // pred_check
      _
    $region27: #{tpu_custom_call.1} parent=1 // pred_check_branch
      %97 = sbr.rel (0) target = $region29
    $region28: #{tpu_custom_call.1} parent=1 // pred_region
      _
    $region29: #{tpu_custom_call.1} parent=1 // pred_fallthru
      _
    // Predicated region
    $region30: #{tpu_custom_call.1} parent=1 // pred_check
      _
    $region31: #{tpu_custom_call.1} parent=1 // pred_check_branch
      %99 = sbr.rel (0) target = $region33
    $region32: #{tpu_custom_call.1} parent=1 // pred_region
      _
    $region33: #{tpu_custom_call.1} parent=1 // pred_fallthru
      _
    // Predicated region
    $region34: #{tpu_custom_call.1} parent=1 // pred_check
      _
    $region35: #{tpu_custom_call.1} parent=1 // pred_check_branch
      %101 = sbr.rel (0) target = $region37
    $region36: #{tpu_custom_call.1} parent=1 // pred_region
      %103 = vsyncadd [#allocation9], 0
      %s104 = sshll.u32 %s8, 4
      %s105 = int_to_ptr.hbm [resolvable:$true] %s104
      %s106 = sshll.u32 [#allocation10], 4
      %s107 = int_to_ptr.vmem [resolvable:$true] %s106
      %112 = dma.hbm_to_vmem [thread:$0]  %s105, 64, %s107, [#allocation9], 16, 16, 1
    $region37: #{tpu_custom_call.1} parent=1 // pred_fallthru
      _
    // Predicated region
    $region38: #{tpu_custom_call.1} parent=1 // pred_check
      _
    $region39: #{tpu_custom_call.1} parent=1 // pred_check_branch
      %114 = sbr.rel (0) target = $region41
    $region40: #{tpu_custom_call.1} parent=1 // pred_region
      %116 = vsyncadd [#allocation12], 0
      %s117 = sshll.u32 %s9, 4
      %s118 = int_to_ptr.hbm [resolvable:$true] %s117
      %s119 = sshll.u32 [#allocation11], 4
      %s120 = int_to_ptr.vmem [resolvable:$true] %s119
      %125 = dma.hbm_to_vmem [thread:$0]  %s118, 64, %s120, [#allocation12], 16, 16, 1
    $region41: #{tpu_custom_call.1} parent=1 // pred_fallthru
      _
    // Predicated region
    $region42: #{tpu_custom_call.1} parent=1 // pred_check
      _
    $region43: #{tpu_custom_call.1} parent=1 // pred_check_branch
      %127 = sbr.rel (0) target = $region45
    $region44: #{tpu_custom_call.1} parent=1 // pred_region
      %129 = vsyncadd [#allocation12], 0
      %s130 = sshll.u32 %s10, 4
      %s131 = int_to_ptr.hbm [resolvable:$true] %s130
      %s132 = sshll.u32 [#allocation13], 4
      %s133 = int_to_ptr.vmem [resolvable:$true] %s132
      %138 = dma.hbm_to_vmem [thread:$0]  %s131, 64, %s133, [#allocation12], 16, 16, 1
    $region45: #{tpu_custom_call.1} parent=1 // pred_fallthru
      _
    // Predicated region
    $region46: #{tpu_custom_call.1} parent=1 // pred_check
      _
    $region47: #{tpu_custom_call.1} parent=1 // pred_check_branch
      %140 = sbr.rel (0) target = $region49
    $region48: #{tpu_custom_call.1} parent=1 // pred_region
      %142 = vsyncadd [#allocation15], 0
      %s143 = sshll.u32 %s11, 4
      %s144 = int_to_ptr.hbm [resolvable:$true] %s143
      %s145 = sshll.u32 [#allocation14], 4
      %s146 = int_to_ptr.vmem [resolvable:$true] %s145
      %151 = dma.hbm_to_vmem [thread:$0]  %s144, 2048, %s146, [#allocation15], 128, 128, 8
    $region49: #{tpu_custom_call.1} parent=1 // pred_fallthru
      _
    // Predicated region
    $region50: #{tpu_custom_call.1} parent=1 // pred_check
      _
    $region51: #{tpu_custom_call.1} parent=1 // pred_check_branch
      %153 = sbr.rel (0) target = $region53
    $region52: #{tpu_custom_call.1} parent=1 // pred_region
      %155 = vsyncadd [#allocation15], 0
      %s156 = sshll.u32 %s12, 4
      %s157 = int_to_ptr.hbm [resolvable:$true] %s156
      %s158 = sshll.u32 [#allocation16], 4
      %s159 = int_to_ptr.vmem [resolvable:$true] %s158
      %164 = dma.hbm_to_vmem [thread:$0]  %s157, 64, %s159, [#allocation15], 16, 16, 1
    $region53: #{tpu_custom_call.1} parent=1 // pred_fallthru
      _
    // Predicated region
    $region54: #{tpu_custom_call.1} parent=1 // pred_check
      _
    $region55: #{tpu_custom_call.1} parent=1 // pred_check_branch
      %166 = sbr.rel (0) target = $region57
    $region56: #{tpu_custom_call.1} parent=1 // pred_region
      %168 = vsyncadd [#allocation18], 0
      %s169 = sshll.u32 %s13, 4
      %s170 = int_to_ptr.hbm [resolvable:$true] %s169
      %s171 = sshll.u32 [#allocation17], 4
      %s172 = int_to_ptr.vmem [resolvable:$true] %s171
      %177 = dma.hbm_to_vmem [thread:$0]  %s170, 64, %s172, [#allocation18], 16, 16, 1
    $region57: #{tpu_custom_call.1} parent=1 // pred_fallthru
      _
    // Predicated region
    $region58: #{tpu_custom_call.1} parent=1 // pred_check
      _
    $region59: #{tpu_custom_call.1} parent=1 // pred_check_branch
      %179 = sbr.rel (0) target = $region61
    $region60: #{tpu_custom_call.1} parent=1 // pred_region
      %181 = vsyncadd [#allocation18], 0
      %s182 = sshll.u32 %s14, 4
      %s183 = int_to_ptr.hbm [resolvable:$true] %s182
      %s184 = sshll.u32 [#allocation19], 4
      %s185 = int_to_ptr.vmem [resolvable:$true] %s184
      %190 = dma.hbm_to_vmem [thread:$0]  %s183, 64, %s185, [#allocation18], 16, 16, 1
    $region61: #{tpu_custom_call.1} parent=1 // pred_fallthru
      _
    // Predicated region
    $region62: #{tpu_custom_call.1} parent=1 // pred_check
      _
    $region63: #{tpu_custom_call.1} parent=1 // pred_check_branch
      %192 = sbr.rel (0) target = $region65
    $region64: #{tpu_custom_call.1} parent=1 // pred_region
      %194 = vsyncadd [#allocation21], 0
      %s195 = sshll.u32 %s15, 4
      %s196 = int_to_ptr.hbm [resolvable:$true] %s195
      %s197 = sshll.u32 [#allocation20], 4
      %s198 = int_to_ptr.vmem [resolvable:$true] %s197
      %203 = dma.hbm_to_vmem [thread:$0]  %s196, 2048, %s198, [#allocation21], 128, 128, 8
    $region65: #{tpu_custom_call.1} parent=1 // pred_fallthru
      _
    // Predicated region
    $region66: #{tpu_custom_call.1} parent=1 // pred_check
      _
    $region67: #{tpu_custom_call.1} parent=1 // pred_check_branch
      %205 = sbr.rel (0) target = $region69
    $region68: #{tpu_custom_call.1} parent=1 // pred_region
      %207 = vsyncadd [#allocation21], 0
      %s208 = sshll.u32 %s16, 4
      %s209 = int_to_ptr.hbm [resolvable:$true] %s208
      %s210 = sshll.u32 [#allocation22], 4
      %s211 = int_to_ptr.vmem [resolvable:$true] %s210
      %216 = dma.hbm_to_vmem [thread:$0]  %s209, 64, %s211, [#allocation21], 16, 16, 1
    $region69: #{tpu_custom_call.1} parent=1 // pred_fallthru
      _
    // Predicated region
    $region70: #{tpu_custom_call.1} parent=1 // pred_check
      _
    $region71: #{tpu_custom_call.1} parent=1 // pred_check_branch
      %218 = sbr.rel (0) target = $region73
    $region72: #{tpu_custom_call.1} parent=1 // pred_region
      _
    $region73: #{tpu_custom_call.1} parent=1 // pred_fallthru
      _
    // Predicated region
    $region74: #{tpu_custom_call.1} parent=1 // pred_check
      _
    $region75: #{tpu_custom_call.1} parent=1 // pred_check_branch
      %220 = sbr.rel (0) target = $region77
    $region76: #{tpu_custom_call.1} parent=1 // pred_region
      %222 = vsyncadd [#allocation24], 0
      %s223 = sshll.u32 %s18, 4
      %s224 = int_to_ptr.hbm [resolvable:$true] %s223
      %s225 = sshll.u32 [#allocation23], 4
      %s226 = int_to_ptr.vmem [resolvable:$true] %s225
      %231 = dma.hbm_to_vmem [thread:$0]  %s224, 64, %s226, [#allocation24], 16, 16, 1
    $region77: #{tpu_custom_call.1} parent=1 // pred_fallthru
      _
    // Predicated region
    $region78: #{tpu_custom_call.1} parent=1 // pred_check
      _
    $region79: #{tpu_custom_call.1} parent=1 // pred_check_branch
      %233 = sbr.rel (0) target = $region81
    $region80: #{tpu_custom_call.1} parent=1 // pred_region
      %235 = vsyncadd [#allocation24], 0
      %s237 = sshll.u32 %s19, 4
      %s238 = int_to_ptr.hbm [resolvable:$true] %s237
      %s239 = sshll.u32 [#allocation25], 4
      %s240 = int_to_ptr.vmem [resolvable:$true] %s239
      %242 = dma.hbm_to_vmem [thread:$0]  %s238, 16, %s240, [#allocation24]
    $region81: #{tpu_custom_call.1} parent=1 // pred_fallthru
      _
    // Predicated region
    $region82: #{tpu_custom_call.1} parent=1 // pred_check
      _
    $region83: #{tpu_custom_call.1} parent=1 // pred_check_branch
      %244 = sbr.rel (0) target = $region85
    $region84: #{tpu_custom_call.1} parent=1 // pred_region
      _
    $region85: #{tpu_custom_call.1} parent=1 // pred_fallthru
      _
    // Predicated region
    $region86: #{tpu_custom_call.1} parent=1 // pred_check
      _
    $region87: #{tpu_custom_call.1} parent=1 // pred_check_branch
      %246 = sbr.rel (0) target = $region89
    $region88: #{tpu_custom_call.1} parent=1 // pred_region
      _
    $region89: #{tpu_custom_call.1} parent=1 // pred_fallthru
      _
    // Predicated region
    $region90: #{tpu_custom_call.1} parent=1 // pred_check
      _
    $region91: #{tpu_custom_call.1} parent=1 // pred_check_branch
      %248 = sbr.rel (0) target = $region93
    $region92: #{tpu_custom_call.1} parent=1 // pred_region
      _
    $region93: #{tpu_custom_call.1} parent=1 // pred_fallthru
      _
    // Predicated region
    $region94: #{tpu_custom_call.1} parent=1 // pred_check
      _
    $region95: #{tpu_custom_call.1} parent=1 // pred_check_branch
      %250 = sbr.rel (0) target = $region97
    $region96: #{tpu_custom_call.1} parent=1 // pred_region
      %252 = dma.done [#allocation3], 256
    $region97: #{tpu_custom_call.1} parent=1 // pred_fallthru
      _
    // Predicated region
    $region98: #{tpu_custom_call.1} parent=1 // pred_check
      _
    $region99: #{tpu_custom_call.1} parent=1 // pred_check_branch
      %254 = sbr.rel (0) target = $region101
    $region100: #{tpu_custom_call.1} parent=1 // pred_region
      %256 = dma.done [#allocation6], 32
    $region101: #{tpu_custom_call.1} parent=1 // pred_fallthru
      _
    // Predicated region
    $region102: #{tpu_custom_call.1} parent=1 // pred_check
      _
    $region103: #{tpu_custom_call.1} parent=1 // pred_check_branch
      %258 = sbr.rel (0) target = $region105
    $region104: #{tpu_custom_call.1} parent=1 // pred_region
      %260 = dma.done [#allocation6], 64
    $region105: #{tpu_custom_call.1} parent=1 // pred_fallthru
      _
    // Predicated region
    $region106: #{tpu_custom_call.1} parent=1 // pred_check
      _
    $region107: #{tpu_custom_call.1} parent=1 // pred_check_branch
      %262 = sbr.rel (0) target = $region109
    $region108: #{tpu_custom_call.1} parent=1 // pred_region
      %264 = dma.done [#allocation9], 64
    $region109: #{tpu_custom_call.1} parent=1 // pred_fallthru
      _
    // Predicated region
    $region110: #{tpu_custom_call.1} parent=1 // pred_check
      _
    $region111: #{tpu_custom_call.1} parent=1 // pred_check_branch
      %266 = sbr.rel (0) target = $region113
    $region112: #{tpu_custom_call.1} parent=1 // pred_region
      %268 = dma.done [#allocation9], 64
    $region113: #{tpu_custom_call.1} parent=1 // pred_fallthru
      _
    // Predicated region
    $region114: #{tpu_custom_call.1} parent=1 // pred_check
      _
    $region115: #{tpu_custom_call.1} parent=1 // pred_check_branch
      %270 = sbr.rel (0) target = $region117
    $region116: #{tpu_custom_call.1} parent=1 // pred_region
      %272 = dma.done [#allocation12], 64
    $region117: #{tpu_custom_call.1} parent=1 // pred_fallthru
      _
    // Predicated region
    $region118: #{tpu_custom_call.1} parent=1 // pred_check
      _
    $region119: #{tpu_custom_call.1} parent=1 // pred_check_branch
      %274 = sbr.rel (0) target = $region121
    $region120: #{tpu_custom_call.1} parent=1 // pred_region
      %276 = dma.done [#allocation12], 64
    $region121: #{tpu_custom_call.1} parent=1 // pred_fallthru
      _
    // Predicated region
    $region122: #{tpu_custom_call.1} parent=1 // pred_check
      _
    $region123: #{tpu_custom_call.1} parent=1 // pred_check_branch
      %278 = sbr.rel (0) target = $region125
    $region124: #{tpu_custom_call.1} parent=1 // pred_region
      %280 = dma.done [#allocation15], 2048
    $region125: #{tpu_custom_call.1} parent=1 // pred_fallthru
      _
    // Predicated region
    $region126: #{tpu_custom_call.1} parent=1 // pred_check
      _
    $region127: #{tpu_custom_call.1} parent=1 // pred_check_branch
      %282 = sbr.rel (0) target = $region129
    $region128: #{tpu_custom_call.1} parent=1 // pred_region
      %284 = dma.done [#allocation15], 64
    $region129: #{tpu_custom_call.1} parent=1 // pred_fallthru
      _
    // Predicated region
    $region130: #{tpu_custom_call.1} parent=1 // pred_check
      _
    $region131: #{tpu_custom_call.1} parent=1 // pred_check_branch
      %286 = sbr.rel (0) target = $region133
    $region132: #{tpu_custom_call.1} parent=1 // pred_region
      %288 = dma.done [#allocation18], 64
    $region133: #{tpu_custom_call.1} parent=1 // pred_fallthru
      _
    // Predicated region
    $region134: #{tpu_custom_call.1} parent=1 // pred_check
      _
    $region135: #{tpu_custom_call.1} parent=1 // pred_check_branch
      %290 = sbr.rel (0) target = $region137
    $region136: #{tpu_custom_call.1} parent=1 // pred_region
      %292 = dma.done [#allocation18], 64
    $region137: #{tpu_custom_call.1} parent=1 // pred_fallthru
      _
    // Predicated region
    $region138: #{tpu_custom_call.1} parent=1 // pred_check
      _
    $region139: #{tpu_custom_call.1} parent=1 // pred_check_branch
      %294 = sbr.rel (0) target = $region141
    $region140: #{tpu_custom_call.1} parent=1 // pred_region
      %296 = dma.done [#allocation21], 2048
    $region141: #{tpu_custom_call.1} parent=1 // pred_fallthru
      _
    // Predicated region
    $region142: #{tpu_custom_call.1} parent=1 // pred_check
      _
    $region143: #{tpu_custom_call.1} parent=1 // pred_check_branch
      %298 = sbr.rel (0) target = $region145
    $region144: #{tpu_custom_call.1} parent=1 // pred_region
      %300 = dma.done [#allocation21], 64
    $region145: #{tpu_custom_call.1} parent=1 // pred_fallthru
      _
    // Predicated region
    $region146: #{tpu_custom_call.1} parent=1 // pred_check
      _
    $region147: #{tpu_custom_call.1} parent=1 // pred_check_branch
      %302 = sbr.rel (0) target = $region149
    $region148: #{tpu_custom_call.1} parent=1 // pred_region
      %304 = dma.done [#allocation24], 64
    $region149: #{tpu_custom_call.1} parent=1 // pred_fallthru
      _
    // Predicated region
    $region150: #{tpu_custom_call.1} parent=1 // pred_check
      _
    $region151: #{tpu_custom_call.1} parent=1 // pred_check_branch
      %306 = sbr.rel (0) target = $region153
    $region152: #{tpu_custom_call.1} parent=1 // pred_region
      %308 = dma.done [#allocation24], 16
    $region153: #{tpu_custom_call.1} parent=1 // pred_fallthru
      _
    %v310 = vld [vmem:[#allocation2] sm:$0xff]
    %v311 = vld [vmem:[#allocation2 + $0x8] sm:$0xff]
    %v312 = vld [vmem:[#allocation5] sm:$0x1]
    %v313 = vld [vmem:[#allocation5 + $0x1] sm:$0x1]
    %vm314 = vcmp.gt.f32.partialorder %v312, 0.5
    %vm315 = vcmp.gt.f32.partialorder %v313, 0.5
    %v316 = vld [vmem:[#allocation7] sm:$0x1]
    %v317 = vld [vmem:[#allocation8] sm:$0x1]
    %vm318 = vcmask 261120
    %v319 = vsel %vm318, %v310, 0.0
    %320 = vadd.xlane.f32.xlu0 %v319
    %v321 = vpop.xlane.xlu0 %320
    %v322 = vsel %vm318, %v311, 0.0
    %323 = vadd.xlane.f32.xlu0 %v322
    %v324 = vpop.xlane.xlu0 %323
    %v325 = vrcp.pop 32.0
    %v326 = vmul.f32 32.0, %v325
    %v327 = vsub.f32 1.0, %v326
    %v328 = vmul.f32 %v325, %v327
    %v329 = vadd.f32 %v325, %v328
    %vm330 = vweird.f32 %v325
    %v331 = vsel %vm330, %v325, %v329
    %v332 = vmul.f32 %v321, %v331
    %v333 = vmul.f32 %v324, %v331
    %v334 = vsub.f32 %v310, %v332
    %v335 = vsub.f32 %v311, %v333
    %v336 = vmul.f32 %v334, %v334
    %v337 = vmul.f32 %v335, %v335
    %v338 = vsel %vm318, %v336, 0.0
    %339 = vadd.xlane.f32.xlu0 %v338
    %v340 = vpop.xlane.xlu0 %339
    %v341 = vsel %vm318, %v337, 0.0
    %342 = vadd.xlane.f32.xlu0 %v341
    %v343 = vpop.xlane.xlu0 %342
    %v344 = vmul.f32 %v340, %v331
    %v345 = vmul.f32 %v343, %v331
    %v346 = vadd.f32 %v344, 1e-05
    %v347 = vadd.f32 %v345, 1e-05
    %v348 = vrsqrt.pop %v346
    %v349 = vmul.f32 %v348, %v346
    %v350 = vmul.f32 %v349, %v348
    %v351 = vmul.f32 0.5, %v350
    %v352 = vsub.f32 1.5, %v351
    %v353 = vmul.f32 %v348, %v352
    %vm354 = vweird.f32 %v346
    %vm355 = vweird.f32 %v348
    %vm356 = vmor %vm354, %vm355
    %v357 = vsel %vm356, %v348, %v353
    %v358 = vrsqrt.pop %v347
    %v359 = vmul.f32 %v358, %v347
    %v360 = vmul.f32 %v359, %v358
    %v361 = vmul.f32 0.5, %v360
    %v362 = vsub.f32 1.5, %v361
    %v363 = vmul.f32 %v358, %v362
    %vm364 = vweird.f32 %v347
    %vm365 = vweird.f32 %v358
    %vm366 = vmor %vm364, %vm365
    %v367 = vsel %vm366, %v358, %v363
    %v368 = vmul.f32 %v334, %v357
    %v369 = vmul.f32 %v335, %v367
    %v371 = vperm.slane %v316, 0
    %v373 = vmul.f32 %v368, %v371
    %v374 = vmul.f32 %v369, %v371
    %v376 = vperm.slane %v317, 0
    %v378 = vadd.f32 %v373, %v376
    %v379 = vadd.f32 %v374, %v376
    %v380 = vld [vmem:[%s5] sm:$0xff]
    %v381 = vld [vmem:[%s5 + $0x8] sm:$0xff]
    %v382 = vld [vmem:[%s5 + $0x10] sm:$0xff]
    %v383 = vld [vmem:[%s5 + $0x18] sm:$0xff]
    %v384 = vpack.c.bf16 %v379, %v378
    %v385 = vpack.c.bf16 %v381, %v380
    %v386 = vpack.c.bf16 %v383, %v382
    %v387 = vld [vmem:[#allocation10] sm:$0x1]
    %v389 = vperm.slane %v387, 0
    %v392 = vsel %vm318, %v384, 0
    %394 = vmatpush.bf16.msra.mxu0 0
    %395 = vmatpush.bf16.msra.mxu0 0
    %396 = vmatpush.bf16.msra.mxu0 0
    %397 = vmatpush.bf16.msra.mxu0 0
    %398 = vmatpush.bf16.msra.mxu0 0
    %399 = vmatpush.bf16.msra.mxu0 0
    %400 = vmatpush.bf16.msra.mxu0 %v386
    %401 = vmatpush.bf16.msra.mxu0 %v385
    %402 = vmatmul.bf16.gmra.mxu0 %v392
    %v403 = vpop.f32.mrf.mxu0
    %v404 = vadd.f32 %v389, %v403
    %v405 = vpop.f32.mrf.mxu0
    %v406 = vadd.f32 %v389, %v405
    %407 = vdwg.mxu0
    %410 = vrot.lane.b32.xlu0 %v404, 120
    %v411 = vpop.permute.xlu0 %410
    %412 = vrot.lane.b32.xlu0 %v406, 120
    %v413 = vpop.permute.xlu0 %412
    %416 = vrot.lane.b32.xlu0 %v404, 112
    %v417 = vpop.permute.xlu0 %416
    %418 = vrot.lane.b32.xlu0 %v406, 112
    %v419 = vpop.permute.xlu0 %418
    %422 = vrot.lane.b32.xlu0 %v404, 104
    %v423 = vpop.permute.xlu0 %422
    %424 = vrot.lane.b32.xlu0 %v406, 104
    %v425 = vpop.permute.xlu0 %424
    %v428 = vld [vmem:[%s6] sm:$0xff]
    %v429 = vld [vmem:[%s6 + $0x8] sm:$0xff]
    %v430 = vld [vmem:[%s6 + $0x10] sm:$0xff]
    %v431 = vld [vmem:[%s6 + $0x18] sm:$0xff]
    %v432 = vpack.c.bf16 %v429, %v428
    %v433 = vpack.c.bf16 %v431, %v430
    %v434 = vld [vmem:[#allocation11] sm:$0x1]
    %v436 = vperm.slane %v434, 0
    %438 = vmatpush.bf16.msra.mxu0 0
    %439 = vmatpush.bf16.msra.mxu0 0
    %440 = vmatpush.bf16.msra.mxu0 0
    %441 = vmatpush.bf16.msra.mxu0 0
    %442 = vmatpush.bf16.msra.mxu0 0
    %443 = vmatpush.bf16.msra.mxu0 0
    %444 = vmatpush.bf16.msra.mxu0 %v433
    %445 = vmatpush.bf16.msra.mxu0 %v432
    %446 = vmatmul.bf16.gmra.mxu0 %v392
    %v447 = vpop.f32.mrf.mxu0
    %v448 = vadd.f32 %v436, %v447
    %v449 = vpop.f32.mrf.mxu0
    %v450 = vadd.f32 %v436, %v449
    %451 = vdwg.mxu0
    %454 = vrot.lane.b32.xlu0 %v448, 120
    %v455 = vpop.permute.xlu0 %454
    %456 = vrot.lane.b32.xlu0 %v450, 120
    %v457 = vpop.permute.xlu0 %456
    %460 = vrot.lane.b32.xlu0 %v448, 112
    %v461 = vpop.permute.xlu0 %460
    %462 = vrot.lane.b32.xlu0 %v450, 112
    %v463 = vpop.permute.xlu0 %462
    %466 = vrot.lane.b32.xlu0 %v448, 104
    %v467 = vpop.permute.xlu0 %466
    %468 = vrot.lane.b32.xlu0 %v450, 104
    %v469 = vpop.permute.xlu0 %468
    %v472 = vld [vmem:[%s7] sm:$0xff]
    %v473 = vld [vmem:[%s7 + $0x8] sm:$0xff]
    %v474 = vld [vmem:[%s7 + $0x10] sm:$0xff]
    %v475 = vld [vmem:[%s7 + $0x18] sm:$0xff]
    %v476 = vpack.c.bf16 %v473, %v472
    %v477 = vpack.c.bf16 %v475, %v474
    %v478 = vld [vmem:[#allocation13] sm:$0x1]
    %v480 = vperm.slane %v478, 0
    %482 = vmatpush.bf16.msra.mxu0 0
    %483 = vmatpush.bf16.msra.mxu0 0
    %484 = vmatpush.bf16.msra.mxu0 0
    %485 = vmatpush.bf16.msra.mxu0 0
    %486 = vmatpush.bf16.msra.mxu0 0
    %487 = vmatpush.bf16.msra.mxu0 0
    %488 = vmatpush.bf16.msra.mxu0 %v477
    %489 = vmatpush.bf16.msra.mxu0 %v476
    %490 = vmatmul.bf16.gmra.mxu0 %v392
    %v491 = vpop.f32.mrf.mxu0
    %v492 = vadd.f32 %v480, %v491
    %v493 = vpop.f32.mrf.mxu0
    %v494 = vadd.f32 %v480, %v493
    %495 = vdwg.mxu0
    %498 = vrot.lane.b32.xlu0 %v492, 120
    %v499 = vpop.permute.xlu0 %498
    %500 = vrot.lane.b32.xlu0 %v494, 120
    %v501 = vpop.permute.xlu0 %500
    %504 = vrot.lane.b32.xlu0 %v492, 112
    %v505 = vpop.permute.xlu0 %504
    %506 = vrot.lane.b32.xlu0 %v494, 112
    %v507 = vpop.permute.xlu0 %506
    %510 = vrot.lane.b32.xlu0 %v492, 104
    %v511 = vpop.permute.xlu0 %510
    %512 = vrot.lane.b32.xlu0 %v494, 104
    %v513 = vpop.permute.xlu0 %512
    %v516 = vpack.c.bf16 %v404, %v404
    %v517 = vpack.c.bf16 %v406, %v406
    %v518 = vpack.c.bf16 %v411, %v411
    %v519 = vpack.c.bf16 %v413, %v413
    %v520 = vpack.c.bf16 %v417, %v417
    %v521 = vpack.c.bf16 %v419, %v419
    %v522 = vpack.c.bf16 %v423, %v423
    %v523 = vpack.c.bf16 %v425, %v425
    %v524 = vpack.c.bf16 %v448, %v448
    %v525 = vpack.c.bf16 %v450, %v450
    %v526 = vpack.c.bf16 %v455, %v455
    %v527 = vpack.c.bf16 %v457, %v457
    %v528 = vpack.c.bf16 %v461, %v461
    %v529 = vpack.c.bf16 %v463, %v463
    %v530 = vpack.c.bf16 %v467, %v467
    %v531 = vpack.c.bf16 %v469, %v469
    %vm532 = vcmask 64512
    %v534 = vsel %vm532, %v516, 0
    %v537 = vsel %vm532, %v524, 0
    %539 = vmatpush.bf16.xpose.msra.mxu0 0
    %540 = vmatpush.bf16.xpose.msra.mxu0 0
    %541 = vmatpush.bf16.xpose.msra.mxu0 0
    %542 = vmatpush.bf16.xpose.msra.mxu0 0
    %543 = vmatpush.bf16.xpose.msra.mxu0 0
    %544 = vmatpush.bf16.xpose.msra.mxu0 0
    %545 = vmatpush.bf16.xpose.msra.mxu0 0
    %546 = vmatpush.bf16.xpose.msra.mxu0 %v537
    %547 = vmatmul.bf16.gmra.mxu0 %v534
    %v548 = vpop.f32.mrf.mxu0
    %v549 = vadd.f32 0.0, %v548
    %v550 = vpop.f32.mrf.mxu0
    %551 = vdwg.mxu0
    %v553 = vsel %vm532, %v517, 0
    %v556 = vsel %vm532, %v525, 0
    %558 = vmatpush.bf16.xpose.msra.mxu0 0
    %559 = vmatpush.bf16.xpose.msra.mxu0 0
    %560 = vmatpush.bf16.xpose.msra.mxu0 0
    %561 = vmatpush.bf16.xpose.msra.mxu0 0
    %562 = vmatpush.bf16.xpose.msra.mxu0 0
    %563 = vmatpush.bf16.xpose.msra.mxu0 0
    %564 = vmatpush.bf16.xpose.msra.mxu0 0
    %565 = vmatpush.bf16.xpose.msra.mxu0 %v556
    %566 = vmatmul.bf16.gmra.mxu0 %v553
    %v567 = vpop.f32.mrf.mxu0
    %v568 = vadd.f32 0.0, %v567
    %v569 = vpop.f32.mrf.mxu0
    %570 = vdwg.mxu0
    %v572 = vsel %vm532, %v518, 0
    %v575 = vsel %vm532, %v526, 0
    %577 = vmatpush.bf16.xpose.msra.mxu0 0
    %578 = vmatpush.bf16.xpose.msra.mxu0 0
    %579 = vmatpush.bf16.xpose.msra.mxu0 0
    %580 = vmatpush.bf16.xpose.msra.mxu0 0
    %581 = vmatpush.bf16.xpose.msra.mxu0 0
    %582 = vmatpush.bf16.xpose.msra.mxu0 0
    %583 = vmatpush.bf16.xpose.msra.mxu0 0
    %584 = vmatpush.bf16.xpose.msra.mxu0 %v575
    %585 = vmatmul.bf16.gmra.mxu0 %v572
    %v586 = vpop.f32.mrf.mxu0
    %v587 = vadd.f32 0.0, %v586
    %v588 = vpop.f32.mrf.mxu0
    %589 = vdwg.mxu0
    %v591 = vsel %vm532, %v519, 0
    %v594 = vsel %vm532, %v527, 0
    %596 = vmatpush.bf16.xpose.msra.mxu0 0
    %597 = vmatpush.bf16.xpose.msra.mxu0 0
    %598 = vmatpush.bf16.xpose.msra.mxu0 0
    %599 = vmatpush.bf16.xpose.msra.mxu0 0
    %600 = vmatpush.bf16.xpose.msra.mxu0 0
    %601 = vmatpush.bf16.xpose.msra.mxu0 0
    %602 = vmatpush.bf16.xpose.msra.mxu0 0
    %603 = vmatpush.bf16.xpose.msra.mxu0 %v594
    %604 = vmatmul.bf16.gmra.mxu0 %v591
    %v605 = vpop.f32.mrf.mxu0
    %v606 = vadd.f32 0.0, %v605
    %v607 = vpop.f32.mrf.mxu0
    %608 = vdwg.mxu0
    %v610 = vsel %vm532, %v520, 0
    %v613 = vsel %vm532, %v528, 0
    %615 = vmatpush.bf16.xpose.msra.mxu0 0
    %616 = vmatpush.bf16.xpose.msra.mxu0 0
    %617 = vmatpush.bf16.xpose.msra.mxu0 0
    %618 = vmatpush.bf16.xpose.msra.mxu0 0
    %619 = vmatpush.bf16.xpose.msra.mxu0 0
    %620 = vmatpush.bf16.xpose.msra.mxu0 0
    %621 = vmatpush.bf16.xpose.msra.mxu0 0
    %622 = vmatpush.bf16.xpose.msra.mxu0 %v613
    %623 = vmatmul.bf16.gmra.mxu0 %v610
    %v624 = vpop.f32.mrf.mxu0
    %v625 = vadd.f32 0.0, %v624
    %v626 = vpop.f32.mrf.mxu0
    %627 = vdwg.mxu0
    %v629 = vsel %vm532, %v521, 0
    %v632 = vsel %vm532, %v529, 0
    %634 = vmatpush.bf16.xpose.msra.mxu0 0
    %635 = vmatpush.bf16.xpose.msra.mxu0 0
    %636 = vmatpush.bf16.xpose.msra.mxu0 0
    %637 = vmatpush.bf16.xpose.msra.mxu0 0
    %638 = vmatpush.bf16.xpose.msra.mxu0 0
    %639 = vmatpush.bf16.xpose.msra.mxu0 0
    %640 = vmatpush.bf16.xpose.msra.mxu0 0
    %641 = vmatpush.bf16.xpose.msra.mxu0 %v632
    %642 = vmatmul.bf16.gmra.mxu0 %v629
    %v643 = vpop.f32.mrf.mxu0
    %v644 = vadd.f32 0.0, %v643
    %v645 = vpop.f32.mrf.mxu0
    %646 = vdwg.mxu0
    %v648 = vsel %vm532, %v522, 0
    %v651 = vsel %vm532, %v530, 0
    %653 = vmatpush.bf16.xpose.msra.mxu0 0
    %654 = vmatpush.bf16.xpose.msra.mxu0 0
    %655 = vmatpush.bf16.xpose.msra.mxu0 0
    %656 = vmatpush.bf16.xpose.msra.mxu0 0
    %657 = vmatpush.bf16.xpose.msra.mxu0 0
    %658 = vmatpush.bf16.xpose.msra.mxu0 0
    %659 = vmatpush.bf16.xpose.msra.mxu0 0
    %660 = vmatpush.bf16.xpose.msra.mxu0 %v651
    %661 = vmatmul.bf16.gmra.mxu0 %v648
    %v662 = vpop.f32.mrf.mxu0
    %v663 = vadd.f32 0.0, %v662
    %v664 = vpop.f32.mrf.mxu0
    %665 = vdwg.mxu0
    %v667 = vsel %vm532, %v523, 0
    %v670 = vsel %vm532, %v531, 0
    %672 = vmatpush.bf16.xpose.msra.mxu0 0
    %673 = vmatpush.bf16.xpose.msra.mxu0 0
    %674 = vmatpush.bf16.xpose.msra.mxu0 0
    %675 = vmatpush.bf16.xpose.msra.mxu0 0
    %676 = vmatpush.bf16.xpose.msra.mxu0 0
    %677 = vmatpush.bf16.xpose.msra.mxu0 0
    %678 = vmatpush.bf16.xpose.msra.mxu0 0
    %679 = vmatpush.bf16.xpose.msra.mxu0 %v670
    %680 = vmatmul.bf16.gmra.mxu0 %v667
    %v681 = vpop.f32.mrf.mxu0
    %v682 = vadd.f32 0.0, %v681
    %v683 = vpop.f32.mrf.mxu0
    %684 = vdwg.mxu0
    %v685 = vmul.f32 %v549, 0.35355338
    %v686 = vmul.f32 %v568, 0.35355338
    %v687 = vmul.f32 %v587, 0.35355338
    %v688 = vmul.f32 %v606, 0.35355338
    %v689 = vmul.f32 %v625, 0.35355338
    %v690 = vmul.f32 %v644, 0.35355338
    %v691 = vmul.f32 %v663, 0.35355338
    %v692 = vmul.f32 %v682, 0.35355338
    %v693 = vsel %vm314, 1, 0
    %v694 = vsel %vm315, 1, 0
    %v695 = vperm.slane %v693, 0
    %v696 = vperm.slane %v694, 0
    %vm697 = vcmp.eq.s32.totalorder %v695, 1
    %vm698 = vcmp.eq.s32.totalorder %v696, 1
    %v699 = vsel %vm697, %v685, -1e+09
    %v700 = vsel %vm698, %v686, -1e+09
    %v701 = vsel %vm697, %v687, -1e+09
    %v702 = vsel %vm698, %v688, -1e+09
    %v703 = vsel %vm697, %v689, -1e+09
    %v704 = vsel %vm698, %v690, -1e+09
    %v705 = vsel %vm697, %v691, -1e+09
    %v706 = vsel %vm698, %v692, -1e+09
    %v707 = vsel %vm532, %v699, -inf
    %708 = vmax.xlane.f32.xlu0 %v707
    %v709 = vpop.xlane.xlu0 %708
    %v710 = vsel %vm532, %v700, -inf
    %711 = vmax.xlane.f32.xlu0 %v710
    %v712 = vpop.xlane.xlu0 %711
    %v713 = vsel %vm532, %v701, -inf
    %714 = vmax.xlane.f32.xlu0 %v713
    %v715 = vpop.xlane.xlu0 %714
    %v716 = vsel %vm532, %v702, -inf
    %717 = vmax.xlane.f32.xlu0 %v716
    %v718 = vpop.xlane.xlu0 %717
    %v719 = vsel %vm532, %v703, -inf
    %720 = vmax.xlane.f32.xlu0 %v719
    %v721 = vpop.xlane.xlu0 %720
    %v722 = vsel %vm532, %v704, -inf
    %723 = vmax.xlane.f32.xlu0 %v722
    %v724 = vpop.xlane.xlu0 %723
    %v725 = vsel %vm532, %v705, -inf
    %726 = vmax.xlane.f32.xlu0 %v725
    %v727 = vpop.xlane.xlu0 %726
    %v728 = vsel %vm532, %v706, -inf
    %729 = vmax.xlane.f32.xlu0 %v728
    %v730 = vpop.xlane.xlu0 %729
    %v731 = vsub.f32 %v699, %v709
    %v732 = vsub.f32 %v700, %v712
    %v733 = vsub.f32 %v701, %v715
    %v734 = vsub.f32 %v702, %v718
    %v735 = vsub.f32 %v703, %v721
    %v736 = vsub.f32 %v704, %v724
    %v737 = vsub.f32 %v705, %v727
    %v738 = vsub.f32 %v706, %v730
    %v739 = vmul.f32 %v731, 1.442695
    %v740 = vpow.pop %v739
    %v741 = vmul.f32 %v732, 1.442695
    %v742 = vpow.pop %v741
    %v743 = vmul.f32 %v733, 1.442695
    %v744 = vpow.pop %v743
    %v745 = vmul.f32 %v734, 1.442695
    %v746 = vpow.pop %v745
    %v747 = vmul.f32 %v735, 1.442695
    %v748 = vpow.pop %v747
    %v749 = vmul.f32 %v736, 1.442695
    %v750 = vpow.pop %v749
    %v751 = vmul.f32 %v737, 1.442695
    %v752 = vpow.pop %v751
    %v753 = vmul.f32 %v738, 1.442695
    %v754 = vpow.pop %v753
    %v755 = vsel %vm532, %v740, 0.0
    %756 = vadd.xlane.f32.xlu0 %v755
    %v757 = vpop.xlane.xlu0 %756
    %v758 = vsel %vm532, %v742, 0.0
    %759 = vadd.xlane.f32.xlu0 %v758
    %v760 = vpop.xlane.xlu0 %759
    %v761 = vsel %vm532, %v744, 0.0
    %762 = vadd.xlane.f32.xlu0 %v761
    %v763 = vpop.xlane.xlu0 %762
    %v764 = vsel %vm532, %v746, 0.0
    %765 = vadd.xlane.f32.xlu0 %v764
    %v766 = vpop.xlane.xlu0 %765
    %v767 = vsel %vm532, %v748, 0.0
    %768 = vadd.xlane.f32.xlu0 %v767
    %v769 = vpop.xlane.xlu0 %768
    %v770 = vsel %vm532, %v750, 0.0
    %771 = vadd.xlane.f32.xlu0 %v770
    %v772 = vpop.xlane.xlu0 %771
    %v773 = vsel %vm532, %v752, 0.0
    %774 = vadd.xlane.f32.xlu0 %v773
    %v775 = vpop.xlane.xlu0 %774
    %v776 = vsel %vm532, %v754, 0.0
    %777 = vadd.xlane.f32.xlu0 %v776
    %v778 = vpop.xlane.xlu0 %777
    %v779 = vrcp.pop %v757
    %v780 = vrcp.pop %v760
    %v781 = vrcp.pop %v763
    %v782 = vrcp.pop %v766
    %v783 = vrcp.pop %v769
    %v784 = vrcp.pop %v772
    %v785 = vrcp.pop %v775
    %v786 = vrcp.pop %v778
    %v787 = vmul.f32 %v740, %v779
    %v788 = vmul.f32 %v742, %v780
    %v789 = vmul.f32 %v744, %v781
    %v790 = vmul.f32 %v746, %v782
    %v791 = vmul.f32 %v748, %v783
    %v792 = vmul.f32 %v750, %v784
    %v793 = vmul.f32 %v752, %v785
    %v794 = vmul.f32 %v754, %v786
    %v795 = vpack.c.bf16 %v787, %v787
    %v796 = vpack.c.bf16 %v788, %v788
    %v797 = vpack.c.bf16 %v789, %v789
    %v798 = vpack.c.bf16 %v790, %v790
    %v799 = vpack.c.bf16 %v791, %v791
    %v800 = vpack.c.bf16 %v792, %v792
    %v801 = vpack.c.bf16 %v793, %v793
    %v802 = vpack.c.bf16 %v794, %v794
    %v803 = vpack.c.bf16 %v492, %v492
    %v804 = vpack.c.bf16 %v494, %v494
    %v805 = vpack.c.bf16 %v499, %v499
    %v806 = vpack.c.bf16 %v501, %v501
    %v807 = vpack.c.bf16 %v505, %v505
    %v808 = vpack.c.bf16 %v507, %v507
    %v809 = vpack.c.bf16 %v511, %v511
    %v810 = vpack.c.bf16 %v513, %v513
    %v812 = vsel %vm532, %v795, 0
    %vm814 = vcmask 1043456
    %v816 = vsel %vm814, %v803, 0
    %818 = vmatpush.bf16.msra.mxu0 0
    %819 = vmatpush.bf16.msra.mxu0 0
    %820 = vmatpush.bf16.msra.mxu0 0
    %821 = vmatpush.bf16.msra.mxu0 0
    %822 = vmatpush.bf16.msra.mxu0 0
    %823 = vmatpush.bf16.msra.mxu0 0
    %824 = vmatpush.bf16.msra.mxu0 0
    %825 = vmatpush.bf16.msra.mxu0 %v816
    %826 = vmatmul.bf16.gmra.mxu0 %v812
    %v827 = vpop.f32.mrf.mxu0
    %v828 = vadd.f32 0.0, %v827
    %v829 = vpop.f32.mrf.mxu0
    %830 = vdwg.mxu0
    %v832 = vsel %vm532, %v796, 0
    %v835 = vsel %vm814, %v804, 0
    %837 = vmatpush.bf16.msra.mxu0 0
    %838 = vmatpush.bf16.msra.mxu0 0
    %839 = vmatpush.bf16.msra.mxu0 0
    %840 = vmatpush.bf16.msra.mxu0 0
    %841 = vmatpush.bf16.msra.mxu0 0
    %842 = vmatpush.bf16.msra.mxu0 0
    %843 = vmatpush.bf16.msra.mxu0 0
    %844 = vmatpush.bf16.msra.mxu0 %v835
    %845 = vmatmul.bf16.gmra.mxu0 %v832
    %v846 = vpop.f32.mrf.mxu0
    %v847 = vadd.f32 0.0, %v846
    %v848 = vpop.f32.mrf.mxu0
    %849 = vdwg.mxu0
    %v851 = vsel %vm532, %v797, 0
    %v854 = vsel %vm814, %v805, 0
    %856 = vmatpush.bf16.msra.mxu0 0
    %857 = vmatpush.bf16.msra.mxu0 0
    %858 = vmatpush.bf16.msra.mxu0 0
    %859 = vmatpush.bf16.msra.mxu0 0
    %860 = vmatpush.bf16.msra.mxu0 0
    %861 = vmatpush.bf16.msra.mxu0 0
    %862 = vmatpush.bf16.msra.mxu0 0
    %863 = vmatpush.bf16.msra.mxu0 %v854
    %864 = vmatmul.bf16.gmra.mxu0 %v851
    %v865 = vpop.f32.mrf.mxu0
    %v866 = vadd.f32 0.0, %v865
    %v867 = vpop.f32.mrf.mxu0
    %868 = vdwg.mxu0
    %v870 = vsel %vm532, %v798, 0
    %v873 = vsel %vm814, %v806, 0
    %875 = vmatpush.bf16.msra.mxu0 0
    %876 = vmatpush.bf16.msra.mxu0 0
    %877 = vmatpush.bf16.msra.mxu0 0
    %878 = vmatpush.bf16.msra.mxu0 0
    %879 = vmatpush.bf16.msra.mxu0 0
    %880 = vmatpush.bf16.msra.mxu0 0
    %881 = vmatpush.bf16.msra.mxu0 0
    %882 = vmatpush.bf16.msra.mxu0 %v873
    %883 = vmatmul.bf16.gmra.mxu0 %v870
    %v884 = vpop.f32.mrf.mxu0
    %v885 = vadd.f32 0.0, %v884
    %v886 = vpop.f32.mrf.mxu0
    %887 = vdwg.mxu0
    %v889 = vsel %vm532, %v799, 0
    %v892 = vsel %vm814, %v807, 0
    %894 = vmatpush.bf16.msra.mxu0 0
    %895 = vmatpush.bf16.msra.mxu0 0
    %896 = vmatpush.bf16.msra.mxu0 0
    %897 = vmatpush.bf16.msra.mxu0 0
    %898 = vmatpush.bf16.msra.mxu0 0
    %899 = vmatpush.bf16.msra.mxu0 0
    %900 = vmatpush.bf16.msra.mxu0 0
    %901 = vmatpush.bf16.msra.mxu0 %v892
    %902 = vmatmul.bf16.gmra.mxu0 %v889
    %v903 = vpop.f32.mrf.mxu0
    %v904 = vadd.f32 0.0, %v903
    %v905 = vpop.f32.mrf.mxu0
    %906 = vdwg.mxu0
    %v908 = vsel %vm532, %v800, 0
    %v911 = vsel %vm814, %v808, 0
    %913 = vmatpush.bf16.msra.mxu0 0
    %914 = vmatpush.bf16.msra.mxu0 0
    %915 = vmatpush.bf16.msra.mxu0 0
    %916 = vmatpush.bf16.msra.mxu0 0
    %917 = vmatpush.bf16.msra.mxu0 0
    %918 = vmatpush.bf16.msra.mxu0 0
    %919 = vmatpush.bf16.msra.mxu0 0
    %920 = vmatpush.bf16.msra.mxu0 %v911
    %921 = vmatmul.bf16.gmra.mxu0 %v908
    %v922 = vpop.f32.mrf.mxu0
    %v923 = vadd.f32 0.0, %v922
    %v924 = vpop.f32.mrf.mxu0
    %925 = vdwg.mxu0
    %v927 = vsel %vm532, %v801, 0
    %v930 = vsel %vm814, %v809, 0
    %932 = vmatpush.bf16.msra.mxu0 0
    %933 = vmatpush.bf16.msra.mxu0 0
    %934 = vmatpush.bf16.msra.mxu0 0
    %935 = vmatpush.bf16.msra.mxu0 0
    %936 = vmatpush.bf16.msra.mxu0 0
    %937 = vmatpush.bf16.msra.mxu0 0
    %938 = vmatpush.bf16.msra.mxu0 0
    %939 = vmatpush.bf16.msra.mxu0 %v930
    %940 = vmatmul.bf16.gmra.mxu0 %v927
    %v941 = vpop.f32.mrf.mxu0
    %v942 = vadd.f32 0.0, %v941
    %v943 = vpop.f32.mrf.mxu0
    %944 = vdwg.mxu0
    %v946 = vsel %vm532, %v802, 0
    %v949 = vsel %vm814, %v810, 0
    %951 = vmatpush.bf16.msra.mxu0 0
    %952 = vmatpush.bf16.msra.mxu0 0
    %953 = vmatpush.bf16.msra.mxu0 0
    %954 = vmatpush.bf16.msra.mxu0 0
    %955 = vmatpush.bf16.msra.mxu0 0
    %956 = vmatpush.bf16.msra.mxu0 0
    %957 = vmatpush.bf16.msra.mxu0 0
    %958 = vmatpush.bf16.msra.mxu0 %v949
    %959 = vmatmul.bf16.gmra.mxu0 %v946
    %v960 = vpop.f32.mrf.mxu0
    %v961 = vadd.f32 0.0, %v960
    %v962 = vpop.f32.mrf.mxu0
    %963 = vdwg.mxu0
    %966 = vrot.lane.b32.xlu0 %v866, 8
    %v967 = vpop.permute.xlu0 %966
    %968 = vrot.lane.b32.xlu0 %v885, 8
    %v969 = vpop.permute.xlu0 %968
    %974 = vrot.lane.b32.xlu0 %v904, 16
    %v975 = vpop.permute.xlu0 %974
    %976 = vrot.lane.b32.xlu0 %v923, 16
    %v977 = vpop.permute.xlu0 %976
    %982 = vrot.lane.b32.xlu0 %v942, 24
    %v983 = vpop.permute.xlu0 %982
    %984 = vrot.lane.b32.xlu0 %v961, 24
    %v985 = vpop.permute.xlu0 %984
    %v988 = vsel %vm532, %v828, %v967
    %v989 = vsel %vm532, %v847, %v969
    %vm990 = vcmask 130048
    %v991 = vsel %vm990, %v988, %v975
    %v992 = vsel %vm990, %v989, %v977
    %vm993 = vcmask 195584
    %v994 = vsel %vm993, %v991, %v983
    %v995 = vsel %vm993, %v992, %v985
    %v996 = vld [vmem:[#allocation14] sm:$0xff]
    %v997 = vld [vmem:[#allocation14 + $0x8] sm:$0xff]
    %v998 = vld [vmem:[#allocation14 + $0x10] sm:$0xff]
    %v999 = vld [vmem:[#allocation14 + $0x18] sm:$0xff]
    %v1000 = vpack.c.bf16 %v995, %v994
    %v1001 = vpack.c.bf16 %v997, %v996
    %v1002 = vpack.c.bf16 %v999, %v998
    %v1004 = vsel %vm318, %v1000, 0
    %1006 = vmatpush.bf16.msra.mxu0 0
    %1007 = vmatpush.bf16.msra.mxu0 0
    %1008 = vmatpush.bf16.msra.mxu0 0
    %1009 = vmatpush.bf16.msra.mxu0 0
    %1010 = vmatpush.bf16.msra.mxu0 0
    %1011 = vmatpush.bf16.msra.mxu0 0
    %1012 = vmatpush.bf16.msra.mxu0 %v1002
    %1013 = vmatpush.bf16.msra.mxu0 %v1001
    %1014 = vmatmul.bf16.gmra.mxu0 %v1004
    %v1015 = vpop.f32.mrf.mxu0
    %v1016 = vadd.f32 0.0, %v1015
    %v1017 = vpop.f32.mrf.mxu0
    %v1018 = vadd.f32 0.0, %v1017
    %1019 = vdwg.mxu0
    %v1020 = vadd.f32 %v310, %v1016
    %v1021 = vadd.f32 %v311, %v1018
    %v1022 = vld [vmem:[#allocation16] sm:$0x1]
    %v1024 = vperm.slane %v1022, 0
    %v1026 = vadd.f32 %v1020, %v1024
    %v1027 = vadd.f32 %v1021, %v1024
    %v1028 = vld [vmem:[#allocation17] sm:$0x1]
    %v1029 = vld [vmem:[#allocation19] sm:$0x1]
    %v1030 = vsel %vm318, %v1026, 0.0
    %1031 = vadd.xlane.f32.xlu0 %v1030
    %v1032 = vpop.xlane.xlu0 %1031
    %v1033 = vsel %vm318, %v1027, 0.0
    %1034 = vadd.xlane.f32.xlu0 %v1033
    %v1035 = vpop.xlane.xlu0 %1034
    %v1036 = vmul.f32 %v1032, %v331
    %v1037 = vmul.f32 %v1035, %v331
    %v1038 = vsub.f32 %v1026, %v1036
    %v1039 = vsub.f32 %v1027, %v1037
    %v1040 = vmul.f32 %v1038, %v1038
    %v1041 = vmul.f32 %v1039, %v1039
    %v1042 = vsel %vm318, %v1040, 0.0
    %1043 = vadd.xlane.f32.xlu0 %v1042
    %v1044 = vpop.xlane.xlu0 %1043
    %v1045 = vsel %vm318, %v1041, 0.0
    %1046 = vadd.xlane.f32.xlu0 %v1045
    %v1047 = vpop.xlane.xlu0 %1046
    %v1048 = vmul.f32 %v1044, %v331
    %v1049 = vmul.f32 %v1047, %v331
    %v1050 = vadd.f32 %v1048, 1e-05
    %v1051 = vadd.f32 %v1049, 1e-05
    %v1052 = vrsqrt.pop %v1050
    %v1053 = vmul.f32 %v1052, %v1050
    %v1054 = vmul.f32 %v1053, %v1052
    %v1055 = vmul.f32 0.5, %v1054
    %v1056 = vsub.f32 1.5, %v1055
    %v1057 = vmul.f32 %v1052, %v1056
    %vm1058 = vweird.f32 %v1050
    %vm1059 = vweird.f32 %v1052
    %vm1060 = vmor %vm1058, %vm1059
    %v1061 = vsel %vm1060, %v1052, %v1057
    %v1062 = vrsqrt.pop %v1051
    %v1063 = vmul.f32 %v1062, %v1051
    %v1064 = vmul.f32 %v1063, %v1062
    %v1065 = vmul.f32 0.5, %v1064
    %v1066 = vsub.f32 1.5, %v1065
    %v1067 = vmul.f32 %v1062, %v1066
    %vm1068 = vweird.f32 %v1051
    %vm1069 = vweird.f32 %v1062
    %vm1070 = vmor %vm1068, %vm1069
    %v1071 = vsel %vm1070, %v1062, %v1067
    %v1072 = vmul.f32 %v1038, %v1061
    %v1073 = vmul.f32 %v1039, %v1071
    %v1075 = vperm.slane %v1028, 0
    %v1077 = vmul.f32 %v1072, %v1075
    %v1078 = vmul.f32 %v1073, %v1075
    %v1080 = vperm.slane %v1029, 0
    %v1082 = vadd.f32 %v1077, %v1080
    %v1083 = vadd.f32 %v1078, %v1080
    %v1084 = vld [vmem:[#allocation20] sm:$0xff]
    %v1085 = vld [vmem:[#allocation20 + $0x8] sm:$0xff]
    %v1086 = vld [vmem:[#allocation20 + $0x10] sm:$0xff]
    %v1087 = vld [vmem:[#allocation20 + $0x18] sm:$0xff]
    %v1088 = vpack.c.bf16 %v1083, %v1082
    %v1089 = vpack.c.bf16 %v1085, %v1084
    %v1090 = vpack.c.bf16 %v1087, %v1086
    %v1091 = vld [vmem:[#allocation22] sm:$0x1]
    %v1093 = vperm.slane %v1091, 0
    %v1096 = vsel %vm318, %v1088, 0
    %1098 = vmatpush.bf16.msra.mxu0 0
    %1099 = vmatpush.bf16.msra.mxu0 0
    %1100 = vmatpush.bf16.msra.mxu0 0
    %1101 = vmatpush.bf16.msra.mxu0 0
    %1102 = vmatpush.bf16.msra.mxu0 0
    %1103 = vmatpush.bf16.msra.mxu0 0
    %1104 = vmatpush.bf16.msra.mxu0 %v1090
    %1105 = vmatpush.bf16.msra.mxu0 %v1089
    %1106 = vmatmul.bf16.gmra.mxu0 %v1096
    %v1107 = vpop.f32.mrf.mxu0
    %v1108 = vadd.f32 %v1093, %v1107
    %v1109 = vpop.f32.mrf.mxu0
    %v1110 = vadd.f32 %v1093, %v1109
    %1111 = vdwg.mxu0
    %v1112 = vmul.f32 %v1108, %v1108
    %v1113 = vmul.f32 %v1110, %v1110
    %v1114 = vmul.f32 %v1108, %v1112
    %v1115 = vmul.f32 %v1110, %v1113
    %v1116 = vmul.f32 %v1114, 0.044715
    %v1117 = vmul.f32 %v1115, 0.044715
    %v1118 = vadd.f32 %v1108, %v1116
    %v1119 = vadd.f32 %v1110, %v1117
    %v1120 = vmul.f32 %v1118, 0.7978846
    %v1121 = vmul.f32 %v1119, 0.7978846
    %v1122 = vtanh.pop %v1120
    %v1123 = vtanh.pop %v1121
    %v1124 = vadd.f32 %v1122, 1.0
    %v1125 = vadd.f32 %v1123, 1.0
    %v1126 = vmul.f32 %v1124, 0.5
    %v1127 = vmul.f32 %v1125, 0.5
    %v1128 = vmul.f32 %v1108, %v1126
    %v1129 = vmul.f32 %v1110, %v1127
    %v1130 = vld [vmem:[%s17] sm:$0xff]
    %v1131 = vld [vmem:[%s17 + $0x8] sm:$0xff]
    %v1132 = vld [vmem:[%s17 + $0x10] sm:$0xff]
    %v1133 = vld [vmem:[%s17 + $0x18] sm:$0xff]
    %v1134 = vld [vmem:[%s17 + $0x20] sm:$0xff]
    %v1135 = vld [vmem:[%s17 + $0x28] sm:$0xff]
    %v1136 = vld [vmem:[%s17 + $0x30] sm:$0xff]
    %v1137 = vld [vmem:[%s17 + $0x38] sm:$0xff]
    %v1138 = vpack.c.bf16 %v1129, %v1128
    %v1139 = vpack.c.bf16 %v1131, %v1130
    %v1140 = vpack.c.bf16 %v1133, %v1132
    %v1141 = vpack.c.bf16 %v1135, %v1134
    %v1142 = vpack.c.bf16 %v1137, %v1136
    %vm1143 = vcmask 523264
    %v1145 = vsel %vm1143, %v1138, 0
    %1147 = vmatpush.bf16.msra.mxu0 0
    %1148 = vmatpush.bf16.msra.mxu0 0
    %1149 = vmatpush.bf16.msra.mxu0 0
    %1150 = vmatpush.bf16.msra.mxu0 0
    %1151 = vmatpush.bf16.msra.mxu0 %v1142
    %1152 = vmatpush.bf16.msra.mxu0 %v1141
    %1153 = vmatpush.bf16.msra.mxu0 %v1140
    %1154 = vmatpush.bf16.msra.mxu0 %v1139
    %1155 = vmatmul.bf16.gmra.mxu0 %v1145
    %v1156 = vpop.f32.mrf.mxu0
    %v1157 = vadd.f32 0.0, %v1156
    %v1158 = vpop.f32.mrf.mxu0
    %v1159 = vadd.f32 0.0, %v1158
    %1160 = vdwg.mxu0
    %v1161 = vadd.f32 %v1026, %v1157
    %v1162 = vadd.f32 %v1027, %v1159
    %v1163 = vld [vmem:[#allocation23] sm:$0x1]
    %v1165 = vperm.slane %v1163, 0
    %v1167 = vadd.f32 %v1161, %v1165
    %v1168 = vadd.f32 %v1162, %v1165
    %s1169 = scalar_lea.vmem [#allocation7], 1
    %v1170 = vld [vmem:[%s1169] sm:$0x1]
    %s1171 = scalar_lea.vmem [#allocation8], 1
    %v1172 = vld [vmem:[%s1171] sm:$0x1]
    %v1173 = vsel %vm318, %v1167, 0.0
    %1174 = vadd.xlane.f32.xlu0 %v1173
    %v1175 = vpop.xlane.xlu0 %1174
    %v1176 = vsel %vm318, %v1168, 0.0
    %1177 = vadd.xlane.f32.xlu0 %v1176
    %v1178 = vpop.xlane.xlu0 %1177
    %v1179 = vmul.f32 %v1175, %v331
    %v1180 = vmul.f32 %v1178, %v331
    %v1181 = vsub.f32 %v1167, %v1179
    %v1182 = vsub.f32 %v1168, %v1180
    %v1183 = vmul.f32 %v1181, %v1181
    %v1184 = vmul.f32 %v1182, %v1182
    %v1185 = vsel %vm318, %v1183, 0.0
    %1186 = vadd.xlane.f32.xlu0 %v1185
    %v1187 = vpop.xlane.xlu0 %1186
    %v1188 = vsel %vm318, %v1184, 0.0
    %1189 = vadd.xlane.f32.xlu0 %v1188
    %v1190 = vpop.xlane.xlu0 %1189
    %v1191 = vmul.f32 %v1187, %v331
    %v1192 = vmul.f32 %v1190, %v331
    %v1193 = vadd.f32 %v1191, 1e-05
    %v1194 = vadd.f32 %v1192, 1e-05
    %v1195 = vrsqrt.pop %v1193
    %v1196 = vmul.f32 %v1195, %v1193
    %v1197 = vmul.f32 %v1196, %v1195
    %v1198 = vmul.f32 0.5, %v1197
    %v1199 = vsub.f32 1.5, %v1198
    %v1200 = vmul.f32 %v1195, %v1199
    %vm1201 = vweird.f32 %v1193
    %vm1202 = vweird.f32 %v1195
    %vm1203 = vmor %vm1201, %vm1202
    %v1204 = vsel %vm1203, %v1195, %v1200
    %v1205 = vrsqrt.pop %v1194
    %v1206 = vmul.f32 %v1205, %v1194
    %v1207 = vmul.f32 %v1206, %v1205
    %v1208 = vmul.f32 0.5, %v1207
    %v1209 = vsub.f32 1.5, %v1208
    %v1210 = vmul.f32 %v1205, %v1209
    %vm1211 = vweird.f32 %v1194
    %vm1212 = vweird.f32 %v1205
    %vm1213 = vmor %vm1211, %vm1212
    %v1214 = vsel %vm1213, %v1205, %v1210
    %v1215 = vmul.f32 %v1181, %v1204
    %v1216 = vmul.f32 %v1182, %v1214
    %v1218 = vperm.slane %v1170, 0
    %v1220 = vmul.f32 %v1215, %v1218
    %v1221 = vmul.f32 %v1216, %v1218
    %v1223 = vperm.slane %v1172, 0
    %v1225 = vadd.f32 %v1220, %v1223
    %v1226 = vadd.f32 %v1221, %v1223
    %s1227 = scalar_lea.vmem %s5, 32
    %v1228 = vld [vmem:[%s1227] sm:$0xff]
    %v1229 = vld [vmem:[%s1227 + $0x8] sm:$0xff]
    %v1230 = vld [vmem:[%s1227 + $0x10] sm:$0xff]
    %v1231 = vld [vmem:[%s1227 + $0x18] sm:$0xff]
    %v1232 = vpack.c.bf16 %v1226, %v1225
    %v1233 = vpack.c.bf16 %v1229, %v1228
    %v1234 = vpack.c.bf16 %v1231, %v1230
    %s1235 = scalar_lea.vmem [#allocation10], 1
    %v1236 = vld [vmem:[%s1235] sm:$0x1]
    %v1238 = vperm.slane %v1236, 0
    %v1241 = vsel %vm318, %v1232, 0
    %1243 = vmatpush.bf16.msra.mxu0 0
    %1244 = vmatpush.bf16.msra.mxu0 0
    %1245 = vmatpush.bf16.msra.mxu0 0
    %1246 = vmatpush.bf16.msra.mxu0 0
    %1247 = vmatpush.bf16.msra.mxu0 0
    %1248 = vmatpush.bf16.msra.mxu0 0
    %1249 = vmatpush.bf16.msra.mxu0 %v1234
    %1250 = vmatpush.bf16.msra.mxu0 %v1233
    %1251 = vmatmul.bf16.gmra.mxu0 %v1241
    %v1252 = vpop.f32.mrf.mxu0
    %v1253 = vadd.f32 %v1238, %v1252
    %v1254 = vpop.f32.mrf.mxu0
    %v1255 = vadd.f32 %v1238, %v1254
    %1256 = vdwg.mxu0
    %1259 = vrot.lane.b32.xlu0 %v1253, 120
    %v1260 = vpop.permute.xlu0 %1259
    %1261 = vrot.lane.b32.xlu0 %v1255, 120
    %v1262 = vpop.permute.xlu0 %1261
    %1265 = vrot.lane.b32.xlu0 %v1253, 112
    %v1266 = vpop.permute.xlu0 %1265
    %1267 = vrot.lane.b32.xlu0 %v1255, 112
    %v1268 = vpop.permute.xlu0 %1267
    %1271 = vrot.lane.b32.xlu0 %v1253, 104
    %v1272 = vpop.permute.xlu0 %1271
    %1273 = vrot.lane.b32.xlu0 %v1255, 104
    %v1274 = vpop.permute.xlu0 %1273
    %s1277 = scalar_lea.vmem %s6, 32
    %v1278 = vld [vmem:[%s1277] sm:$0xff]
    %v1279 = vld [vmem:[%s1277 + $0x8] sm:$0xff]
    %v1280 = vld [vmem:[%s1277 + $0x10] sm:$0xff]
    %v1281 = vld [vmem:[%s1277 + $0x18] sm:$0xff]
    %v1282 = vpack.c.bf16 %v1279, %v1278
    %v1283 = vpack.c.bf16 %v1281, %v1280
    %s1284 = scalar_lea.vmem [#allocation11], 1
    %v1285 = vld [vmem:[%s1284] sm:$0x1]
    %v1287 = vperm.slane %v1285, 0
    %1289 = vmatpush.bf16.msra.mxu0 0
    %1290 = vmatpush.bf16.msra.mxu0 0
    %1291 = vmatpush.bf16.msra.mxu0 0
    %1292 = vmatpush.bf16.msra.mxu0 0
    %1293 = vmatpush.bf16.msra.mxu0 0
    %1294 = vmatpush.bf16.msra.mxu0 0
    %1295 = vmatpush.bf16.msra.mxu0 %v1283
    %1296 = vmatpush.bf16.msra.mxu0 %v1282
    %1297 = vmatmul.bf16.gmra.mxu0 %v1241
    %v1298 = vpop.f32.mrf.mxu0
    %v1299 = vadd.f32 %v1287, %v1298
    %v1300 = vpop.f32.mrf.mxu0
    %v1301 = vadd.f32 %v1287, %v1300
    %1302 = vdwg.mxu0
    %1305 = vrot.lane.b32.xlu0 %v1299, 120
    %v1306 = vpop.permute.xlu0 %1305
    %1307 = vrot.lane.b32.xlu0 %v1301, 120
    %v1308 = vpop.permute.xlu0 %1307
    %1311 = vrot.lane.b32.xlu0 %v1299, 112
    %v1312 = vpop.permute.xlu0 %1311
    %1313 = vrot.lane.b32.xlu0 %v1301, 112
    %v1314 = vpop.permute.xlu0 %1313
    %1317 = vrot.lane.b32.xlu0 %v1299, 104
    %v1318 = vpop.permute.xlu0 %1317
    %1319 = vrot.lane.b32.xlu0 %v1301, 104
    %v1320 = vpop.permute.xlu0 %1319
    %s1323 = scalar_lea.vmem %s7, 32
    %v1324 = vld [vmem:[%s1323] sm:$0xff]
    %v1325 = vld [vmem:[%s1323 + $0x8] sm:$0xff]
    %v1326 = vld [vmem:[%s1323 + $0x10] sm:$0xff]
    %v1327 = vld [vmem:[%s1323 + $0x18] sm:$0xff]
    %v1328 = vpack.c.bf16 %v1325, %v1324
    %v1329 = vpack.c.bf16 %v1327, %v1326
    %s1330 = scalar_lea.vmem [#allocation13], 1
    %v1331 = vld [vmem:[%s1330] sm:$0x1]
    %v1333 = vperm.slane %v1331, 0
    %1335 = vmatpush.bf16.msra.mxu0 0
    %1336 = vmatpush.bf16.msra.mxu0 0
    %1337 = vmatpush.bf16.msra.mxu0 0
    %1338 = vmatpush.bf16.msra.mxu0 0
    %1339 = vmatpush.bf16.msra.mxu0 0
    %1340 = vmatpush.bf16.msra.mxu0 0
    %1341 = vmatpush.bf16.msra.mxu0 %v1329
    %1342 = vmatpush.bf16.msra.mxu0 %v1328
    %1343 = vmatmul.bf16.gmra.mxu0 %v1241
    %v1344 = vpop.f32.mrf.mxu0
    %v1345 = vadd.f32 %v1333, %v1344
    %v1346 = vpop.f32.mrf.mxu0
    %v1347 = vadd.f32 %v1333, %v1346
    %1348 = vdwg.mxu0
    %1351 = vrot.lane.b32.xlu0 %v1345, 120
    %v1352 = vpop.permute.xlu0 %1351
    %1353 = vrot.lane.b32.xlu0 %v1347, 120
    %v1354 = vpop.permute.xlu0 %1353
    %1357 = vrot.lane.b32.xlu0 %v1345, 112
    %v1358 = vpop.permute.xlu0 %1357
    %1359 = vrot.lane.b32.xlu0 %v1347, 112
    %v1360 = vpop.permute.xlu0 %1359
    %1363 = vrot.lane.b32.xlu0 %v1345, 104
    %v1364 = vpop.permute.xlu0 %1363
    %1365 = vrot.lane.b32.xlu0 %v1347, 104
    %v1366 = vpop.permute.xlu0 %1365
    %v1369 = vpack.c.bf16 %v1253, %v1253
    %v1370 = vpack.c.bf16 %v1255, %v1255
    %v1371 = vpack.c.bf16 %v1260, %v1260
    %v1372 = vpack.c.bf16 %v1262, %v1262
    %v1373 = vpack.c.bf16 %v1266, %v1266
    %v1374 = vpack.c.bf16 %v1268, %v1268
    %v1375 = vpack.c.bf16 %v1272, %v1272
    %v1376 = vpack.c.bf16 %v1274, %v1274
    %v1377 = vpack.c.bf16 %v1299, %v1299
    %v1378 = vpack.c.bf16 %v1301, %v1301
    %v1379 = vpack.c.bf16 %v1306, %v1306
    %v1380 = vpack.c.bf16 %v1308, %v1308
    %v1381 = vpack.c.bf16 %v1312, %v1312
    %v1382 = vpack.c.bf16 %v1314, %v1314
    %v1383 = vpack.c.bf16 %v1318, %v1318
    %v1384 = vpack.c.bf16 %v1320, %v1320
    %v1386 = vsel %vm532, %v1369, 0
    %v1389 = vsel %vm532, %v1377, 0
    %1391 = vmatpush.bf16.xpose.msra.mxu0 0
    %1392 = vmatpush.bf16.xpose.msra.mxu0 0
    %1393 = vmatpush.bf16.xpose.msra.mxu0 0
    %1394 = vmatpush.bf16.xpose.msra.mxu0 0
    %1395 = vmatpush.bf16.xpose.msra.mxu0 0
    %1396 = vmatpush.bf16.xpose.msra.mxu0 0
    %1397 = vmatpush.bf16.xpose.msra.mxu0 0
    %1398 = vmatpush.bf16.xpose.msra.mxu0 %v1389
    %1399 = vmatmul.bf16.gmra.mxu0 %v1386
    %v1400 = vpop.f32.mrf.mxu0
    %v1401 = vadd.f32 0.0, %v1400
    %v1402 = vpop.f32.mrf.mxu0
    %1403 = vdwg.mxu0
    %v1405 = vsel %vm532, %v1370, 0
    %v1408 = vsel %vm532, %v1378, 0
    %1410 = vmatpush.bf16.xpose.msra.mxu0 0
    %1411 = vmatpush.bf16.xpose.msra.mxu0 0
    %1412 = vmatpush.bf16.xpose.msra.mxu0 0
    %1413 = vmatpush.bf16.xpose.msra.mxu0 0
    %1414 = vmatpush.bf16.xpose.msra.mxu0 0
    %1415 = vmatpush.bf16.xpose.msra.mxu0 0
    %1416 = vmatpush.bf16.xpose.msra.mxu0 0
    %1417 = vmatpush.bf16.xpose.msra.mxu0 %v1408
    %1418 = vmatmul.bf16.gmra.mxu0 %v1405
    %v1419 = vpop.f32.mrf.mxu0
    %v1420 = vadd.f32 0.0, %v1419
    %v1421 = vpop.f32.mrf.mxu0
    %1422 = vdwg.mxu0
    %v1424 = vsel %vm532, %v1371, 0
    %v1427 = vsel %vm532, %v1379, 0
    %1429 = vmatpush.bf16.xpose.msra.mxu0 0
    %1430 = vmatpush.bf16.xpose.msra.mxu0 0
    %1431 = vmatpush.bf16.xpose.msra.mxu0 0
    %1432 = vmatpush.bf16.xpose.msra.mxu0 0
    %1433 = vmatpush.bf16.xpose.msra.mxu0 0
    %1434 = vmatpush.bf16.xpose.msra.mxu0 0
    %1435 = vmatpush.bf16.xpose.msra.mxu0 0
    %1436 = vmatpush.bf16.xpose.msra.mxu0 %v1427
    %1437 = vmatmul.bf16.gmra.mxu0 %v1424
    %v1438 = vpop.f32.mrf.mxu0
    %v1439 = vadd.f32 0.0, %v1438
    %v1440 = vpop.f32.mrf.mxu0
    %1441 = vdwg.mxu0
    %v1443 = vsel %vm532, %v1372, 0
    %v1446 = vsel %vm532, %v1380, 0
    %1448 = vmatpush.bf16.xpose.msra.mxu0 0
    %1449 = vmatpush.bf16.xpose.msra.mxu0 0
    %1450 = vmatpush.bf16.xpose.msra.mxu0 0
    %1451 = vmatpush.bf16.xpose.msra.mxu0 0
    %1452 = vmatpush.bf16.xpose.msra.mxu0 0
    %1453 = vmatpush.bf16.xpose.msra.mxu0 0
    %1454 = vmatpush.bf16.xpose.msra.mxu0 0
    %1455 = vmatpush.bf16.xpose.msra.mxu0 %v1446
    %1456 = vmatmul.bf16.gmra.mxu0 %v1443
    %v1457 = vpop.f32.mrf.mxu0
    %v1458 = vadd.f32 0.0, %v1457
    %v1459 = vpop.f32.mrf.mxu0
    %1460 = vdwg.mxu0
    %v1462 = vsel %vm532, %v1373, 0
    %v1465 = vsel %vm532, %v1381, 0
    %1467 = vmatpush.bf16.xpose.msra.mxu0 0
    %1468 = vmatpush.bf16.xpose.msra.mxu0 0
    %1469 = vmatpush.bf16.xpose.msra.mxu0 0
    %1470 = vmatpush.bf16.xpose.msra.mxu0 0
    %1471 = vmatpush.bf16.xpose.msra.mxu0 0
    %1472 = vmatpush.bf16.xpose.msra.mxu0 0
    %1473 = vmatpush.bf16.xpose.msra.mxu0 0
    %1474 = vmatpush.bf16.xpose.msra.mxu0 %v1465
    %1475 = vmatmul.bf16.gmra.mxu0 %v1462
    %v1476 = vpop.f32.mrf.mxu0
    %v1477 = vadd.f32 0.0, %v1476
    %v1478 = vpop.f32.mrf.mxu0
    %1479 = vdwg.mxu0
    %v1481 = vsel %vm532, %v1374, 0
    %v1484 = vsel %vm532, %v1382, 0
    %1486 = vmatpush.bf16.xpose.msra.mxu0 0
    %1487 = vmatpush.bf16.xpose.msra.mxu0 0
    %1488 = vmatpush.bf16.xpose.msra.mxu0 0
    %1489 = vmatpush.bf16.xpose.msra.mxu0 0
    %1490 = vmatpush.bf16.xpose.msra.mxu0 0
    %1491 = vmatpush.bf16.xpose.msra.mxu0 0
    %1492 = vmatpush.bf16.xpose.msra.mxu0 0
    %1493 = vmatpush.bf16.xpose.msra.mxu0 %v1484
    %1494 = vmatmul.bf16.gmra.mxu0 %v1481
    %v1495 = vpop.f32.mrf.mxu0
    %v1496 = vadd.f32 0.0, %v1495
    %v1497 = vpop.f32.mrf.mxu0
    %1498 = vdwg.mxu0
    %v1500 = vsel %vm532, %v1375, 0
    %v1503 = vsel %vm532, %v1383, 0
    %1505 = vmatpush.bf16.xpose.msra.mxu0 0
    %1506 = vmatpush.bf16.xpose.msra.mxu0 0
    %1507 = vmatpush.bf16.xpose.msra.mxu0 0
    %1508 = vmatpush.bf16.xpose.msra.mxu0 0
    %1509 = vmatpush.bf16.xpose.msra.mxu0 0
    %1510 = vmatpush.bf16.xpose.msra.mxu0 0
    %1511 = vmatpush.bf16.xpose.msra.mxu0 0
    %1512 = vmatpush.bf16.xpose.msra.mxu0 %v1503
    %1513 = vmatmul.bf16.gmra.mxu0 %v1500
    %v1514 = vpop.f32.mrf.mxu0
    %v1515 = vadd.f32 0.0, %v1514
    %v1516 = vpop.f32.mrf.mxu0
    %1517 = vdwg.mxu0
    %v1519 = vsel %vm532, %v1376, 0
    %v1522 = vsel %vm532, %v1384, 0
    %1524 = vmatpush.bf16.xpose.msra.mxu0 0
    %1525 = vmatpush.bf16.xpose.msra.mxu0 0
    %1526 = vmatpush.bf16.xpose.msra.mxu0 0
    %1527 = vmatpush.bf16.xpose.msra.mxu0 0
    %1528 = vmatpush.bf16.xpose.msra.mxu0 0
    %1529 = vmatpush.bf16.xpose.msra.mxu0 0
    %1530 = vmatpush.bf16.xpose.msra.mxu0 0
    %1531 = vmatpush.bf16.xpose.msra.mxu0 %v1522
    %1532 = vmatmul.bf16.gmra.mxu0 %v1519
    %v1533 = vpop.f32.mrf.mxu0
    %v1534 = vadd.f32 0.0, %v1533
    %v1535 = vpop.f32.mrf.mxu0
    %1536 = vdwg.mxu0
    %v1537 = vmul.f32 %v1401, 0.35355338
    %v1538 = vmul.f32 %v1420, 0.35355338
    %v1539 = vmul.f32 %v1439, 0.35355338
    %v1540 = vmul.f32 %v1458, 0.35355338
    %v1541 = vmul.f32 %v1477, 0.35355338
    %v1542 = vmul.f32 %v1496, 0.35355338
    %v1543 = vmul.f32 %v1515, 0.35355338
    %v1544 = vmul.f32 %v1534, 0.35355338
    %v1545 = vsel %vm697, %v1537, -1e+09
    %v1546 = vsel %vm698, %v1538, -1e+09
    %v1547 = vsel %vm697, %v1539, -1e+09
    %v1548 = vsel %vm698, %v1540, -1e+09
    %v1549 = vsel %vm697, %v1541, -1e+09
    %v1550 = vsel %vm698, %v1542, -1e+09
    %v1551 = vsel %vm697, %v1543, -1e+09
    %v1552 = vsel %vm698, %v1544, -1e+09
    %v1553 = vsel %vm532, %v1545, -inf
    %1554 = vmax.xlane.f32.xlu0 %v1553
    %v1555 = vpop.xlane.xlu0 %1554
    %v1556 = vsel %vm532, %v1546, -inf
    %1557 = vmax.xlane.f32.xlu0 %v1556
    %v1558 = vpop.xlane.xlu0 %1557
    %v1559 = vsel %vm532, %v1547, -inf
    %1560 = vmax.xlane.f32.xlu0 %v1559
    %v1561 = vpop.xlane.xlu0 %1560
    %v1562 = vsel %vm532, %v1548, -inf
    %1563 = vmax.xlane.f32.xlu0 %v1562
    %v1564 = vpop.xlane.xlu0 %1563
    %v1565 = vsel %vm532, %v1549, -inf
    %1566 = vmax.xlane.f32.xlu0 %v1565
    %v1567 = vpop.xlane.xlu0 %1566
    %v1568 = vsel %vm532, %v1550, -inf
    %1569 = vmax.xlane.f32.xlu0 %v1568
    %v1570 = vpop.xlane.xlu0 %1569
    %v1571 = vsel %vm532, %v1551, -inf
    %1572 = vmax.xlane.f32.xlu0 %v1571
    %v1573 = vpop.xlane.xlu0 %1572
    %v1574 = vsel %vm532, %v1552, -inf
    %1575 = vmax.xlane.f32.xlu0 %v1574
    %v1576 = vpop.xlane.xlu0 %1575
    %v1577 = vsub.f32 %v1545, %v1555
    %v1578 = vsub.f32 %v1546, %v1558
    %v1579 = vsub.f32 %v1547, %v1561
    %v1580 = vsub.f32 %v1548, %v1564
    %v1581 = vsub.f32 %v1549, %v1567
    %v1582 = vsub.f32 %v1550, %v1570
    %v1583 = vsub.f32 %v1551, %v1573
    %v1584 = vsub.f32 %v1552, %v1576
    %v1585 = vmul.f32 %v1577, 1.442695
    %v1586 = vpow.pop %v1585
    %v1587 = vmul.f32 %v1578, 1.442695
    %v1588 = vpow.pop %v1587
    %v1589 = vmul.f32 %v1579, 1.442695
    %v1590 = vpow.pop %v1589
    %v1591 = vmul.f32 %v1580, 1.442695
    %v1592 = vpow.pop %v1591
    %v1593 = vmul.f32 %v1581, 1.442695
    %v1594 = vpow.pop %v1593
    %v1595 = vmul.f32 %v1582, 1.442695
    %v1596 = vpow.pop %v1595
    %v1597 = vmul.f32 %v1583, 1.442695
    %v1598 = vpow.pop %v1597
    %v1599 = vmul.f32 %v1584, 1.442695
    %v1600 = vpow.pop %v1599
    %v1601 = vsel %vm532, %v1586, 0.0
    %1602 = vadd.xlane.f32.xlu0 %v1601
    %v1603 = vpop.xlane.xlu0 %1602
    %v1604 = vsel %vm532, %v1588, 0.0
    %1605 = vadd.xlane.f32.xlu0 %v1604
    %v1606 = vpop.xlane.xlu0 %1605
    %v1607 = vsel %vm532, %v1590, 0.0
    %1608 = vadd.xlane.f32.xlu0 %v1607
    %v1609 = vpop.xlane.xlu0 %1608
    %v1610 = vsel %vm532, %v1592, 0.0
    %1611 = vadd.xlane.f32.xlu0 %v1610
    %v1612 = vpop.xlane.xlu0 %1611
    %v1613 = vsel %vm532, %v1594, 0.0
    %1614 = vadd.xlane.f32.xlu0 %v1613
    %v1615 = vpop.xlane.xlu0 %1614
    %v1616 = vsel %vm532, %v1596, 0.0
    %1617 = vadd.xlane.f32.xlu0 %v1616
    %v1618 = vpop.xlane.xlu0 %1617
    %v1619 = vsel %vm532, %v1598, 0.0
    %1620 = vadd.xlane.f32.xlu0 %v1619
    %v1621 = vpop.xlane.xlu0 %1620
    %v1622 = vsel %vm532, %v1600, 0.0
    %1623 = vadd.xlane.f32.xlu0 %v1622
    %v1624 = vpop.xlane.xlu0 %1623
    %v1625 = vrcp.pop %v1603
    %v1626 = vrcp.pop %v1606
    %v1627 = vrcp.pop %v1609
    %v1628 = vrcp.pop %v1612
    %v1629 = vrcp.pop %v1615
    %v1630 = vrcp.pop %v1618
    %v1631 = vrcp.pop %v1621
    %v1632 = vrcp.pop %v1624
    %v1633 = vmul.f32 %v1586, %v1625
    %v1634 = vmul.f32 %v1588, %v1626
    %v1635 = vmul.f32 %v1590, %v1627
    %v1636 = vmul.f32 %v1592, %v1628
    %v1637 = vmul.f32 %v1594, %v1629
    %v1638 = vmul.f32 %v1596, %v1630
    %v1639 = vmul.f32 %v1598, %v1631
    %v1640 = vmul.f32 %v1600, %v1632
    %v1641 = vpack.c.bf16 %v1633, %v1633
    %v1642 = vpack.c.bf16 %v1634, %v1634
    %v1643 = vpack.c.bf16 %v1635, %v1635
    %v1644 = vpack.c.bf16 %v1636, %v1636
    %v1645 = vpack.c.bf16 %v1637, %v1637
    %v1646 = vpack.c.bf16 %v1638, %v1638
    %v1647 = vpack.c.bf16 %v1639, %v1639
    %v1648 = vpack.c.bf16 %v1640, %v1640
    %v1649 = vpack.c.bf16 %v1345, %v1345
    %v1650 = vpack.c.bf16 %v1347, %v1347
    %v1651 = vpack.c.bf16 %v1352, %v1352
    %v1652 = vpack.c.bf16 %v1354, %v1354
    %v1653 = vpack.c.bf16 %v1358, %v1358
    %v1654 = vpack.c.bf16 %v1360, %v1360
    %v1655 = vpack.c.bf16 %v1364, %v1364
    %v1656 = vpack.c.bf16 %v1366, %v1366
    %v1658 = vsel %vm532, %v1641, 0
    %v1661 = vsel %vm814, %v1649, 0
    %1663 = vmatpush.bf16.msra.mxu0 0
    %1664 = vmatpush.bf16.msra.mxu0 0
    %1665 = vmatpush.bf16.msra.mxu0 0
    %1666 = vmatpush.bf16.msra.mxu0 0
    %1667 = vmatpush.bf16.msra.mxu0 0
    %1668 = vmatpush.bf16.msra.mxu0 0
    %1669 = vmatpush.bf16.msra.mxu0 0
    %1670 = vmatpush.bf16.msra.mxu0 %v1661
    %1671 = vmatmul.bf16.gmra.mxu0 %v1658
    %v1672 = vpop.f32.mrf.mxu0
    %v1673 = vadd.f32 0.0, %v1672
    %v1674 = vpop.f32.mrf.mxu0
    %1675 = vdwg.mxu0
    %v1677 = vsel %vm532, %v1642, 0
    %v1680 = vsel %vm814, %v1650, 0
    %1682 = vmatpush.bf16.msra.mxu0 0
    %1683 = vmatpush.bf16.msra.mxu0 0
    %1684 = vmatpush.bf16.msra.mxu0 0
    %1685 = vmatpush.bf16.msra.mxu0 0
    %1686 = vmatpush.bf16.msra.mxu0 0
    %1687 = vmatpush.bf16.msra.mxu0 0
    %1688 = vmatpush.bf16.msra.mxu0 0
    %1689 = vmatpush.bf16.msra.mxu0 %v1680
    %1690 = vmatmul.bf16.gmra.mxu0 %v1677
    %v1691 = vpop.f32.mrf.mxu0
    %v1692 = vadd.f32 0.0, %v1691
    %v1693 = vpop.f32.mrf.mxu0
    %1694 = vdwg.mxu0
    %v1696 = vsel %vm532, %v1643, 0
    %v1699 = vsel %vm814, %v1651, 0
    %1701 = vmatpush.bf16.msra.mxu0 0
    %1702 = vmatpush.bf16.msra.mxu0 0
    %1703 = vmatpush.bf16.msra.mxu0 0
    %1704 = vmatpush.bf16.msra.mxu0 0
    %1705 = vmatpush.bf16.msra.mxu0 0
    %1706 = vmatpush.bf16.msra.mxu0 0
    %1707 = vmatpush.bf16.msra.mxu0 0
    %1708 = vmatpush.bf16.msra.mxu0 %v1699
    %1709 = vmatmul.bf16.gmra.mxu0 %v1696
    %v1710 = vpop.f32.mrf.mxu0
    %v1711 = vadd.f32 0.0, %v1710
    %v1712 = vpop.f32.mrf.mxu0
    %1713 = vdwg.mxu0
    %v1715 = vsel %vm532, %v1644, 0
    %v1718 = vsel %vm814, %v1652, 0
    %1720 = vmatpush.bf16.msra.mxu0 0
    %1721 = vmatpush.bf16.msra.mxu0 0
    %1722 = vmatpush.bf16.msra.mxu0 0
    %1723 = vmatpush.bf16.msra.mxu0 0
    %1724 = vmatpush.bf16.msra.mxu0 0
    %1725 = vmatpush.bf16.msra.mxu0 0
    %1726 = vmatpush.bf16.msra.mxu0 0
    %1727 = vmatpush.bf16.msra.mxu0 %v1718
    %1728 = vmatmul.bf16.gmra.mxu0 %v1715
    %v1729 = vpop.f32.mrf.mxu0
    %v1730 = vadd.f32 0.0, %v1729
    %v1731 = vpop.f32.mrf.mxu0
    %1732 = vdwg.mxu0
    %v1734 = vsel %vm532, %v1645, 0
    %v1737 = vsel %vm814, %v1653, 0
    %1739 = vmatpush.bf16.msra.mxu0 0
    %1740 = vmatpush.bf16.msra.mxu0 0
    %1741 = vmatpush.bf16.msra.mxu0 0
    %1742 = vmatpush.bf16.msra.mxu0 0
    %1743 = vmatpush.bf16.msra.mxu0 0
    %1744 = vmatpush.bf16.msra.mxu0 0
    %1745 = vmatpush.bf16.msra.mxu0 0
    %1746 = vmatpush.bf16.msra.mxu0 %v1737
    %1747 = vmatmul.bf16.gmra.mxu0 %v1734
    %v1748 = vpop.f32.mrf.mxu0
    %v1749 = vadd.f32 0.0, %v1748
    %v1750 = vpop.f32.mrf.mxu0
    %1751 = vdwg.mxu0
    %v1753 = vsel %vm532, %v1646, 0
    %v1756 = vsel %vm814, %v1654, 0
    %1758 = vmatpush.bf16.msra.mxu0 0
    %1759 = vmatpush.bf16.msra.mxu0 0
    %1760 = vmatpush.bf16.msra.mxu0 0
    %1761 = vmatpush.bf16.msra.mxu0 0
    %1762 = vmatpush.bf16.msra.mxu0 0
    %1763 = vmatpush.bf16.msra.mxu0 0
    %1764 = vmatpush.bf16.msra.mxu0 0
    %1765 = vmatpush.bf16.msra.mxu0 %v1756
    %1766 = vmatmul.bf16.gmra.mxu0 %v1753
    %v1767 = vpop.f32.mrf.mxu0
    %v1768 = vadd.f32 0.0, %v1767
    %v1769 = vpop.f32.mrf.mxu0
    %1770 = vdwg.mxu0
    %v1772 = vsel %vm532, %v1647, 0
    %v1775 = vsel %vm814, %v1655, 0
    %1777 = vmatpush.bf16.msra.mxu0 0
    %1778 = vmatpush.bf16.msra.mxu0 0
    %1779 = vmatpush.bf16.msra.mxu0 0
    %1780 = vmatpush.bf16.msra.mxu0 0
    %1781 = vmatpush.bf16.msra.mxu0 0
    %1782 = vmatpush.bf16.msra.mxu0 0
    %1783 = vmatpush.bf16.msra.mxu0 0
    %1784 = vmatpush.bf16.msra.mxu0 %v1775
    %1785 = vmatmul.bf16.gmra.mxu0 %v1772
    %v1786 = vpop.f32.mrf.mxu0
    %v1787 = vadd.f32 0.0, %v1786
    %v1788 = vpop.f32.mrf.mxu0
    %1789 = vdwg.mxu0
    %v1791 = vsel %vm532, %v1648, 0
    %v1794 = vsel %vm814, %v1656, 0
    %1796 = vmatpush.bf16.msra.mxu0 0
    %1797 = vmatpush.bf16.msra.mxu0 0
    %1798 = vmatpush.bf16.msra.mxu0 0
    %1799 = vmatpush.bf16.msra.mxu0 0
    %1800 = vmatpush.bf16.msra.mxu0 0
    %1801 = vmatpush.bf16.msra.mxu0 0
    %1802 = vmatpush.bf16.msra.mxu0 0
    %1803 = vmatpush.bf16.msra.mxu0 %v1794
    %1804 = vmatmul.bf16.gmra.mxu0 %v1791
    %v1805 = vpop.f32.mrf.mxu0
    %v1806 = vadd.f32 0.0, %v1805
    %v1807 = vpop.f32.mrf.mxu0
    %1808 = vdwg.mxu0
    %1811 = vrot.lane.b32.xlu0 %v1711, 8
    %v1812 = vpop.permute.xlu0 %1811
    %1813 = vrot.lane.b32.xlu0 %v1730, 8
    %v1814 = vpop.permute.xlu0 %1813
    %1819 = vrot.lane.b32.xlu0 %v1749, 16
    %v1820 = vpop.permute.xlu0 %1819
    %1821 = vrot.lane.b32.xlu0 %v1768, 16
    %v1822 = vpop.permute.xlu0 %1821
    %1827 = vrot.lane.b32.xlu0 %v1787, 24
    %v1828 = vpop.permute.xlu0 %1827
    %1829 = vrot.lane.b32.xlu0 %v1806, 24
    %v1830 = vpop.permute.xlu0 %1829
    %v1833 = vsel %vm532, %v1673, %v1812
    %v1834 = vsel %vm532, %v1692, %v1814
    %v1835 = vsel %vm990, %v1833, %v1820
    %v1836 = vsel %vm990, %v1834, %v1822
    %v1837 = vsel %vm993, %v1835, %v1828
    %v1838 = vsel %vm993, %v1836, %v1830
    %s1839 = scalar_lea.vmem [#allocation14], 32
    %v1840 = vld [vmem:[%s1839] sm:$0xff]
    %v1841 = vld [vmem:[%s1839 + $0x8] sm:$0xff]
    %v1842 = vld [vmem:[%s1839 + $0x10] sm:$0xff]
    %v1843 = vld [vmem:[%s1839 + $0x18] sm:$0xff]
    %v1844 = vpack.c.bf16 %v1838, %v1837
    %v1845 = vpack.c.bf16 %v1841, %v1840
    %v1846 = vpack.c.bf16 %v1843, %v1842
    %v1848 = vsel %vm318, %v1844, 0
    %1850 = vmatpush.bf16.msra.mxu0 0
    %1851 = vmatpush.bf16.msra.mxu0 0
    %1852 = vmatpush.bf16.msra.mxu0 0
    %1853 = vmatpush.bf16.msra.mxu0 0
    %1854 = vmatpush.bf16.msra.mxu0 0
    %1855 = vmatpush.bf16.msra.mxu0 0
    %1856 = vmatpush.bf16.msra.mxu0 %v1846
    %1857 = vmatpush.bf16.msra.mxu0 %v1845
    %1858 = vmatmul.bf16.gmra.mxu0 %v1848
    %v1859 = vpop.f32.mrf.mxu0
    %v1860 = vadd.f32 0.0, %v1859
    %v1861 = vpop.f32.mrf.mxu0
    %v1862 = vadd.f32 0.0, %v1861
    %1863 = vdwg.mxu0
    %v1864 = vadd.f32 %v1167, %v1860
    %v1865 = vadd.f32 %v1168, %v1862
    %s1866 = scalar_lea.vmem [#allocation16], 1
    %v1867 = vld [vmem:[%s1866] sm:$0x1]
    %v1869 = vperm.slane %v1867, 0
    %v1871 = vadd.f32 %v1864, %v1869
    %v1872 = vadd.f32 %v1865, %v1869
    %s1873 = scalar_lea.vmem [#allocation17], 1
    %v1874 = vld [vmem:[%s1873] sm:$0x1]
    %s1875 = scalar_lea.vmem [#allocation19], 1
    %v1876 = vld [vmem:[%s1875] sm:$0x1]
    %v1877 = vsel %vm318, %v1871, 0.0
    %1878 = vadd.xlane.f32.xlu0 %v1877
    %v1879 = vpop.xlane.xlu0 %1878
    %v1880 = vsel %vm318, %v1872, 0.0
    %1881 = vadd.xlane.f32.xlu0 %v1880
    %v1882 = vpop.xlane.xlu0 %1881
    %v1883 = vmul.f32 %v1879, %v331
    %v1884 = vmul.f32 %v1882, %v331
    %v1885 = vsub.f32 %v1871, %v1883
    %v1886 = vsub.f32 %v1872, %v1884
    %v1887 = vmul.f32 %v1885, %v1885
    %v1888 = vmul.f32 %v1886, %v1886
    %v1889 = vsel %vm318, %v1887, 0.0
    %1890 = vadd.xlane.f32.xlu0 %v1889
    %v1891 = vpop.xlane.xlu0 %1890
    %v1892 = vsel %vm318, %v1888, 0.0
    %1893 = vadd.xlane.f32.xlu0 %v1892
    %v1894 = vpop.xlane.xlu0 %1893
    %v1895 = vmul.f32 %v1891, %v331
    %v1896 = vmul.f32 %v1894, %v331
    %v1897 = vadd.f32 %v1895, 1e-05
    %v1898 = vadd.f32 %v1896, 1e-05
    %v1899 = vrsqrt.pop %v1897
    %v1900 = vmul.f32 %v1899, %v1897
    %v1901 = vmul.f32 %v1900, %v1899
    %v1902 = vmul.f32 0.5, %v1901
    %v1903 = vsub.f32 1.5, %v1902
    %v1904 = vmul.f32 %v1899, %v1903
    %vm1905 = vweird.f32 %v1897
    %vm1906 = vweird.f32 %v1899
    %vm1907 = vmor %vm1905, %vm1906
    %v1908 = vsel %vm1907, %v1899, %v1904
    %v1909 = vrsqrt.pop %v1898
    %v1910 = vmul.f32 %v1909, %v1898
    %v1911 = vmul.f32 %v1910, %v1909
    %v1912 = vmul.f32 0.5, %v1911
    %v1913 = vsub.f32 1.5, %v1912
    %v1914 = vmul.f32 %v1909, %v1913
    %vm1915 = vweird.f32 %v1898
    %vm1916 = vweird.f32 %v1909
    %vm1917 = vmor %vm1915, %vm1916
    %v1918 = vsel %vm1917, %v1909, %v1914
    %v1919 = vmul.f32 %v1885, %v1908
    %v1920 = vmul.f32 %v1886, %v1918
    %v1922 = vperm.slane %v1874, 0
    %v1924 = vmul.f32 %v1919, %v1922
    %v1925 = vmul.f32 %v1920, %v1922
    %v1927 = vperm.slane %v1876, 0
    %v1929 = vadd.f32 %v1924, %v1927
    %v1930 = vadd.f32 %v1925, %v1927
    %s1931 = scalar_lea.vmem [#allocation20], 32
    %v1932 = vld [vmem:[%s1931] sm:$0xff]
    %v1933 = vld [vmem:[%s1931 + $0x8] sm:$0xff]
    %v1934 = vld [vmem:[%s1931 + $0x10] sm:$0xff]
    %v1935 = vld [vmem:[%s1931 + $0x18] sm:$0xff]
    %v1936 = vpack.c.bf16 %v1930, %v1929
    %v1937 = vpack.c.bf16 %v1933, %v1932
    %v1938 = vpack.c.bf16 %v1935, %v1934
    %s1939 = scalar_lea.vmem [#allocation22], 1
    %v1940 = vld [vmem:[%s1939] sm:$0x1]
    %v1942 = vperm.slane %v1940, 0
    %v1945 = vsel %vm318, %v1936, 0
    %1947 = vmatpush.bf16.msra.mxu0 0
    %1948 = vmatpush.bf16.msra.mxu0 0
    %1949 = vmatpush.bf16.msra.mxu0 0
    %1950 = vmatpush.bf16.msra.mxu0 0
    %1951 = vmatpush.bf16.msra.mxu0 0
    %1952 = vmatpush.bf16.msra.mxu0 0
    %1953 = vmatpush.bf16.msra.mxu0 %v1938
    %1954 = vmatpush.bf16.msra.mxu0 %v1937
    %1955 = vmatmul.bf16.gmra.mxu0 %v1945
    %v1956 = vpop.f32.mrf.mxu0
    %v1957 = vadd.f32 %v1942, %v1956
    %v1958 = vpop.f32.mrf.mxu0
    %v1959 = vadd.f32 %v1942, %v1958
    %1960 = vdwg.mxu0
    %v1961 = vmul.f32 %v1957, %v1957
    %v1962 = vmul.f32 %v1959, %v1959
    %v1963 = vmul.f32 %v1957, %v1961
    %v1964 = vmul.f32 %v1959, %v1962
    %v1965 = vmul.f32 %v1963, 0.044715
    %v1966 = vmul.f32 %v1964, 0.044715
    %v1967 = vadd.f32 %v1957, %v1965
    %v1968 = vadd.f32 %v1959, %v1966
    %v1969 = vmul.f32 %v1967, 0.7978846
    %v1970 = vmul.f32 %v1968, 0.7978846
    %v1971 = vtanh.pop %v1969
    %v1972 = vtanh.pop %v1970
    %v1973 = vadd.f32 %v1971, 1.0
    %v1974 = vadd.f32 %v1972, 1.0
    %v1975 = vmul.f32 %v1973, 0.5
    %v1976 = vmul.f32 %v1974, 0.5
    %v1977 = vmul.f32 %v1957, %v1975
    %v1978 = vmul.f32 %v1959, %v1976
    %s1979 = scalar_lea.vmem %s17, 64
    %v1980 = vld [vmem:[%s1979] sm:$0xff]
    %v1981 = vld [vmem:[%s1979 + $0x8] sm:$0xff]
    %v1982 = vld [vmem:[%s1979 + $0x10] sm:$0xff]
    %v1983 = vld [vmem:[%s1979 + $0x18] sm:$0xff]
    %v1984 = vld [vmem:[%s1979 + $0x20] sm:$0xff]
    %v1985 = vld [vmem:[%s1979 + $0x28] sm:$0xff]
    %v1986 = vld [vmem:[%s1979 + $0x30] sm:$0xff]
    %v1987 = vld [vmem:[%s1979 + $0x38] sm:$0xff]
    %v1988 = vpack.c.bf16 %v1978, %v1977
    %v1989 = vpack.c.bf16 %v1981, %v1980
    %v1990 = vpack.c.bf16 %v1983, %v1982
    %v1991 = vpack.c.bf16 %v1985, %v1984
    %v1992 = vpack.c.bf16 %v1987, %v1986
    %v1994 = vsel %vm1143, %v1988, 0
    %1996 = vmatpush.bf16.msra.mxu0 0
    %1997 = vmatpush.bf16.msra.mxu0 0
    %1998 = vmatpush.bf16.msra.mxu0 0
    %1999 = vmatpush.bf16.msra.mxu0 0
    %2000 = vmatpush.bf16.msra.mxu0 %v1992
    %2001 = vmatpush.bf16.msra.mxu0 %v1991
    %2002 = vmatpush.bf16.msra.mxu0 %v1990
    %2003 = vmatpush.bf16.msra.mxu0 %v1989
    %2004 = vmatmul.bf16.gmra.mxu0 %v1994
    %v2005 = vpop.f32.mrf.mxu0
    %v2006 = vadd.f32 0.0, %v2005
    %v2007 = vpop.f32.mrf.mxu0
    %v2008 = vadd.f32 0.0, %v2007
    %2009 = vdwg.mxu0
    %v2010 = vadd.f32 %v1871, %v2006
    %v2011 = vadd.f32 %v1872, %v2008
    %s2012 = scalar_lea.vmem [#allocation23], 1
    %v2013 = vld [vmem:[%s2012] sm:$0x1]
    %v2015 = vperm.slane %v2013, 0
    %v2017 = vadd.f32 %v2010, %v2015
    %v2018 = vadd.f32 %v2011, %v2015
    %s2019 = scalar_lea.vmem [#allocation7], 2
    %v2020 = vld [vmem:[%s2019] sm:$0x1]
    %s2021 = scalar_lea.vmem [#allocation8], 2
    %v2022 = vld [vmem:[%s2021] sm:$0x1]
    %v2023 = vsel %vm318, %v2017, 0.0
    %2024 = vadd.xlane.f32.xlu0 %v2023
    %v2025 = vpop.xlane.xlu0 %2024
    %v2026 = vsel %vm318, %v2018, 0.0
    %2027 = vadd.xlane.f32.xlu0 %v2026
    %v2028 = vpop.xlane.xlu0 %2027
    %v2029 = vmul.f32 %v2025, %v331
    %v2030 = vmul.f32 %v2028, %v331
    %v2031 = vsub.f32 %v2017, %v2029
    %v2032 = vsub.f32 %v2018, %v2030
    %v2033 = vmul.f32 %v2031, %v2031
    %v2034 = vmul.f32 %v2032, %v2032
    %v2035 = vsel %vm318, %v2033, 0.0
    %2036 = vadd.xlane.f32.xlu0 %v2035
    %v2037 = vpop.xlane.xlu0 %2036
    %v2038 = vsel %vm318, %v2034, 0.0
    %2039 = vadd.xlane.f32.xlu0 %v2038
    %v2040 = vpop.xlane.xlu0 %2039
    %v2041 = vmul.f32 %v2037, %v331
    %v2042 = vmul.f32 %v2040, %v331
    %v2043 = vadd.f32 %v2041, 1e-05
    %v2044 = vadd.f32 %v2042, 1e-05
    %v2045 = vrsqrt.pop %v2043
    %v2046 = vmul.f32 %v2045, %v2043
    %v2047 = vmul.f32 %v2046, %v2045
    %v2048 = vmul.f32 0.5, %v2047
    %v2049 = vsub.f32 1.5, %v2048
    %v2050 = vmul.f32 %v2045, %v2049
    %vm2051 = vweird.f32 %v2043
    %vm2052 = vweird.f32 %v2045
    %vm2053 = vmor %vm2051, %vm2052
    %v2054 = vsel %vm2053, %v2045, %v2050
    %v2055 = vrsqrt.pop %v2044
    %v2056 = vmul.f32 %v2055, %v2044
    %v2057 = vmul.f32 %v2056, %v2055
    %v2058 = vmul.f32 0.5, %v2057
    %v2059 = vsub.f32 1.5, %v2058
    %v2060 = vmul.f32 %v2055, %v2059
    %vm2061 = vweird.f32 %v2044
    %vm2062 = vweird.f32 %v2055
    %vm2063 = vmor %vm2061, %vm2062
    %v2064 = vsel %vm2063, %v2055, %v2060
    %v2065 = vmul.f32 %v2031, %v2054
    %v2066 = vmul.f32 %v2032, %v2064
    %v2068 = vperm.slane %v2020, 0
    %v2070 = vmul.f32 %v2065, %v2068
    %v2071 = vmul.f32 %v2066, %v2068
    %v2073 = vperm.slane %v2022, 0
    %v2075 = vadd.f32 %v2070, %v2073
    %v2076 = vadd.f32 %v2071, %v2073
    %s2077 = scalar_lea.vmem %s5, 64
    %v2078 = vld [vmem:[%s2077] sm:$0xff]
    %v2079 = vld [vmem:[%s2077 + $0x8] sm:$0xff]
    %v2080 = vld [vmem:[%s2077 + $0x10] sm:$0xff]
    %v2081 = vld [vmem:[%s2077 + $0x18] sm:$0xff]
    %v2082 = vpack.c.bf16 %v2076, %v2075
    %v2083 = vpack.c.bf16 %v2079, %v2078
    %v2084 = vpack.c.bf16 %v2081, %v2080
    %s2085 = scalar_lea.vmem [#allocation10], 2
    %v2086 = vld [vmem:[%s2085] sm:$0x1]
    %v2088 = vperm.slane %v2086, 0
    %v2091 = vsel %vm318, %v2082, 0
    %2093 = vmatpush.bf16.msra.mxu0 0
    %2094 = vmatpush.bf16.msra.mxu0 0
    %2095 = vmatpush.bf16.msra.mxu0 0
    %2096 = vmatpush.bf16.msra.mxu0 0
    %2097 = vmatpush.bf16.msra.mxu0 0
    %2098 = vmatpush.bf16.msra.mxu0 0
    %2099 = vmatpush.bf16.msra.mxu0 %v2084
    %2100 = vmatpush.bf16.msra.mxu0 %v2083
    %2101 = vmatmul.bf16.gmra.mxu0 %v2091
    %v2102 = vpop.f32.mrf.mxu0
    %v2103 = vadd.f32 %v2088, %v2102
    %v2104 = vpop.f32.mrf.mxu0
    %v2105 = vadd.f32 %v2088, %v2104
    %2106 = vdwg.mxu0
    %2109 = vrot.lane.b32.xlu0 %v2103, 120
    %v2110 = vpop.permute.xlu0 %2109
    %2111 = vrot.lane.b32.xlu0 %v2105, 120
    %v2112 = vpop.permute.xlu0 %2111
    %2115 = vrot.lane.b32.xlu0 %v2103, 112
    %v2116 = vpop.permute.xlu0 %2115
    %2117 = vrot.lane.b32.xlu0 %v2105, 112
    %v2118 = vpop.permute.xlu0 %2117
    %2121 = vrot.lane.b32.xlu0 %v2103, 104
    %v2122 = vpop.permute.xlu0 %2121
    %2123 = vrot.lane.b32.xlu0 %v2105, 104
    %v2124 = vpop.permute.xlu0 %2123
    %s2127 = scalar_lea.vmem %s6, 64
    %v2128 = vld [vmem:[%s2127] sm:$0xff]
    %v2129 = vld [vmem:[%s2127 + $0x8] sm:$0xff]
    %v2130 = vld [vmem:[%s2127 + $0x10] sm:$0xff]
    %v2131 = vld [vmem:[%s2127 + $0x18] sm:$0xff]
    %v2132 = vpack.c.bf16 %v2129, %v2128
    %v2133 = vpack.c.bf16 %v2131, %v2130
    %s2134 = scalar_lea.vmem [#allocation11], 2
    %v2135 = vld [vmem:[%s2134] sm:$0x1]
    %v2137 = vperm.slane %v2135, 0
    %2139 = vmatpush.bf16.msra.mxu0 0
    %2140 = vmatpush.bf16.msra.mxu0 0
    %2141 = vmatpush.bf16.msra.mxu0 0
    %2142 = vmatpush.bf16.msra.mxu0 0
    %2143 = vmatpush.bf16.msra.mxu0 0
    %2144 = vmatpush.bf16.msra.mxu0 0
    %2145 = vmatpush.bf16.msra.mxu0 %v2133
    %2146 = vmatpush.bf16.msra.mxu0 %v2132
    %2147 = vmatmul.bf16.gmra.mxu0 %v2091
    %v2148 = vpop.f32.mrf.mxu0
    %v2149 = vadd.f32 %v2137, %v2148
    %v2150 = vpop.f32.mrf.mxu0
    %v2151 = vadd.f32 %v2137, %v2150
    %2152 = vdwg.mxu0
    %2155 = vrot.lane.b32.xlu0 %v2149, 120
    %v2156 = vpop.permute.xlu0 %2155
    %2157 = vrot.lane.b32.xlu0 %v2151, 120
    %v2158 = vpop.permute.xlu0 %2157
    %2161 = vrot.lane.b32.xlu0 %v2149, 112
    %v2162 = vpop.permute.xlu0 %2161
    %2163 = vrot.lane.b32.xlu0 %v2151, 112
    %v2164 = vpop.permute.xlu0 %2163
    %2167 = vrot.lane.b32.xlu0 %v2149, 104
    %v2168 = vpop.permute.xlu0 %2167
    %2169 = vrot.lane.b32.xlu0 %v2151, 104
    %v2170 = vpop.permute.xlu0 %2169
    %s2173 = scalar_lea.vmem %s7, 64
    %v2174 = vld [vmem:[%s2173] sm:$0xff]
    %v2175 = vld [vmem:[%s2173 + $0x8] sm:$0xff]
    %v2176 = vld [vmem:[%s2173 + $0x10] sm:$0xff]
    %v2177 = vld [vmem:[%s2173 + $0x18] sm:$0xff]
    %v2178 = vpack.c.bf16 %v2175, %v2174
    %v2179 = vpack.c.bf16 %v2177, %v2176
    %s2180 = scalar_lea.vmem [#allocation13], 2
    %v2181 = vld [vmem:[%s2180] sm:$0x1]
    %v2183 = vperm.slane %v2181, 0
    %2185 = vmatpush.bf16.msra.mxu0 0
    %2186 = vmatpush.bf16.msra.mxu0 0
    %2187 = vmatpush.bf16.msra.mxu0 0
    %2188 = vmatpush.bf16.msra.mxu0 0
    %2189 = vmatpush.bf16.msra.mxu0 0
    %2190 = vmatpush.bf16.msra.mxu0 0
    %2191 = vmatpush.bf16.msra.mxu0 %v2179
    %2192 = vmatpush.bf16.msra.mxu0 %v2178
    %2193 = vmatmul.bf16.gmra.mxu0 %v2091
    %v2194 = vpop.f32.mrf.mxu0
    %v2195 = vadd.f32 %v2183, %v2194
    %v2196 = vpop.f32.mrf.mxu0
    %v2197 = vadd.f32 %v2183, %v2196
    %2198 = vdwg.mxu0
    %2201 = vrot.lane.b32.xlu0 %v2195, 120
    %v2202 = vpop.permute.xlu0 %2201
    %2203 = vrot.lane.b32.xlu0 %v2197, 120
    %v2204 = vpop.permute.xlu0 %2203
    %2207 = vrot.lane.b32.xlu0 %v2195, 112
    %v2208 = vpop.permute.xlu0 %2207
    %2209 = vrot.lane.b32.xlu0 %v2197, 112
    %v2210 = vpop.permute.xlu0 %2209
    %2213 = vrot.lane.b32.xlu0 %v2195, 104
    %v2214 = vpop.permute.xlu0 %2213
    %2215 = vrot.lane.b32.xlu0 %v2197, 104
    %v2216 = vpop.permute.xlu0 %2215
    %v2219 = vpack.c.bf16 %v2103, %v2103
    %v2220 = vpack.c.bf16 %v2105, %v2105
    %v2221 = vpack.c.bf16 %v2110, %v2110
    %v2222 = vpack.c.bf16 %v2112, %v2112
    %v2223 = vpack.c.bf16 %v2116, %v2116
    %v2224 = vpack.c.bf16 %v2118, %v2118
    %v2225 = vpack.c.bf16 %v2122, %v2122
    %v2226 = vpack.c.bf16 %v2124, %v2124
    %v2227 = vpack.c.bf16 %v2149, %v2149
    %v2228 = vpack.c.bf16 %v2151, %v2151
    %v2229 = vpack.c.bf16 %v2156, %v2156
    %v2230 = vpack.c.bf16 %v2158, %v2158
    %v2231 = vpack.c.bf16 %v2162, %v2162
    %v2232 = vpack.c.bf16 %v2164, %v2164
    %v2233 = vpack.c.bf16 %v2168, %v2168
    %v2234 = vpack.c.bf16 %v2170, %v2170
    %v2236 = vsel %vm532, %v2219, 0
    %v2239 = vsel %vm532, %v2227, 0
    %2241 = vmatpush.bf16.xpose.msra.mxu0 0
    %2242 = vmatpush.bf16.xpose.msra.mxu0 0
    %2243 = vmatpush.bf16.xpose.msra.mxu0 0
    %2244 = vmatpush.bf16.xpose.msra.mxu0 0
    %2245 = vmatpush.bf16.xpose.msra.mxu0 0
    %2246 = vmatpush.bf16.xpose.msra.mxu0 0
    %2247 = vmatpush.bf16.xpose.msra.mxu0 0
    %2248 = vmatpush.bf16.xpose.msra.mxu0 %v2239
    %2249 = vmatmul.bf16.gmra.mxu0 %v2236
    %v2250 = vpop.f32.mrf.mxu0
    %v2251 = vadd.f32 0.0, %v2250
    %v2252 = vpop.f32.mrf.mxu0
    %2253 = vdwg.mxu0
    %v2255 = vsel %vm532, %v2220, 0
    %v2258 = vsel %vm532, %v2228, 0
    %2260 = vmatpush.bf16.xpose.msra.mxu0 0
    %2261 = vmatpush.bf16.xpose.msra.mxu0 0
    %2262 = vmatpush.bf16.xpose.msra.mxu0 0
    %2263 = vmatpush.bf16.xpose.msra.mxu0 0
    %2264 = vmatpush.bf16.xpose.msra.mxu0 0
    %2265 = vmatpush.bf16.xpose.msra.mxu0 0
    %2266 = vmatpush.bf16.xpose.msra.mxu0 0
    %2267 = vmatpush.bf16.xpose.msra.mxu0 %v2258
    %2268 = vmatmul.bf16.gmra.mxu0 %v2255
    %v2269 = vpop.f32.mrf.mxu0
    %v2270 = vadd.f32 0.0, %v2269
    %v2271 = vpop.f32.mrf.mxu0
    %2272 = vdwg.mxu0
    %v2274 = vsel %vm532, %v2221, 0
    %v2277 = vsel %vm532, %v2229, 0
    %2279 = vmatpush.bf16.xpose.msra.mxu0 0
    %2280 = vmatpush.bf16.xpose.msra.mxu0 0
    %2281 = vmatpush.bf16.xpose.msra.mxu0 0
    %2282 = vmatpush.bf16.xpose.msra.mxu0 0
    %2283 = vmatpush.bf16.xpose.msra.mxu0 0
    %2284 = vmatpush.bf16.xpose.msra.mxu0 0
    %2285 = vmatpush.bf16.xpose.msra.mxu0 0
    %2286 = vmatpush.bf16.xpose.msra.mxu0 %v2277
    %2287 = vmatmul.bf16.gmra.mxu0 %v2274
    %v2288 = vpop.f32.mrf.mxu0
    %v2289 = vadd.f32 0.0, %v2288
    %v2290 = vpop.f32.mrf.mxu0
    %2291 = vdwg.mxu0
    %v2293 = vsel %vm532, %v2222, 0
    %v2296 = vsel %vm532, %v2230, 0
    %2298 = vmatpush.bf16.xpose.msra.mxu0 0
    %2299 = vmatpush.bf16.xpose.msra.mxu0 0
    %2300 = vmatpush.bf16.xpose.msra.mxu0 0
    %2301 = vmatpush.bf16.xpose.msra.mxu0 0
    %2302 = vmatpush.bf16.xpose.msra.mxu0 0
    %2303 = vmatpush.bf16.xpose.msra.mxu0 0
    %2304 = vmatpush.bf16.xpose.msra.mxu0 0
    %2305 = vmatpush.bf16.xpose.msra.mxu0 %v2296
    %2306 = vmatmul.bf16.gmra.mxu0 %v2293
    %v2307 = vpop.f32.mrf.mxu0
    %v2308 = vadd.f32 0.0, %v2307
    %v2309 = vpop.f32.mrf.mxu0
    %2310 = vdwg.mxu0
    %v2312 = vsel %vm532, %v2223, 0
    %v2315 = vsel %vm532, %v2231, 0
    %2317 = vmatpush.bf16.xpose.msra.mxu0 0
    %2318 = vmatpush.bf16.xpose.msra.mxu0 0
    %2319 = vmatpush.bf16.xpose.msra.mxu0 0
    %2320 = vmatpush.bf16.xpose.msra.mxu0 0
    %2321 = vmatpush.bf16.xpose.msra.mxu0 0
    %2322 = vmatpush.bf16.xpose.msra.mxu0 0
    %2323 = vmatpush.bf16.xpose.msra.mxu0 0
    %2324 = vmatpush.bf16.xpose.msra.mxu0 %v2315
    %2325 = vmatmul.bf16.gmra.mxu0 %v2312
    %v2326 = vpop.f32.mrf.mxu0
    %v2327 = vadd.f32 0.0, %v2326
    %v2328 = vpop.f32.mrf.mxu0
    %2329 = vdwg.mxu0
    %v2331 = vsel %vm532, %v2224, 0
    %v2334 = vsel %vm532, %v2232, 0
    %2336 = vmatpush.bf16.xpose.msra.mxu0 0
    %2337 = vmatpush.bf16.xpose.msra.mxu0 0
    %2338 = vmatpush.bf16.xpose.msra.mxu0 0
    %2339 = vmatpush.bf16.xpose.msra.mxu0 0
    %2340 = vmatpush.bf16.xpose.msra.mxu0 0
    %2341 = vmatpush.bf16.xpose.msra.mxu0 0
    %2342 = vmatpush.bf16.xpose.msra.mxu0 0
    %2343 = vmatpush.bf16.xpose.msra.mxu0 %v2334
    %2344 = vmatmul.bf16.gmra.mxu0 %v2331
    %v2345 = vpop.f32.mrf.mxu0
    %v2346 = vadd.f32 0.0, %v2345
    %v2347 = vpop.f32.mrf.mxu0
    %2348 = vdwg.mxu0
    %v2350 = vsel %vm532, %v2225, 0
    %v2353 = vsel %vm532, %v2233, 0
    %2355 = vmatpush.bf16.xpose.msra.mxu0 0
    %2356 = vmatpush.bf16.xpose.msra.mxu0 0
    %2357 = vmatpush.bf16.xpose.msra.mxu0 0
    %2358 = vmatpush.bf16.xpose.msra.mxu0 0
    %2359 = vmatpush.bf16.xpose.msra.mxu0 0
    %2360 = vmatpush.bf16.xpose.msra.mxu0 0
    %2361 = vmatpush.bf16.xpose.msra.mxu0 0
    %2362 = vmatpush.bf16.xpose.msra.mxu0 %v2353
    %2363 = vmatmul.bf16.gmra.mxu0 %v2350
    %v2364 = vpop.f32.mrf.mxu0
    %v2365 = vadd.f32 0.0, %v2364
    %v2366 = vpop.f32.mrf.mxu0
    %2367 = vdwg.mxu0
    %v2369 = vsel %vm532, %v2226, 0
    %v2372 = vsel %vm532, %v2234, 0
    %2374 = vmatpush.bf16.xpose.msra.mxu0 0
    %2375 = vmatpush.bf16.xpose.msra.mxu0 0
    %2376 = vmatpush.bf16.xpose.msra.mxu0 0
    %2377 = vmatpush.bf16.xpose.msra.mxu0 0
    %2378 = vmatpush.bf16.xpose.msra.mxu0 0
    %2379 = vmatpush.bf16.xpose.msra.mxu0 0
    %2380 = vmatpush.bf16.xpose.msra.mxu0 0
    %2381 = vmatpush.bf16.xpose.msra.mxu0 %v2372
    %2382 = vmatmul.bf16.gmra.mxu0 %v2369
    %v2383 = vpop.f32.mrf.mxu0
    %v2384 = vadd.f32 0.0, %v2383
    %v2385 = vpop.f32.mrf.mxu0
    %2386 = vdwg.mxu0
    %v2387 = vmul.f32 %v2251, 0.35355338
    %v2388 = vmul.f32 %v2270, 0.35355338
    %v2389 = vmul.f32 %v2289, 0.35355338
    %v2390 = vmul.f32 %v2308, 0.35355338
    %v2391 = vmul.f32 %v2327, 0.35355338
    %v2392 = vmul.f32 %v2346, 0.35355338
    %v2393 = vmul.f32 %v2365, 0.35355338
    %v2394 = vmul.f32 %v2384, 0.35355338
    %v2395 = vsel %vm697, %v2387, -1e+09
    %v2396 = vsel %vm698, %v2388, -1e+09
    %v2397 = vsel %vm697, %v2389, -1e+09
    %v2398 = vsel %vm698, %v2390, -1e+09
    %v2399 = vsel %vm697, %v2391, -1e+09
    %v2400 = vsel %vm698, %v2392, -1e+09
    %v2401 = vsel %vm697, %v2393, -1e+09
    %v2402 = vsel %vm698, %v2394, -1e+09
    %v2403 = vsel %vm532, %v2395, -inf
    %2404 = vmax.xlane.f32.xlu0 %v2403
    %v2405 = vpop.xlane.xlu0 %2404
    %v2406 = vsel %vm532, %v2396, -inf
    %2407 = vmax.xlane.f32.xlu0 %v2406
    %v2408 = vpop.xlane.xlu0 %2407
    %v2409 = vsel %vm532, %v2397, -inf
    %2410 = vmax.xlane.f32.xlu0 %v2409
    %v2411 = vpop.xlane.xlu0 %2410
    %v2412 = vsel %vm532, %v2398, -inf
    %2413 = vmax.xlane.f32.xlu0 %v2412
    %v2414 = vpop.xlane.xlu0 %2413
    %v2415 = vsel %vm532, %v2399, -inf
    %2416 = vmax.xlane.f32.xlu0 %v2415
    %v2417 = vpop.xlane.xlu0 %2416
    %v2418 = vsel %vm532, %v2400, -inf
    %2419 = vmax.xlane.f32.xlu0 %v2418
    %v2420 = vpop.xlane.xlu0 %2419
    %v2421 = vsel %vm532, %v2401, -inf
    %2422 = vmax.xlane.f32.xlu0 %v2421
    %v2423 = vpop.xlane.xlu0 %2422
    %v2424 = vsel %vm532, %v2402, -inf
    %2425 = vmax.xlane.f32.xlu0 %v2424
    %v2426 = vpop.xlane.xlu0 %2425
    %v2427 = vsub.f32 %v2395, %v2405
    %v2428 = vsub.f32 %v2396, %v2408
    %v2429 = vsub.f32 %v2397, %v2411
    %v2430 = vsub.f32 %v2398, %v2414
    %v2431 = vsub.f32 %v2399, %v2417
    %v2432 = vsub.f32 %v2400, %v2420
    %v2433 = vsub.f32 %v2401, %v2423
    %v2434 = vsub.f32 %v2402, %v2426
    %v2435 = vmul.f32 %v2427, 1.442695
    %v2436 = vpow.pop %v2435
    %v2437 = vmul.f32 %v2428, 1.442695
    %v2438 = vpow.pop %v2437
    %v2439 = vmul.f32 %v2429, 1.442695
    %v2440 = vpow.pop %v2439
    %v2441 = vmul.f32 %v2430, 1.442695
    %v2442 = vpow.pop %v2441
    %v2443 = vmul.f32 %v2431, 1.442695
    %v2444 = vpow.pop %v2443
    %v2445 = vmul.f32 %v2432, 1.442695
    %v2446 = vpow.pop %v2445
    %v2447 = vmul.f32 %v2433, 1.442695
    %v2448 = vpow.pop %v2447
    %v2449 = vmul.f32 %v2434, 1.442695
    %v2450 = vpow.pop %v2449
    %v2451 = vsel %vm532, %v2436, 0.0
    %2452 = vadd.xlane.f32.xlu0 %v2451
    %v2453 = vpop.xlane.xlu0 %2452
    %v2454 = vsel %vm532, %v2438, 0.0
    %2455 = vadd.xlane.f32.xlu0 %v2454
    %v2456 = vpop.xlane.xlu0 %2455
    %v2457 = vsel %vm532, %v2440, 0.0
    %2458 = vadd.xlane.f32.xlu0 %v2457
    %v2459 = vpop.xlane.xlu0 %2458
    %v2460 = vsel %vm532, %v2442, 0.0
    %2461 = vadd.xlane.f32.xlu0 %v2460
    %v2462 = vpop.xlane.xlu0 %2461
    %v2463 = vsel %vm532, %v2444, 0.0
    %2464 = vadd.xlane.f32.xlu0 %v2463
    %v2465 = vpop.xlane.xlu0 %2464
    %v2466 = vsel %vm532, %v2446, 0.0
    %2467 = vadd.xlane.f32.xlu0 %v2466
    %v2468 = vpop.xlane.xlu0 %2467
    %v2469 = vsel %vm532, %v2448, 0.0
    %2470 = vadd.xlane.f32.xlu0 %v2469
    %v2471 = vpop.xlane.xlu0 %2470
    %v2472 = vsel %vm532, %v2450, 0.0
    %2473 = vadd.xlane.f32.xlu0 %v2472
    %v2474 = vpop.xlane.xlu0 %2473
    %v2475 = vrcp.pop %v2453
    %v2476 = vrcp.pop %v2456
    %v2477 = vrcp.pop %v2459
    %v2478 = vrcp.pop %v2462
    %v2479 = vrcp.pop %v2465
    %v2480 = vrcp.pop %v2468
    %v2481 = vrcp.pop %v2471
    %v2482 = vrcp.pop %v2474
    %v2483 = vmul.f32 %v2436, %v2475
    %v2484 = vmul.f32 %v2438, %v2476
    %v2485 = vmul.f32 %v2440, %v2477
    %v2486 = vmul.f32 %v2442, %v2478
    %v2487 = vmul.f32 %v2444, %v2479
    %v2488 = vmul.f32 %v2446, %v2480
    %v2489 = vmul.f32 %v2448, %v2481
    %v2490 = vmul.f32 %v2450, %v2482
    %v2491 = vpack.c.bf16 %v2483, %v2483
    %v2492 = vpack.c.bf16 %v2484, %v2484
    %v2493 = vpack.c.bf16 %v2485, %v2485
    %v2494 = vpack.c.bf16 %v2486, %v2486
    %v2495 = vpack.c.bf16 %v2487, %v2487
    %v2496 = vpack.c.bf16 %v2488, %v2488
    %v2497 = vpack.c.bf16 %v2489, %v2489
    %v2498 = vpack.c.bf16 %v2490, %v2490
    %v2499 = vpack.c.bf16 %v2195, %v2195
    %v2500 = vpack.c.bf16 %v2197, %v2197
    %v2501 = vpack.c.bf16 %v2202, %v2202
    %v2502 = vpack.c.bf16 %v2204, %v2204
    %v2503 = vpack.c.bf16 %v2208, %v2208
    %v2504 = vpack.c.bf16 %v2210, %v2210
    %v2505 = vpack.c.bf16 %v2214, %v2214
    %v2506 = vpack.c.bf16 %v2216, %v2216
    %v2508 = vsel %vm532, %v2491, 0
    %v2511 = vsel %vm814, %v2499, 0
    %2513 = vmatpush.bf16.msra.mxu0 0
    %2514 = vmatpush.bf16.msra.mxu0 0
    %2515 = vmatpush.bf16.msra.mxu0 0
    %2516 = vmatpush.bf16.msra.mxu0 0
    %2517 = vmatpush.bf16.msra.mxu0 0
    %2518 = vmatpush.bf16.msra.mxu0 0
    %2519 = vmatpush.bf16.msra.mxu0 0
    %2520 = vmatpush.bf16.msra.mxu0 %v2511
    %2521 = vmatmul.bf16.gmra.mxu0 %v2508
    %v2522 = vpop.f32.mrf.mxu0
    %v2523 = vadd.f32 0.0, %v2522
    %v2524 = vpop.f32.mrf.mxu0
    %2525 = vdwg.mxu0
    %v2527 = vsel %vm532, %v2492, 0
    %v2530 = vsel %vm814, %v2500, 0
    %2532 = vmatpush.bf16.msra.mxu0 0
    %2533 = vmatpush.bf16.msra.mxu0 0
    %2534 = vmatpush.bf16.msra.mxu0 0
    %2535 = vmatpush.bf16.msra.mxu0 0
    %2536 = vmatpush.bf16.msra.mxu0 0
    %2537 = vmatpush.bf16.msra.mxu0 0
    %2538 = vmatpush.bf16.msra.mxu0 0
    %2539 = vmatpush.bf16.msra.mxu0 %v2530
    %2540 = vmatmul.bf16.gmra.mxu0 %v2527
    %v2541 = vpop.f32.mrf.mxu0
    %v2542 = vadd.f32 0.0, %v2541
    %v2543 = vpop.f32.mrf.mxu0
    %2544 = vdwg.mxu0
    %v2546 = vsel %vm532, %v2493, 0
    %v2549 = vsel %vm814, %v2501, 0
    %2551 = vmatpush.bf16.msra.mxu0 0
    %2552 = vmatpush.bf16.msra.mxu0 0
    %2553 = vmatpush.bf16.msra.mxu0 0
    %2554 = vmatpush.bf16.msra.mxu0 0
    %2555 = vmatpush.bf16.msra.mxu0 0
    %2556 = vmatpush.bf16.msra.mxu0 0
    %2557 = vmatpush.bf16.msra.mxu0 0
    %2558 = vmatpush.bf16.msra.mxu0 %v2549
    %2559 = vmatmul.bf16.gmra.mxu0 %v2546
    %v2560 = vpop.f32.mrf.mxu0
    %v2561 = vadd.f32 0.0, %v2560
    %v2562 = vpop.f32.mrf.mxu0
    %2563 = vdwg.mxu0
    %v2565 = vsel %vm532, %v2494, 0
    %v2568 = vsel %vm814, %v2502, 0
    %2570 = vmatpush.bf16.msra.mxu0 0
    %2571 = vmatpush.bf16.msra.mxu0 0
    %2572 = vmatpush.bf16.msra.mxu0 0
    %2573 = vmatpush.bf16.msra.mxu0 0
    %2574 = vmatpush.bf16.msra.mxu0 0
    %2575 = vmatpush.bf16.msra.mxu0 0
    %2576 = vmatpush.bf16.msra.mxu0 0
    %2577 = vmatpush.bf16.msra.mxu0 %v2568
    %2578 = vmatmul.bf16.gmra.mxu0 %v2565
    %v2579 = vpop.f32.mrf.mxu0
    %v2580 = vadd.f32 0.0, %v2579
    %v2581 = vpop.f32.mrf.mxu0
    %2582 = vdwg.mxu0
    %v2584 = vsel %vm532, %v2495, 0
    %v2587 = vsel %vm814, %v2503, 0
    %2589 = vmatpush.bf16.msra.mxu0 0
    %2590 = vmatpush.bf16.msra.mxu0 0
    %2591 = vmatpush.bf16.msra.mxu0 0
    %2592 = vmatpush.bf16.msra.mxu0 0
    %2593 = vmatpush.bf16.msra.mxu0 0
    %2594 = vmatpush.bf16.msra.mxu0 0
    %2595 = vmatpush.bf16.msra.mxu0 0
    %2596 = vmatpush.bf16.msra.mxu0 %v2587
    %2597 = vmatmul.bf16.gmra.mxu0 %v2584
    %v2598 = vpop.f32.mrf.mxu0
    %v2599 = vadd.f32 0.0, %v2598
    %v2600 = vpop.f32.mrf.mxu0
    %2601 = vdwg.mxu0
    %v2603 = vsel %vm532, %v2496, 0
    %v2606 = vsel %vm814, %v2504, 0
    %2608 = vmatpush.bf16.msra.mxu0 0
    %2609 = vmatpush.bf16.msra.mxu0 0
    %2610 = vmatpush.bf16.msra.mxu0 0
    %2611 = vmatpush.bf16.msra.mxu0 0
    %2612 = vmatpush.bf16.msra.mxu0 0
    %2613 = vmatpush.bf16.msra.mxu0 0
    %2614 = vmatpush.bf16.msra.mxu0 0
    %2615 = vmatpush.bf16.msra.mxu0 %v2606
    %2616 = vmatmul.bf16.gmra.mxu0 %v2603
    %v2617 = vpop.f32.mrf.mxu0
    %v2618 = vadd.f32 0.0, %v2617
    %v2619 = vpop.f32.mrf.mxu0
    %2620 = vdwg.mxu0
    %v2622 = vsel %vm532, %v2497, 0
    %v2625 = vsel %vm814, %v2505, 0
    %2627 = vmatpush.bf16.msra.mxu0 0
    %2628 = vmatpush.bf16.msra.mxu0 0
    %2629 = vmatpush.bf16.msra.mxu0 0
    %2630 = vmatpush.bf16.msra.mxu0 0
    %2631 = vmatpush.bf16.msra.mxu0 0
    %2632 = vmatpush.bf16.msra.mxu0 0
    %2633 = vmatpush.bf16.msra.mxu0 0
    %2634 = vmatpush.bf16.msra.mxu0 %v2625
    %2635 = vmatmul.bf16.gmra.mxu0 %v2622
    %v2636 = vpop.f32.mrf.mxu0
    %v2637 = vadd.f32 0.0, %v2636
    %v2638 = vpop.f32.mrf.mxu0
    %2639 = vdwg.mxu0
    %v2641 = vsel %vm532, %v2498, 0
    %v2644 = vsel %vm814, %v2506, 0
    %2646 = vmatpush.bf16.msra.mxu0 0
    %2647 = vmatpush.bf16.msra.mxu0 0
    %2648 = vmatpush.bf16.msra.mxu0 0
    %2649 = vmatpush.bf16.msra.mxu0 0
    %2650 = vmatpush.bf16.msra.mxu0 0
    %2651 = vmatpush.bf16.msra.mxu0 0
    %2652 = vmatpush.bf16.msra.mxu0 0
    %2653 = vmatpush.bf16.msra.mxu0 %v2644
    %2654 = vmatmul.bf16.gmra.mxu0 %v2641
    %v2655 = vpop.f32.mrf.mxu0
    %v2656 = vadd.f32 0.0, %v2655
    %v2657 = vpop.f32.mrf.mxu0
    %2658 = vdwg.mxu0
    %2661 = vrot.lane.b32.xlu0 %v2561, 8
    %v2662 = vpop.permute.xlu0 %2661
    %2663 = vrot.lane.b32.xlu0 %v2580, 8
    %v2664 = vpop.permute.xlu0 %2663
    %2669 = vrot.lane.b32.xlu0 %v2599, 16
    %v2670 = vpop.permute.xlu0 %2669
    %2671 = vrot.lane.b32.xlu0 %v2618, 16
    %v2672 = vpop.permute.xlu0 %2671
    %2677 = vrot.lane.b32.xlu0 %v2637, 24
    %v2678 = vpop.permute.xlu0 %2677
    %2679 = vrot.lane.b32.xlu0 %v2656, 24
    %v2680 = vpop.permute.xlu0 %2679
    %v2683 = vsel %vm532, %v2523, %v2662
    %v2684 = vsel %vm532, %v2542, %v2664
    %v2685 = vsel %vm990, %v2683, %v2670
    %v2686 = vsel %vm990, %v2684, %v2672
    %v2687 = vsel %vm993, %v2685, %v2678
    %v2688 = vsel %vm993, %v2686, %v2680
    %s2689 = scalar_lea.vmem [#allocation14], 64
    %v2690 = vld [vmem:[%s2689] sm:$0xff]
    %v2691 = vld [vmem:[%s2689 + $0x8] sm:$0xff]
    %v2692 = vld [vmem:[%s2689 + $0x10] sm:$0xff]
    %v2693 = vld [vmem:[%s2689 + $0x18] sm:$0xff]
    %v2694 = vpack.c.bf16 %v2688, %v2687
    %v2695 = vpack.c.bf16 %v2691, %v2690
    %v2696 = vpack.c.bf16 %v2693, %v2692
    %v2698 = vsel %vm318, %v2694, 0
    %2700 = vmatpush.bf16.msra.mxu0 0
    %2701 = vmatpush.bf16.msra.mxu0 0
    %2702 = vmatpush.bf16.msra.mxu0 0
    %2703 = vmatpush.bf16.msra.mxu0 0
    %2704 = vmatpush.bf16.msra.mxu0 0
    %2705 = vmatpush.bf16.msra.mxu0 0
    %2706 = vmatpush.bf16.msra.mxu0 %v2696
    %2707 = vmatpush.bf16.msra.mxu0 %v2695
    %2708 = vmatmul.bf16.gmra.mxu0 %v2698
    %v2709 = vpop.f32.mrf.mxu0
    %v2710 = vadd.f32 0.0, %v2709
    %v2711 = vpop.f32.mrf.mxu0
    %v2712 = vadd.f32 0.0, %v2711
    %2713 = vdwg.mxu0
    %v2714 = vadd.f32 %v2017, %v2710
    %v2715 = vadd.f32 %v2018, %v2712
    %s2716 = scalar_lea.vmem [#allocation16], 2
    %v2717 = vld [vmem:[%s2716] sm:$0x1]
    %v2719 = vperm.slane %v2717, 0
    %v2721 = vadd.f32 %v2714, %v2719
    %v2722 = vadd.f32 %v2715, %v2719
    %s2723 = scalar_lea.vmem [#allocation17], 2
    %v2724 = vld [vmem:[%s2723] sm:$0x1]
    %s2725 = scalar_lea.vmem [#allocation19], 2
    %v2726 = vld [vmem:[%s2725] sm:$0x1]
    %v2727 = vsel %vm318, %v2721, 0.0
    %2728 = vadd.xlane.f32.xlu0 %v2727
    %v2729 = vpop.xlane.xlu0 %2728
    %v2730 = vsel %vm318, %v2722, 0.0
    %2731 = vadd.xlane.f32.xlu0 %v2730
    %v2732 = vpop.xlane.xlu0 %2731
    %v2733 = vmul.f32 %v2729, %v331
    %v2734 = vmul.f32 %v2732, %v331
    %v2735 = vsub.f32 %v2721, %v2733
    %v2736 = vsub.f32 %v2722, %v2734
    %v2737 = vmul.f32 %v2735, %v2735
    %v2738 = vmul.f32 %v2736, %v2736
    %v2739 = vsel %vm318, %v2737, 0.0
    %2740 = vadd.xlane.f32.xlu0 %v2739
    %v2741 = vpop.xlane.xlu0 %2740
    %v2742 = vsel %vm318, %v2738, 0.0
    %2743 = vadd.xlane.f32.xlu0 %v2742
    %v2744 = vpop.xlane.xlu0 %2743
    %v2745 = vmul.f32 %v2741, %v331
    %v2746 = vmul.f32 %v2744, %v331
    %v2747 = vadd.f32 %v2745, 1e-05
    %v2748 = vadd.f32 %v2746, 1e-05
    %v2749 = vrsqrt.pop %v2747
    %v2750 = vmul.f32 %v2749, %v2747
    %v2751 = vmul.f32 %v2750, %v2749
    %v2752 = vmul.f32 0.5, %v2751
    %v2753 = vsub.f32 1.5, %v2752
    %v2754 = vmul.f32 %v2749, %v2753
    %vm2755 = vweird.f32 %v2747
    %vm2756 = vweird.f32 %v2749
    %vm2757 = vmor %vm2755, %vm2756
    %v2758 = vsel %vm2757, %v2749, %v2754
    %v2759 = vrsqrt.pop %v2748
    %v2760 = vmul.f32 %v2759, %v2748
    %v2761 = vmul.f32 %v2760, %v2759
    %v2762 = vmul.f32 0.5, %v2761
    %v2763 = vsub.f32 1.5, %v2762
    %v2764 = vmul.f32 %v2759, %v2763
    %vm2765 = vweird.f32 %v2748
    %vm2766 = vweird.f32 %v2759
    %vm2767 = vmor %vm2765, %vm2766
    %v2768 = vsel %vm2767, %v2759, %v2764
    %v2769 = vmul.f32 %v2735, %v2758
    %v2770 = vmul.f32 %v2736, %v2768
    %v2772 = vperm.slane %v2724, 0
    %v2774 = vmul.f32 %v2769, %v2772
    %v2775 = vmul.f32 %v2770, %v2772
    %v2777 = vperm.slane %v2726, 0
    %v2779 = vadd.f32 %v2774, %v2777
    %v2780 = vadd.f32 %v2775, %v2777
    %s2781 = scalar_lea.vmem [#allocation20], 64
    %v2782 = vld [vmem:[%s2781] sm:$0xff]
    %v2783 = vld [vmem:[%s2781 + $0x8] sm:$0xff]
    %v2784 = vld [vmem:[%s2781 + $0x10] sm:$0xff]
    %v2785 = vld [vmem:[%s2781 + $0x18] sm:$0xff]
    %v2786 = vpack.c.bf16 %v2780, %v2779
    %v2787 = vpack.c.bf16 %v2783, %v2782
    %v2788 = vpack.c.bf16 %v2785, %v2784
    %s2789 = scalar_lea.vmem [#allocation22], 2
    %v2790 = vld [vmem:[%s2789] sm:$0x1]
    %v2792 = vperm.slane %v2790, 0
    %v2795 = vsel %vm318, %v2786, 0
    %2797 = vmatpush.bf16.msra.mxu0 0
    %2798 = vmatpush.bf16.msra.mxu0 0
    %2799 = vmatpush.bf16.msra.mxu0 0
    %2800 = vmatpush.bf16.msra.mxu0 0
    %2801 = vmatpush.bf16.msra.mxu0 0
    %2802 = vmatpush.bf16.msra.mxu0 0
    %2803 = vmatpush.bf16.msra.mxu0 %v2788
    %2804 = vmatpush.bf16.msra.mxu0 %v2787
    %2805 = vmatmul.bf16.gmra.mxu0 %v2795
    %v2806 = vpop.f32.mrf.mxu0
    %v2807 = vadd.f32 %v2792, %v2806
    %v2808 = vpop.f32.mrf.mxu0
    %v2809 = vadd.f32 %v2792, %v2808
    %2810 = vdwg.mxu0
    %v2811 = vmul.f32 %v2807, %v2807
    %v2812 = vmul.f32 %v2809, %v2809
    %v2813 = vmul.f32 %v2807, %v2811
    %v2814 = vmul.f32 %v2809, %v2812
    %v2815 = vmul.f32 %v2813, 0.044715
    %v2816 = vmul.f32 %v2814, 0.044715
    %v2817 = vadd.f32 %v2807, %v2815
    %v2818 = vadd.f32 %v2809, %v2816
    %v2819 = vmul.f32 %v2817, 0.7978846
    %v2820 = vmul.f32 %v2818, 0.7978846
    %v2821 = vtanh.pop %v2819
    %v2822 = vtanh.pop %v2820
    %v2823 = vadd.f32 %v2821, 1.0
    %v2824 = vadd.f32 %v2822, 1.0
    %v2825 = vmul.f32 %v2823, 0.5
    %v2826 = vmul.f32 %v2824, 0.5
    %v2827 = vmul.f32 %v2807, %v2825
    %v2828 = vmul.f32 %v2809, %v2826
    %s2829 = scalar_lea.vmem %s17, 128
    %v2830 = vld [vmem:[%s2829] sm:$0xff]
    %v2831 = vld [vmem:[%s2829 + $0x8] sm:$0xff]
    %v2832 = vld [vmem:[%s2829 + $0x10] sm:$0xff]
    %v2833 = vld [vmem:[%s2829 + $0x18] sm:$0xff]
    %v2834 = vld [vmem:[%s2829 + $0x20] sm:$0xff]
    %v2835 = vld [vmem:[%s2829 + $0x28] sm:$0xff]
    %v2836 = vld [vmem:[%s2829 + $0x30] sm:$0xff]
    %v2837 = vld [vmem:[%s2829 + $0x38] sm:$0xff]
    %v2838 = vpack.c.bf16 %v2828, %v2827
    %v2839 = vpack.c.bf16 %v2831, %v2830
    %v2840 = vpack.c.bf16 %v2833, %v2832
    %v2841 = vpack.c.bf16 %v2835, %v2834
    %v2842 = vpack.c.bf16 %v2837, %v2836
    %v2844 = vsel %vm1143, %v2838, 0
    %2846 = vmatpush.bf16.msra.mxu0 0
    %2847 = vmatpush.bf16.msra.mxu0 0
    %2848 = vmatpush.bf16.msra.mxu0 0
    %2849 = vmatpush.bf16.msra.mxu0 0
    %2850 = vmatpush.bf16.msra.mxu0 %v2842
    %2851 = vmatpush.bf16.msra.mxu0 %v2841
    %2852 = vmatpush.bf16.msra.mxu0 %v2840
    %2853 = vmatpush.bf16.msra.mxu0 %v2839
    %2854 = vmatmul.bf16.gmra.mxu0 %v2844
    %v2855 = vpop.f32.mrf.mxu0
    %v2856 = vadd.f32 0.0, %v2855
    %v2857 = vpop.f32.mrf.mxu0
    %v2858 = vadd.f32 0.0, %v2857
    %2859 = vdwg.mxu0
    %v2860 = vadd.f32 %v2721, %v2856
    %v2861 = vadd.f32 %v2722, %v2858
    %s2862 = scalar_lea.vmem [#allocation23], 2
    %v2863 = vld [vmem:[%s2862] sm:$0x1]
    %v2865 = vperm.slane %v2863, 0
    %v2867 = vadd.f32 %v2860, %v2865
    %v2868 = vadd.f32 %v2861, %v2865
    %s2869 = scalar_lea.vmem [#allocation7], 3
    %v2870 = vld [vmem:[%s2869] sm:$0x1]
    %s2871 = scalar_lea.vmem [#allocation8], 3
    %v2872 = vld [vmem:[%s2871] sm:$0x1]
    %v2873 = vsel %vm318, %v2867, 0.0
    %2874 = vadd.xlane.f32.xlu0 %v2873
    %v2875 = vpop.xlane.xlu0 %2874
    %v2876 = vsel %vm318, %v2868, 0.0
    %2877 = vadd.xlane.f32.xlu0 %v2876
    %v2878 = vpop.xlane.xlu0 %2877
    %v2879 = vmul.f32 %v2875, %v331
    %v2880 = vmul.f32 %v2878, %v331
    %v2881 = vsub.f32 %v2867, %v2879
    %v2882 = vsub.f32 %v2868, %v2880
    %v2883 = vmul.f32 %v2881, %v2881
    %v2884 = vmul.f32 %v2882, %v2882
    %v2885 = vsel %vm318, %v2883, 0.0
    %2886 = vadd.xlane.f32.xlu0 %v2885
    %v2887 = vpop.xlane.xlu0 %2886
    %v2888 = vsel %vm318, %v2884, 0.0
    %2889 = vadd.xlane.f32.xlu0 %v2888
    %v2890 = vpop.xlane.xlu0 %2889
    %v2891 = vmul.f32 %v2887, %v331
    %v2892 = vmul.f32 %v2890, %v331
    %v2893 = vadd.f32 %v2891, 1e-05
    %v2894 = vadd.f32 %v2892, 1e-05
    %v2895 = vrsqrt.pop %v2893
    %v2896 = vmul.f32 %v2895, %v2893
    %v2897 = vmul.f32 %v2896, %v2895
    %v2898 = vmul.f32 0.5, %v2897
    %v2899 = vsub.f32 1.5, %v2898
    %v2900 = vmul.f32 %v2895, %v2899
    %vm2901 = vweird.f32 %v2893
    %vm2902 = vweird.f32 %v2895
    %vm2903 = vmor %vm2901, %vm2902
    %v2904 = vsel %vm2903, %v2895, %v2900
    %v2905 = vrsqrt.pop %v2894
    %v2906 = vmul.f32 %v2905, %v2894
    %v2907 = vmul.f32 %v2906, %v2905
    %v2908 = vmul.f32 0.5, %v2907
    %v2909 = vsub.f32 1.5, %v2908
    %v2910 = vmul.f32 %v2905, %v2909
    %vm2911 = vweird.f32 %v2894
    %vm2912 = vweird.f32 %v2905
    %vm2913 = vmor %vm2911, %vm2912
    %v2914 = vsel %vm2913, %v2905, %v2910
    %v2915 = vmul.f32 %v2881, %v2904
    %v2916 = vmul.f32 %v2882, %v2914
    %v2918 = vperm.slane %v2870, 0
    %v2920 = vmul.f32 %v2915, %v2918
    %v2921 = vmul.f32 %v2916, %v2918
    %v2923 = vperm.slane %v2872, 0
    %v2925 = vadd.f32 %v2920, %v2923
    %v2926 = vadd.f32 %v2921, %v2923
    %s2927 = scalar_lea.vmem %s5, 96
    %v2928 = vld [vmem:[%s2927] sm:$0xff]
    %v2929 = vld [vmem:[%s2927 + $0x8] sm:$0xff]
    %v2930 = vld [vmem:[%s2927 + $0x10] sm:$0xff]
    %v2931 = vld [vmem:[%s2927 + $0x18] sm:$0xff]
    %v2932 = vpack.c.bf16 %v2926, %v2925
    %v2933 = vpack.c.bf16 %v2929, %v2928
    %v2934 = vpack.c.bf16 %v2931, %v2930
    %s2935 = scalar_lea.vmem [#allocation10], 3
    %v2936 = vld [vmem:[%s2935] sm:$0x1]
    %v2938 = vperm.slane %v2936, 0
    %v2941 = vsel %vm318, %v2932, 0
    %2943 = vmatpush.bf16.msra.mxu0 0
    %2944 = vmatpush.bf16.msra.mxu0 0
    %2945 = vmatpush.bf16.msra.mxu0 0
    %2946 = vmatpush.bf16.msra.mxu0 0
    %2947 = vmatpush.bf16.msra.mxu0 0
    %2948 = vmatpush.bf16.msra.mxu0 0
    %2949 = vmatpush.bf16.msra.mxu0 %v2934
    %2950 = vmatpush.bf16.msra.mxu0 %v2933
    %2951 = vmatmul.bf16.gmra.mxu0 %v2941
    %v2952 = vpop.f32.mrf.mxu0
    %v2953 = vadd.f32 %v2938, %v2952
    %v2954 = vpop.f32.mrf.mxu0
    %v2955 = vadd.f32 %v2938, %v2954
    %2956 = vdwg.mxu0
    %2959 = vrot.lane.b32.xlu0 %v2953, 120
    %v2960 = vpop.permute.xlu0 %2959
    %2961 = vrot.lane.b32.xlu0 %v2955, 120
    %v2962 = vpop.permute.xlu0 %2961
    %2965 = vrot.lane.b32.xlu0 %v2953, 112
    %v2966 = vpop.permute.xlu0 %2965
    %2967 = vrot.lane.b32.xlu0 %v2955, 112
    %v2968 = vpop.permute.xlu0 %2967
    %2971 = vrot.lane.b32.xlu0 %v2953, 104
    %v2972 = vpop.permute.xlu0 %2971
    %2973 = vrot.lane.b32.xlu0 %v2955, 104
    %v2974 = vpop.permute.xlu0 %2973
    %s2977 = scalar_lea.vmem %s6, 96
    %v2978 = vld [vmem:[%s2977] sm:$0xff]
    %v2979 = vld [vmem:[%s2977 + $0x8] sm:$0xff]
    %v2980 = vld [vmem:[%s2977 + $0x10] sm:$0xff]
    %v2981 = vld [vmem:[%s2977 + $0x18] sm:$0xff]
    %v2982 = vpack.c.bf16 %v2979, %v2978
    %v2983 = vpack.c.bf16 %v2981, %v2980
    %s2984 = scalar_lea.vmem [#allocation11], 3
    %v2985 = vld [vmem:[%s2984] sm:$0x1]
    %v2987 = vperm.slane %v2985, 0
    %2989 = vmatpush.bf16.msra.mxu0 0
    %2990 = vmatpush.bf16.msra.mxu0 0
    %2991 = vmatpush.bf16.msra.mxu0 0
    %2992 = vmatpush.bf16.msra.mxu0 0
    %2993 = vmatpush.bf16.msra.mxu0 0
    %2994 = vmatpush.bf16.msra.mxu0 0
    %2995 = vmatpush.bf16.msra.mxu0 %v2983
    %2996 = vmatpush.bf16.msra.mxu0 %v2982
    %2997 = vmatmul.bf16.gmra.mxu0 %v2941
    %v2998 = vpop.f32.mrf.mxu0
    %v2999 = vadd.f32 %v2987, %v2998
    %v3000 = vpop.f32.mrf.mxu0
    %v3001 = vadd.f32 %v2987, %v3000
    %3002 = vdwg.mxu0
    %3005 = vrot.lane.b32.xlu0 %v2999, 120
    %v3006 = vpop.permute.xlu0 %3005
    %3007 = vrot.lane.b32.xlu0 %v3001, 120
    %v3008 = vpop.permute.xlu0 %3007
    %3011 = vrot.lane.b32.xlu0 %v2999, 112
    %v3012 = vpop.permute.xlu0 %3011
    %3013 = vrot.lane.b32.xlu0 %v3001, 112
    %v3014 = vpop.permute.xlu0 %3013
    %3017 = vrot.lane.b32.xlu0 %v2999, 104
    %v3018 = vpop.permute.xlu0 %3017
    %3019 = vrot.lane.b32.xlu0 %v3001, 104
    %v3020 = vpop.permute.xlu0 %3019
    %s3023 = scalar_lea.vmem %s7, 96
    %v3024 = vld [vmem:[%s3023] sm:$0xff]
    %v3025 = vld [vmem:[%s3023 + $0x8] sm:$0xff]
    %v3026 = vld [vmem:[%s3023 + $0x10] sm:$0xff]
    %v3027 = vld [vmem:[%s3023 + $0x18] sm:$0xff]
    %v3028 = vpack.c.bf16 %v3025, %v3024
    %v3029 = vpack.c.bf16 %v3027, %v3026
    %s3030 = scalar_lea.vmem [#allocation13], 3
    %v3031 = vld [vmem:[%s3030] sm:$0x1]
    %v3033 = vperm.slane %v3031, 0
    %3035 = vmatpush.bf16.msra.mxu0 0
    %3036 = vmatpush.bf16.msra.mxu0 0
    %3037 = vmatpush.bf16.msra.mxu0 0
    %3038 = vmatpush.bf16.msra.mxu0 0
    %3039 = vmatpush.bf16.msra.mxu0 0
    %3040 = vmatpush.bf16.msra.mxu0 0
    %3041 = vmatpush.bf16.msra.mxu0 %v3029
    %3042 = vmatpush.bf16.msra.mxu0 %v3028
    %3043 = vmatmul.bf16.gmra.mxu0 %v2941
    %v3044 = vpop.f32.mrf.mxu0
    %v3045 = vadd.f32 %v3033, %v3044
    %v3046 = vpop.f32.mrf.mxu0
    %v3047 = vadd.f32 %v3033, %v3046
    %3048 = vdwg.mxu0
    %3051 = vrot.lane.b32.xlu0 %v3045, 120
    %v3052 = vpop.permute.xlu0 %3051
    %3053 = vrot.lane.b32.xlu0 %v3047, 120
    %v3054 = vpop.permute.xlu0 %3053
    %3057 = vrot.lane.b32.xlu0 %v3045, 112
    %v3058 = vpop.permute.xlu0 %3057
    %3059 = vrot.lane.b32.xlu0 %v3047, 112
    %v3060 = vpop.permute.xlu0 %3059
    %3063 = vrot.lane.b32.xlu0 %v3045, 104
    %v3064 = vpop.permute.xlu0 %3063
    %3065 = vrot.lane.b32.xlu0 %v3047, 104
    %v3066 = vpop.permute.xlu0 %3065
    %v3069 = vpack.c.bf16 %v2953, %v2953
    %v3070 = vpack.c.bf16 %v2955, %v2955
    %v3071 = vpack.c.bf16 %v2960, %v2960
    %v3072 = vpack.c.bf16 %v2962, %v2962
    %v3073 = vpack.c.bf16 %v2966, %v2966
    %v3074 = vpack.c.bf16 %v2968, %v2968
    %v3075 = vpack.c.bf16 %v2972, %v2972
    %v3076 = vpack.c.bf16 %v2974, %v2974
    %v3077 = vpack.c.bf16 %v2999, %v2999
    %v3078 = vpack.c.bf16 %v3001, %v3001
    %v3079 = vpack.c.bf16 %v3006, %v3006
    %v3080 = vpack.c.bf16 %v3008, %v3008
    %v3081 = vpack.c.bf16 %v3012, %v3012
    %v3082 = vpack.c.bf16 %v3014, %v3014
    %v3083 = vpack.c.bf16 %v3018, %v3018
    %v3084 = vpack.c.bf16 %v3020, %v3020
    %v3086 = vsel %vm532, %v3069, 0
    %v3089 = vsel %vm532, %v3077, 0
    %3091 = vmatpush.bf16.xpose.msra.mxu0 0
    %3092 = vmatpush.bf16.xpose.msra.mxu0 0
    %3093 = vmatpush.bf16.xpose.msra.mxu0 0
    %3094 = vmatpush.bf16.xpose.msra.mxu0 0
    %3095 = vmatpush.bf16.xpose.msra.mxu0 0
    %3096 = vmatpush.bf16.xpose.msra.mxu0 0
    %3097 = vmatpush.bf16.xpose.msra.mxu0 0
    %3098 = vmatpush.bf16.xpose.msra.mxu0 %v3089
    %3099 = vmatmul.bf16.gmra.mxu0 %v3086
    %v3100 = vpop.f32.mrf.mxu0
    %v3101 = vadd.f32 0.0, %v3100
    %v3102 = vpop.f32.mrf.mxu0
    %3103 = vdwg.mxu0
    %v3105 = vsel %vm532, %v3070, 0
    %v3108 = vsel %vm532, %v3078, 0
    %3110 = vmatpush.bf16.xpose.msra.mxu0 0
    %3111 = vmatpush.bf16.xpose.msra.mxu0 0
    %3112 = vmatpush.bf16.xpose.msra.mxu0 0
    %3113 = vmatpush.bf16.xpose.msra.mxu0 0
    %3114 = vmatpush.bf16.xpose.msra.mxu0 0
    %3115 = vmatpush.bf16.xpose.msra.mxu0 0
    %3116 = vmatpush.bf16.xpose.msra.mxu0 0
    %3117 = vmatpush.bf16.xpose.msra.mxu0 %v3108
    %3118 = vmatmul.bf16.gmra.mxu0 %v3105
    %v3119 = vpop.f32.mrf.mxu0
    %v3120 = vadd.f32 0.0, %v3119
    %v3121 = vpop.f32.mrf.mxu0
    %3122 = vdwg.mxu0
    %v3124 = vsel %vm532, %v3071, 0
    %v3127 = vsel %vm532, %v3079, 0
    %3129 = vmatpush.bf16.xpose.msra.mxu0 0
    %3130 = vmatpush.bf16.xpose.msra.mxu0 0
    %3131 = vmatpush.bf16.xpose.msra.mxu0 0
    %3132 = vmatpush.bf16.xpose.msra.mxu0 0
    %3133 = vmatpush.bf16.xpose.msra.mxu0 0
    %3134 = vmatpush.bf16.xpose.msra.mxu0 0
    %3135 = vmatpush.bf16.xpose.msra.mxu0 0
    %3136 = vmatpush.bf16.xpose.msra.mxu0 %v3127
    %3137 = vmatmul.bf16.gmra.mxu0 %v3124
    %v3138 = vpop.f32.mrf.mxu0
    %v3139 = vadd.f32 0.0, %v3138
    %v3140 = vpop.f32.mrf.mxu0
    %3141 = vdwg.mxu0
    %v3143 = vsel %vm532, %v3072, 0
    %v3146 = vsel %vm532, %v3080, 0
    %3148 = vmatpush.bf16.xpose.msra.mxu0 0
    %3149 = vmatpush.bf16.xpose.msra.mxu0 0
    %3150 = vmatpush.bf16.xpose.msra.mxu0 0
    %3151 = vmatpush.bf16.xpose.msra.mxu0 0
    %3152 = vmatpush.bf16.xpose.msra.mxu0 0
    %3153 = vmatpush.bf16.xpose.msra.mxu0 0
    %3154 = vmatpush.bf16.xpose.msra.mxu0 0
    %3155 = vmatpush.bf16.xpose.msra.mxu0 %v3146
    %3156 = vmatmul.bf16.gmra.mxu0 %v3143
    %v3157 = vpop.f32.mrf.mxu0
    %v3158 = vadd.f32 0.0, %v3157
    %v3159 = vpop.f32.mrf.mxu0
    %3160 = vdwg.mxu0
    %v3162 = vsel %vm532, %v3073, 0
    %v3165 = vsel %vm532, %v3081, 0
    %3167 = vmatpush.bf16.xpose.msra.mxu0 0
    %3168 = vmatpush.bf16.xpose.msra.mxu0 0
    %3169 = vmatpush.bf16.xpose.msra.mxu0 0
    %3170 = vmatpush.bf16.xpose.msra.mxu0 0
    %3171 = vmatpush.bf16.xpose.msra.mxu0 0
    %3172 = vmatpush.bf16.xpose.msra.mxu0 0
    %3173 = vmatpush.bf16.xpose.msra.mxu0 0
    %3174 = vmatpush.bf16.xpose.msra.mxu0 %v3165
    %3175 = vmatmul.bf16.gmra.mxu0 %v3162
    %v3176 = vpop.f32.mrf.mxu0
    %v3177 = vadd.f32 0.0, %v3176
    %v3178 = vpop.f32.mrf.mxu0
    %3179 = vdwg.mxu0
    %v3181 = vsel %vm532, %v3074, 0
    %v3184 = vsel %vm532, %v3082, 0
    %3186 = vmatpush.bf16.xpose.msra.mxu0 0
    %3187 = vmatpush.bf16.xpose.msra.mxu0 0
    %3188 = vmatpush.bf16.xpose.msra.mxu0 0
    %3189 = vmatpush.bf16.xpose.msra.mxu0 0
    %3190 = vmatpush.bf16.xpose.msra.mxu0 0
    %3191 = vmatpush.bf16.xpose.msra.mxu0 0
    %3192 = vmatpush.bf16.xpose.msra.mxu0 0
    %3193 = vmatpush.bf16.xpose.msra.mxu0 %v3184
    %3194 = vmatmul.bf16.gmra.mxu0 %v3181
    %v3195 = vpop.f32.mrf.mxu0
    %v3196 = vadd.f32 0.0, %v3195
    %v3197 = vpop.f32.mrf.mxu0
    %3198 = vdwg.mxu0
    %v3200 = vsel %vm532, %v3075, 0
    %v3203 = vsel %vm532, %v3083, 0
    %3205 = vmatpush.bf16.xpose.msra.mxu0 0
    %3206 = vmatpush.bf16.xpose.msra.mxu0 0
    %3207 = vmatpush.bf16.xpose.msra.mxu0 0
    %3208 = vmatpush.bf16.xpose.msra.mxu0 0
    %3209 = vmatpush.bf16.xpose.msra.mxu0 0
    %3210 = vmatpush.bf16.xpose.msra.mxu0 0
    %3211 = vmatpush.bf16.xpose.msra.mxu0 0
    %3212 = vmatpush.bf16.xpose.msra.mxu0 %v3203
    %3213 = vmatmul.bf16.gmra.mxu0 %v3200
    %v3214 = vpop.f32.mrf.mxu0
    %v3215 = vadd.f32 0.0, %v3214
    %v3216 = vpop.f32.mrf.mxu0
    %3217 = vdwg.mxu0
    %v3219 = vsel %vm532, %v3076, 0
    %v3222 = vsel %vm532, %v3084, 0
    %3224 = vmatpush.bf16.xpose.msra.mxu0 0
    %3225 = vmatpush.bf16.xpose.msra.mxu0 0
    %3226 = vmatpush.bf16.xpose.msra.mxu0 0
    %3227 = vmatpush.bf16.xpose.msra.mxu0 0
    %3228 = vmatpush.bf16.xpose.msra.mxu0 0
    %3229 = vmatpush.bf16.xpose.msra.mxu0 0
    %3230 = vmatpush.bf16.xpose.msra.mxu0 0
    %3231 = vmatpush.bf16.xpose.msra.mxu0 %v3222
    %3232 = vmatmul.bf16.gmra.mxu0 %v3219
    %v3233 = vpop.f32.mrf.mxu0
    %v3234 = vadd.f32 0.0, %v3233
    %v3235 = vpop.f32.mrf.mxu0
    %3236 = vdwg.mxu0
    %v3237 = vmul.f32 %v3101, 0.35355338
    %v3238 = vmul.f32 %v3120, 0.35355338
    %v3239 = vmul.f32 %v3139, 0.35355338
    %v3240 = vmul.f32 %v3158, 0.35355338
    %v3241 = vmul.f32 %v3177, 0.35355338
    %v3242 = vmul.f32 %v3196, 0.35355338
    %v3243 = vmul.f32 %v3215, 0.35355338
    %v3244 = vmul.f32 %v3234, 0.35355338
    %v3245 = vsel %vm697, %v3237, -1e+09
    %v3246 = vsel %vm698, %v3238, -1e+09
    %v3247 = vsel %vm697, %v3239, -1e+09
    %v3248 = vsel %vm698, %v3240, -1e+09
    %v3249 = vsel %vm697, %v3241, -1e+09
    %v3250 = vsel %vm698, %v3242, -1e+09
    %v3251 = vsel %vm697, %v3243, -1e+09
    %v3252 = vsel %vm698, %v3244, -1e+09
    %v3253 = vsel %vm532, %v3245, -inf
    %3254 = vmax.xlane.f32.xlu0 %v3253
    %v3255 = vpop.xlane.xlu0 %3254
    %v3256 = vsel %vm532, %v3246, -inf
    %3257 = vmax.xlane.f32.xlu0 %v3256
    %v3258 = vpop.xlane.xlu0 %3257
    %v3259 = vsel %vm532, %v3247, -inf
    %3260 = vmax.xlane.f32.xlu0 %v3259
    %v3261 = vpop.xlane.xlu0 %3260
    %v3262 = vsel %vm532, %v3248, -inf
    %3263 = vmax.xlane.f32.xlu0 %v3262
    %v3264 = vpop.xlane.xlu0 %3263
    %v3265 = vsel %vm532, %v3249, -inf
    %3266 = vmax.xlane.f32.xlu0 %v3265
    %v3267 = vpop.xlane.xlu0 %3266
    %v3268 = vsel %vm532, %v3250, -inf
    %3269 = vmax.xlane.f32.xlu0 %v3268
    %v3270 = vpop.xlane.xlu0 %3269
    %v3271 = vsel %vm532, %v3251, -inf
    %3272 = vmax.xlane.f32.xlu0 %v3271
    %v3273 = vpop.xlane.xlu0 %3272
    %v3274 = vsel %vm532, %v3252, -inf
    %3275 = vmax.xlane.f32.xlu0 %v3274
    %v3276 = vpop.xlane.xlu0 %3275
    %v3277 = vsub.f32 %v3245, %v3255
    %v3278 = vsub.f32 %v3246, %v3258
    %v3279 = vsub.f32 %v3247, %v3261
    %v3280 = vsub.f32 %v3248, %v3264
    %v3281 = vsub.f32 %v3249, %v3267
    %v3282 = vsub.f32 %v3250, %v3270
    %v3283 = vsub.f32 %v3251, %v3273
    %v3284 = vsub.f32 %v3252, %v3276
    %v3285 = vmul.f32 %v3277, 1.442695
    %v3286 = vpow.pop %v3285
    %v3287 = vmul.f32 %v3278, 1.442695
    %v3288 = vpow.pop %v3287
    %v3289 = vmul.f32 %v3279, 1.442695
    %v3290 = vpow.pop %v3289
    %v3291 = vmul.f32 %v3280, 1.442695
    %v3292 = vpow.pop %v3291
    %v3293 = vmul.f32 %v3281, 1.442695
    %v3294 = vpow.pop %v3293
    %v3295 = vmul.f32 %v3282, 1.442695
    %v3296 = vpow.pop %v3295
    %v3297 = vmul.f32 %v3283, 1.442695
    %v3298 = vpow.pop %v3297
    %v3299 = vmul.f32 %v3284, 1.442695
    %v3300 = vpow.pop %v3299
    %v3301 = vsel %vm532, %v3286, 0.0
    %3302 = vadd.xlane.f32.xlu0 %v3301
    %v3303 = vpop.xlane.xlu0 %3302
    %v3304 = vsel %vm532, %v3288, 0.0
    %3305 = vadd.xlane.f32.xlu0 %v3304
    %v3306 = vpop.xlane.xlu0 %3305
    %v3307 = vsel %vm532, %v3290, 0.0
    %3308 = vadd.xlane.f32.xlu0 %v3307
    %v3309 = vpop.xlane.xlu0 %3308
    %v3310 = vsel %vm532, %v3292, 0.0
    %3311 = vadd.xlane.f32.xlu0 %v3310
    %v3312 = vpop.xlane.xlu0 %3311
    %v3313 = vsel %vm532, %v3294, 0.0
    %3314 = vadd.xlane.f32.xlu0 %v3313
    %v3315 = vpop.xlane.xlu0 %3314
    %v3316 = vsel %vm532, %v3296, 0.0
    %3317 = vadd.xlane.f32.xlu0 %v3316
    %v3318 = vpop.xlane.xlu0 %3317
    %v3319 = vsel %vm532, %v3298, 0.0
    %3320 = vadd.xlane.f32.xlu0 %v3319
    %v3321 = vpop.xlane.xlu0 %3320
    %v3322 = vsel %vm532, %v3300, 0.0
    %3323 = vadd.xlane.f32.xlu0 %v3322
    %v3324 = vpop.xlane.xlu0 %3323
    %v3325 = vrcp.pop %v3303
    %v3326 = vrcp.pop %v3306
    %v3327 = vrcp.pop %v3309
    %v3328 = vrcp.pop %v3312
    %v3329 = vrcp.pop %v3315
    %v3330 = vrcp.pop %v3318
    %v3331 = vrcp.pop %v3321
    %v3332 = vrcp.pop %v3324
    %v3333 = vmul.f32 %v3286, %v3325
    %v3334 = vmul.f32 %v3288, %v3326
    %v3335 = vmul.f32 %v3290, %v3327
    %v3336 = vmul.f32 %v3292, %v3328
    %v3337 = vmul.f32 %v3294, %v3329
    %v3338 = vmul.f32 %v3296, %v3330
    %v3339 = vmul.f32 %v3298, %v3331
    %v3340 = vmul.f32 %v3300, %v3332
    %v3341 = vpack.c.bf16 %v3333, %v3333
    %v3342 = vpack.c.bf16 %v3334, %v3334
    %v3343 = vpack.c.bf16 %v3335, %v3335
    %v3344 = vpack.c.bf16 %v3336, %v3336
    %v3345 = vpack.c.bf16 %v3337, %v3337
    %v3346 = vpack.c.bf16 %v3338, %v3338
    %v3347 = vpack.c.bf16 %v3339, %v3339
    %v3348 = vpack.c.bf16 %v3340, %v3340
    %v3349 = vpack.c.bf16 %v3045, %v3045
    %v3350 = vpack.c.bf16 %v3047, %v3047
    %v3351 = vpack.c.bf16 %v3052, %v3052
    %v3352 = vpack.c.bf16 %v3054, %v3054
    %v3353 = vpack.c.bf16 %v3058, %v3058
    %v3354 = vpack.c.bf16 %v3060, %v3060
    %v3355 = vpack.c.bf16 %v3064, %v3064
    %v3356 = vpack.c.bf16 %v3066, %v3066
    %v3358 = vsel %vm532, %v3341, 0
    %v3361 = vsel %vm814, %v3349, 0
    %3363 = vmatpush.bf16.msra.mxu0 0
    %3364 = vmatpush.bf16.msra.mxu0 0
    %3365 = vmatpush.bf16.msra.mxu0 0
    %3366 = vmatpush.bf16.msra.mxu0 0
    %3367 = vmatpush.bf16.msra.mxu0 0
    %3368 = vmatpush.bf16.msra.mxu0 0
    %3369 = vmatpush.bf16.msra.mxu0 0
    %3370 = vmatpush.bf16.msra.mxu0 %v3361
    %3371 = vmatmul.bf16.gmra.mxu0 %v3358
    %v3372 = vpop.f32.mrf.mxu0
    %v3373 = vadd.f32 0.0, %v3372
    %v3374 = vpop.f32.mrf.mxu0
    %3375 = vdwg.mxu0
    %v3377 = vsel %vm532, %v3342, 0
    %v3380 = vsel %vm814, %v3350, 0
    %3382 = vmatpush.bf16.msra.mxu0 0
    %3383 = vmatpush.bf16.msra.mxu0 0
    %3384 = vmatpush.bf16.msra.mxu0 0
    %3385 = vmatpush.bf16.msra.mxu0 0
    %3386 = vmatpush.bf16.msra.mxu0 0
    %3387 = vmatpush.bf16.msra.mxu0 0
    %3388 = vmatpush.bf16.msra.mxu0 0
    %3389 = vmatpush.bf16.msra.mxu0 %v3380
    %3390 = vmatmul.bf16.gmra.mxu0 %v3377
    %v3391 = vpop.f32.mrf.mxu0
    %v3392 = vadd.f32 0.0, %v3391
    %v3393 = vpop.f32.mrf.mxu0
    %3394 = vdwg.mxu0
    %v3396 = vsel %vm532, %v3343, 0
    %v3399 = vsel %vm814, %v3351, 0
    %3401 = vmatpush.bf16.msra.mxu0 0
    %3402 = vmatpush.bf16.msra.mxu0 0
    %3403 = vmatpush.bf16.msra.mxu0 0
    %3404 = vmatpush.bf16.msra.mxu0 0
    %3405 = vmatpush.bf16.msra.mxu0 0
    %3406 = vmatpush.bf16.msra.mxu0 0
    %3407 = vmatpush.bf16.msra.mxu0 0
    %3408 = vmatpush.bf16.msra.mxu0 %v3399
    %3409 = vmatmul.bf16.gmra.mxu0 %v3396
    %v3410 = vpop.f32.mrf.mxu0
    %v3411 = vadd.f32 0.0, %v3410
    %v3412 = vpop.f32.mrf.mxu0
    %3413 = vdwg.mxu0
    %v3415 = vsel %vm532, %v3344, 0
    %v3418 = vsel %vm814, %v3352, 0
    %3420 = vmatpush.bf16.msra.mxu0 0
    %3421 = vmatpush.bf16.msra.mxu0 0
    %3422 = vmatpush.bf16.msra.mxu0 0
    %3423 = vmatpush.bf16.msra.mxu0 0
    %3424 = vmatpush.bf16.msra.mxu0 0
    %3425 = vmatpush.bf16.msra.mxu0 0
    %3426 = vmatpush.bf16.msra.mxu0 0
    %3427 = vmatpush.bf16.msra.mxu0 %v3418
    %3428 = vmatmul.bf16.gmra.mxu0 %v3415
    %v3429 = vpop.f32.mrf.mxu0
    %v3430 = vadd.f32 0.0, %v3429
    %v3431 = vpop.f32.mrf.mxu0
    %3432 = vdwg.mxu0
    %v3434 = vsel %vm532, %v3345, 0
    %v3437 = vsel %vm814, %v3353, 0
    %3439 = vmatpush.bf16.msra.mxu0 0
    %3440 = vmatpush.bf16.msra.mxu0 0
    %3441 = vmatpush.bf16.msra.mxu0 0
    %3442 = vmatpush.bf16.msra.mxu0 0
    %3443 = vmatpush.bf16.msra.mxu0 0
    %3444 = vmatpush.bf16.msra.mxu0 0
    %3445 = vmatpush.bf16.msra.mxu0 0
    %3446 = vmatpush.bf16.msra.mxu0 %v3437
    %3447 = vmatmul.bf16.gmra.mxu0 %v3434
    %v3448 = vpop.f32.mrf.mxu0
    %v3449 = vadd.f32 0.0, %v3448
    %v3450 = vpop.f32.mrf.mxu0
    %3451 = vdwg.mxu0
    %v3453 = vsel %vm532, %v3346, 0
    %v3456 = vsel %vm814, %v3354, 0
    %3458 = vmatpush.bf16.msra.mxu0 0
    %3459 = vmatpush.bf16.msra.mxu0 0
    %3460 = vmatpush.bf16.msra.mxu0 0
    %3461 = vmatpush.bf16.msra.mxu0 0
    %3462 = vmatpush.bf16.msra.mxu0 0
    %3463 = vmatpush.bf16.msra.mxu0 0
    %3464 = vmatpush.bf16.msra.mxu0 0
    %3465 = vmatpush.bf16.msra.mxu0 %v3456
    %3466 = vmatmul.bf16.gmra.mxu0 %v3453
    %v3467 = vpop.f32.mrf.mxu0
    %v3468 = vadd.f32 0.0, %v3467
    %v3469 = vpop.f32.mrf.mxu0
    %3470 = vdwg.mxu0
    %v3472 = vsel %vm532, %v3347, 0
    %v3475 = vsel %vm814, %v3355, 0
    %3477 = vmatpush.bf16.msra.mxu0 0
    %3478 = vmatpush.bf16.msra.mxu0 0
    %3479 = vmatpush.bf16.msra.mxu0 0
    %3480 = vmatpush.bf16.msra.mxu0 0
    %3481 = vmatpush.bf16.msra.mxu0 0
    %3482 = vmatpush.bf16.msra.mxu0 0
    %3483 = vmatpush.bf16.msra.mxu0 0
    %3484 = vmatpush.bf16.msra.mxu0 %v3475
    %3485 = vmatmul.bf16.gmra.mxu0 %v3472
    %v3486 = vpop.f32.mrf.mxu0
    %v3487 = vadd.f32 0.0, %v3486
    %v3488 = vpop.f32.mrf.mxu0
    %3489 = vdwg.mxu0
    %v3491 = vsel %vm532, %v3348, 0
    %v3494 = vsel %vm814, %v3356, 0
    %3496 = vmatpush.bf16.msra.mxu0 0
    %3497 = vmatpush.bf16.msra.mxu0 0
    %3498 = vmatpush.bf16.msra.mxu0 0
    %3499 = vmatpush.bf16.msra.mxu0 0
    %3500 = vmatpush.bf16.msra.mxu0 0
    %3501 = vmatpush.bf16.msra.mxu0 0
    %3502 = vmatpush.bf16.msra.mxu0 0
    %3503 = vmatpush.bf16.msra.mxu0 %v3494
    %3504 = vmatmul.bf16.gmra.mxu0 %v3491
    %v3505 = vpop.f32.mrf.mxu0
    %v3506 = vadd.f32 0.0, %v3505
    %v3507 = vpop.f32.mrf.mxu0
    %3508 = vdwg.mxu0
    %3511 = vrot.lane.b32.xlu0 %v3411, 8
    %v3512 = vpop.permute.xlu0 %3511
    %3513 = vrot.lane.b32.xlu0 %v3430, 8
    %v3514 = vpop.permute.xlu0 %3513
    %3519 = vrot.lane.b32.xlu0 %v3449, 16
    %v3520 = vpop.permute.xlu0 %3519
    %3521 = vrot.lane.b32.xlu0 %v3468, 16
    %v3522 = vpop.permute.xlu0 %3521
    %3527 = vrot.lane.b32.xlu0 %v3487, 24
    %v3528 = vpop.permute.xlu0 %3527
    %3529 = vrot.lane.b32.xlu0 %v3506, 24
    %v3530 = vpop.permute.xlu0 %3529
    %v3533 = vsel %vm532, %v3373, %v3512
    %v3534 = vsel %vm532, %v3392, %v3514
    %v3535 = vsel %vm990, %v3533, %v3520
    %v3536 = vsel %vm990, %v3534, %v3522
    %v3537 = vsel %vm993, %v3535, %v3528
    %v3538 = vsel %vm993, %v3536, %v3530
    %s3539 = scalar_lea.vmem [#allocation14], 96
    %v3540 = vld [vmem:[%s3539] sm:$0xff]
    %v3541 = vld [vmem:[%s3539 + $0x8] sm:$0xff]
    %v3542 = vld [vmem:[%s3539 + $0x10] sm:$0xff]
    %v3543 = vld [vmem:[%s3539 + $0x18] sm:$0xff]
    %v3544 = vpack.c.bf16 %v3538, %v3537
    %v3545 = vpack.c.bf16 %v3541, %v3540
    %v3546 = vpack.c.bf16 %v3543, %v3542
    %v3548 = vsel %vm318, %v3544, 0
    %3550 = vmatpush.bf16.msra.mxu0 0
    %3551 = vmatpush.bf16.msra.mxu0 0
    %3552 = vmatpush.bf16.msra.mxu0 0
    %3553 = vmatpush.bf16.msra.mxu0 0
    %3554 = vmatpush.bf16.msra.mxu0 0
    %3555 = vmatpush.bf16.msra.mxu0 0
    %3556 = vmatpush.bf16.msra.mxu0 %v3546
    %3557 = vmatpush.bf16.msra.mxu0 %v3545
    %3558 = vmatmul.bf16.gmra.mxu0 %v3548
    %v3559 = vpop.f32.mrf.mxu0
    %v3560 = vadd.f32 0.0, %v3559
    %v3561 = vpop.f32.mrf.mxu0
    %v3562 = vadd.f32 0.0, %v3561
    %3563 = vdwg.mxu0
    %v3564 = vadd.f32 %v2867, %v3560
    %v3565 = vadd.f32 %v2868, %v3562
    %s3566 = scalar_lea.vmem [#allocation16], 3
    %v3567 = vld [vmem:[%s3566] sm:$0x1]
    %v3569 = vperm.slane %v3567, 0
    %v3571 = vadd.f32 %v3564, %v3569
    %v3572 = vadd.f32 %v3565, %v3569
    %s3573 = scalar_lea.vmem [#allocation17], 3
    %v3574 = vld [vmem:[%s3573] sm:$0x1]
    %s3575 = scalar_lea.vmem [#allocation19], 3
    %v3576 = vld [vmem:[%s3575] sm:$0x1]
    %v3577 = vsel %vm318, %v3571, 0.0
    %3578 = vadd.xlane.f32.xlu0 %v3577
    %v3579 = vpop.xlane.xlu0 %3578
    %v3580 = vsel %vm318, %v3572, 0.0
    %3581 = vadd.xlane.f32.xlu0 %v3580
    %v3582 = vpop.xlane.xlu0 %3581
    %v3583 = vmul.f32 %v3579, %v331
    %v3584 = vmul.f32 %v3582, %v331
    %v3585 = vsub.f32 %v3571, %v3583
    %v3586 = vsub.f32 %v3572, %v3584
    %v3587 = vmul.f32 %v3585, %v3585
    %v3588 = vmul.f32 %v3586, %v3586
    %v3589 = vsel %vm318, %v3587, 0.0
    %3590 = vadd.xlane.f32.xlu0 %v3589
    %v3591 = vpop.xlane.xlu0 %3590
    %v3592 = vsel %vm318, %v3588, 0.0
    %3593 = vadd.xlane.f32.xlu0 %v3592
    %v3594 = vpop.xlane.xlu0 %3593
    %v3595 = vmul.f32 %v3591, %v331
    %v3596 = vmul.f32 %v3594, %v331
    %v3597 = vadd.f32 %v3595, 1e-05
    %v3598 = vadd.f32 %v3596, 1e-05
    %v3599 = vrsqrt.pop %v3597
    %v3600 = vmul.f32 %v3599, %v3597
    %v3601 = vmul.f32 %v3600, %v3599
    %v3602 = vmul.f32 0.5, %v3601
    %v3603 = vsub.f32 1.5, %v3602
    %v3604 = vmul.f32 %v3599, %v3603
    %vm3605 = vweird.f32 %v3597
    %vm3606 = vweird.f32 %v3599
    %vm3607 = vmor %vm3605, %vm3606
    %v3608 = vsel %vm3607, %v3599, %v3604
    %v3609 = vrsqrt.pop %v3598
    %v3610 = vmul.f32 %v3609, %v3598
    %v3611 = vmul.f32 %v3610, %v3609
    %v3612 = vmul.f32 0.5, %v3611
    %v3613 = vsub.f32 1.5, %v3612
    %v3614 = vmul.f32 %v3609, %v3613
    %vm3615 = vweird.f32 %v3598
    %vm3616 = vweird.f32 %v3609
    %vm3617 = vmor %vm3615, %vm3616
    %v3618 = vsel %vm3617, %v3609, %v3614
    %v3619 = vmul.f32 %v3585, %v3608
    %v3620 = vmul.f32 %v3586, %v3618
    %v3622 = vperm.slane %v3574, 0
    %v3624 = vmul.f32 %v3619, %v3622
    %v3625 = vmul.f32 %v3620, %v3622
    %v3627 = vperm.slane %v3576, 0
    %v3629 = vadd.f32 %v3624, %v3627
    %v3630 = vadd.f32 %v3625, %v3627
    %s3631 = scalar_lea.vmem [#allocation20], 96
    %v3632 = vld [vmem:[%s3631] sm:$0xff]
    %v3633 = vld [vmem:[%s3631 + $0x8] sm:$0xff]
    %v3634 = vld [vmem:[%s3631 + $0x10] sm:$0xff]
    %v3635 = vld [vmem:[%s3631 + $0x18] sm:$0xff]
    %v3636 = vpack.c.bf16 %v3630, %v3629
    %v3637 = vpack.c.bf16 %v3633, %v3632
    %v3638 = vpack.c.bf16 %v3635, %v3634
    %s3639 = scalar_lea.vmem [#allocation22], 3
    %v3640 = vld [vmem:[%s3639] sm:$0x1]
    %v3642 = vperm.slane %v3640, 0
    %v3645 = vsel %vm318, %v3636, 0
    %3647 = vmatpush.bf16.msra.mxu0 0
    %3648 = vmatpush.bf16.msra.mxu0 0
    %3649 = vmatpush.bf16.msra.mxu0 0
    %3650 = vmatpush.bf16.msra.mxu0 0
    %3651 = vmatpush.bf16.msra.mxu0 0
    %3652 = vmatpush.bf16.msra.mxu0 0
    %3653 = vmatpush.bf16.msra.mxu0 %v3638
    %3654 = vmatpush.bf16.msra.mxu0 %v3637
    %3655 = vmatmul.bf16.gmra.mxu0 %v3645
    %v3656 = vpop.f32.mrf.mxu0
    %v3657 = vadd.f32 %v3642, %v3656
    %v3658 = vpop.f32.mrf.mxu0
    %v3659 = vadd.f32 %v3642, %v3658
    %3660 = vdwg.mxu0
    %v3661 = vmul.f32 %v3657, %v3657
    %v3662 = vmul.f32 %v3659, %v3659
    %v3663 = vmul.f32 %v3657, %v3661
    %v3664 = vmul.f32 %v3659, %v3662
    %v3665 = vmul.f32 %v3663, 0.044715
    %v3666 = vmul.f32 %v3664, 0.044715
    %v3667 = vadd.f32 %v3657, %v3665
    %v3668 = vadd.f32 %v3659, %v3666
    %v3669 = vmul.f32 %v3667, 0.7978846
    %v3670 = vmul.f32 %v3668, 0.7978846
    %v3671 = vtanh.pop %v3669
    %v3672 = vtanh.pop %v3670
    %v3673 = vadd.f32 %v3671, 1.0
    %v3674 = vadd.f32 %v3672, 1.0
    %v3675 = vmul.f32 %v3673, 0.5
    %v3676 = vmul.f32 %v3674, 0.5
    %v3677 = vmul.f32 %v3657, %v3675
    %v3678 = vmul.f32 %v3659, %v3676
    %s3679 = scalar_lea.vmem %s17, 192
    %v3680 = vld [vmem:[%s3679] sm:$0xff]
    %v3681 = vld [vmem:[%s3679 + $0x8] sm:$0xff]
    %v3682 = vld [vmem:[%s3679 + $0x10] sm:$0xff]
    %v3683 = vld [vmem:[%s3679 + $0x18] sm:$0xff]
    %v3684 = vld [vmem:[%s3679 + $0x20] sm:$0xff]
    %v3685 = vld [vmem:[%s3679 + $0x28] sm:$0xff]
    %v3686 = vld [vmem:[%s3679 + $0x30] sm:$0xff]
    %v3687 = vld [vmem:[%s3679 + $0x38] sm:$0xff]
    %v3688 = vpack.c.bf16 %v3678, %v3677
    %v3689 = vpack.c.bf16 %v3681, %v3680
    %v3690 = vpack.c.bf16 %v3683, %v3682
    %v3691 = vpack.c.bf16 %v3685, %v3684
    %v3692 = vpack.c.bf16 %v3687, %v3686
    %v3694 = vsel %vm1143, %v3688, 0
    %3696 = vmatpush.bf16.msra.mxu0 0
    %3697 = vmatpush.bf16.msra.mxu0 0
    %3698 = vmatpush.bf16.msra.mxu0 0
    %3699 = vmatpush.bf16.msra.mxu0 0
    %3700 = vmatpush.bf16.msra.mxu0 %v3692
    %3701 = vmatpush.bf16.msra.mxu0 %v3691
    %3702 = vmatpush.bf16.msra.mxu0 %v3690
    %3703 = vmatpush.bf16.msra.mxu0 %v3689
    %3704 = vmatmul.bf16.gmra.mxu0 %v3694
    %v3705 = vpop.f32.mrf.mxu0
    %v3706 = vadd.f32 0.0, %v3705
    %v3707 = vpop.f32.mrf.mxu0
    %v3708 = vadd.f32 0.0, %v3707
    %3709 = vdwg.mxu0
    %v3710 = vadd.f32 %v3571, %v3706
    %v3711 = vadd.f32 %v3572, %v3708
    %s3712 = scalar_lea.vmem [#allocation23], 3
    %v3713 = vld [vmem:[%s3712] sm:$0x1]
    %v3715 = vperm.slane %v3713, 0
    %v3717 = vadd.f32 %v3710, %v3715
    %v3718 = vadd.f32 %v3711, %v3715
    %v3719 = vld [vmem:[#allocation25] sm:$0x1]
    %v3720 = vld [vmem:[%s20] sm:$0x1]
    %v3721 = vsel %vm318, %v3717, 0.0
    %3722 = vadd.xlane.f32.xlu0 %v3721
    %v3723 = vpop.xlane.xlu0 %3722
    %v3724 = vsel %vm318, %v3718, 0.0
    %3725 = vadd.xlane.f32.xlu0 %v3724
    %v3726 = vpop.xlane.xlu0 %3725
    %v3727 = vmul.f32 %v3723, %v331
    %v3728 = vmul.f32 %v3726, %v331
    %v3729 = vsub.f32 %v3717, %v3727
    %v3730 = vsub.f32 %v3718, %v3728
    %v3731 = vmul.f32 %v3729, %v3729
    %v3732 = vmul.f32 %v3730, %v3730
    %v3733 = vsel %vm318, %v3731, 0.0
    %3734 = vadd.xlane.f32.xlu0 %v3733
    %v3735 = vpop.xlane.xlu0 %3734
    %v3736 = vsel %vm318, %v3732, 0.0
    %3737 = vadd.xlane.f32.xlu0 %v3736
    %v3738 = vpop.xlane.xlu0 %3737
    %v3739 = vmul.f32 %v3735, %v331
    %v3740 = vmul.f32 %v3738, %v331
    %v3741 = vadd.f32 %v3739, 1e-05
    %v3742 = vadd.f32 %v3740, 1e-05
    %v3743 = vrsqrt.pop %v3741
    %v3744 = vmul.f32 %v3743, %v3741
    %v3745 = vmul.f32 %v3744, %v3743
    %v3746 = vmul.f32 0.5, %v3745
    %v3747 = vsub.f32 1.5, %v3746
    %v3748 = vmul.f32 %v3743, %v3747
    %vm3749 = vweird.f32 %v3741
    %vm3750 = vweird.f32 %v3743
    %vm3751 = vmor %vm3749, %vm3750
    %v3752 = vsel %vm3751, %v3743, %v3748
    %v3753 = vrsqrt.pop %v3742
    %v3754 = vmul.f32 %v3753, %v3742
    %v3755 = vmul.f32 %v3754, %v3753
    %v3756 = vmul.f32 0.5, %v3755
    %v3757 = vsub.f32 1.5, %v3756
    %v3758 = vmul.f32 %v3753, %v3757
    %vm3759 = vweird.f32 %v3742
    %vm3760 = vweird.f32 %v3753
    %vm3761 = vmor %vm3759, %vm3760
    %v3762 = vsel %vm3761, %v3753, %v3758
    %v3763 = vmul.f32 %v3729, %v3752
    %v3764 = vmul.f32 %v3730, %v3762
    %v3766 = vperm.slane %v3719, 0
    %v3768 = vmul.f32 %v3763, %v3766
    %v3769 = vmul.f32 %v3764, %v3766
    %v3771 = vperm.slane %v3720, 0
    %v3773 = vadd.f32 %v3768, %v3771
    %v3774 = vadd.f32 %v3769, %v3771
    %v3775 = vld [vmem:[%s21] sm:$0xff]
    %v3776 = vld [vmem:[%s21 + $0x8] sm:$0xff]
    %v3777 = vld [vmem:[%s21 + $0x10] sm:$0xff]
    %v3778 = vld [vmem:[%s21 + $0x18] sm:$0xff]
    %v3779 = vpack.c.bf16 %v3774, %v3773
    %v3780 = vpack.c.bf16 %v3776, %v3775
    %v3781 = vpack.c.bf16 %v3778, %v3777
    %v3782 = vld [vmem:[%s22] sm:$0x1]
    %v3784 = vperm.slane %v3782, 0
    %v3787 = vsel %vm318, %v3779, 0
    %3789 = vmatpush.bf16.msra.mxu0 0
    %3790 = vmatpush.bf16.msra.mxu0 0
    %3791 = vmatpush.bf16.msra.mxu0 0
    %3792 = vmatpush.bf16.msra.mxu0 0
    %3793 = vmatpush.bf16.msra.mxu0 0
    %3794 = vmatpush.bf16.msra.mxu0 0
    %3795 = vmatpush.bf16.msra.mxu0 %v3781
    %3796 = vmatpush.bf16.msra.mxu0 %v3780
    %3797 = vmatmul.bf16.gmra.mxu0 %v3787
    %v3798 = vpop.f32.mrf.mxu0
    %v3799 = vadd.f32 %v3784, %v3798
    %v3800 = vpop.f32.mrf.mxu0
    %v3801 = vadd.f32 %v3784, %v3800
    %3802 = vdwg.mxu0
    %v3803 = vlaneseq
    %v3804 = vand.u32 %v3803, 127
    %vm3805 = vcmp.lt.s32.totalorder %v3804, 28
    %v3806 = vsel %vm3805, %v3799, -1e+30
    %v3807 = vsel %vm3805, %v3801, -1e+30
    %3808 = vmax.xlane.f32.xlu0 %v3806
    %v3809 = vpop.xlane.xlu0 %3808
    %3810 = vmax.xlane.f32.xlu0 %v3807
    %v3811 = vpop.xlane.xlu0 %3810
    %v3812 = vsub.f32 %v3806, %v3809
    %v3813 = vsub.f32 %v3807, %v3811
    %v3814 = vmul.f32 %v3812, 1.442695
    %v3815 = vpow.pop %v3814
    %v3816 = vmul.f32 %v3813, 1.442695
    %v3817 = vpow.pop %v3816
    %3818 = vadd.xlane.f32.xlu0 %v3815
    %v3819 = vpop.xlane.xlu0 %3818
    %3820 = vadd.xlane.f32.xlu0 %v3817
    %v3821 = vpop.xlane.xlu0 %3820
    %v3822 = vlog2.pop %v3819
    %v3823 = vmul.f32 %v3822, 0.6931472
    %v3824 = vlog2.pop %v3821
    %v3825 = vmul.f32 %v3824, 0.6931472
    %v3826 = vadd.f32 %v3823, %v3809
    %v3827 = vadd.f32 %v3825, %v3811
    %v3828 = vsub.f32 %v3806, %v3826
    %v3829 = vsub.f32 %v3807, %v3827
    %v3830 = vld [vmem:[%s2] sm:$0xff]
    %v3831 = vld [vmem:[%s2 + $0x8] sm:$0xff]
    %3832 = vset.pattern.permute.xlu0 0
    %3833 = vperm.xlu0 %3832, %v3830
    %v3834 = vpop.permute.xlu0 %3833
    %3835 = vset.pattern.permute.xlu0 0
    %3836 = vperm.xlu0 %3835, %v3831
    %v3837 = vpop.permute.xlu0 %3836
    %vm3838 = vcmp.eq.s32.totalorder %v3804, %v3834
    %vm3839 = vcmp.eq.s32.totalorder %v3804, %v3837
    %v3840 = vsel %vm3838, %v3828, 0.0
    %v3841 = vsel %vm3839, %v3829, 0.0
    %3842 = vadd.xlane.f32.xlu0 %v3840
    %v3843 = vpop.xlane.xlu0 %3842
    %3844 = vadd.xlane.f32.xlu0 %v3841
    %v3845 = vpop.xlane.xlu0 %3844
    %v3846 = vsub.f32 0.0, %v3843
    %v3847 = vsub.f32 0.0, %v3845
    %vm3848 = vcmp.ne.s32.totalorder %v3830, 1
    %vm3849 = vcmp.ne.s32.totalorder %v3831, 1
    %v3850 = vsel %vm3848, 1, 0
    %v3851 = vsel %vm3849, 1, 0
    %v3852 = vcvt.s32.f32 %v3850
    %v3853 = vcvt.s32.f32 %v3851
    %v3854 = vmul.f32 %v3846, %v3852
    %v3855 = vmul.f32 %v3847, %v3853
    %vm3856 = vcmask 7168
    %v3857 = vsel %vm3856, %v3854, 0.0
    %v3858 = vsel %vm3856, %v3855, 0.0
    %v3859 = vadd.f32 %v3857, %v3858
    %3860 = vadd.xlane.f32.xlu0 %v3859
    %v3861 = vpop.xlane.xlu0 %3860
    %v3862 = vrot.slane %v3861, 4
    %v3863 = vadd.f32 %v3861, %v3862
    %v3864 = vrot.slane %v3863, 2
    %v3865 = vadd.f32 %v3863, %v3864
    %v3866 = vrot.slane %v3865, 1
    %v3867 = vadd.f32 %v3865, %v3866
    %s3868 = vtos %v3867
    %s3869 = scalar_lea.smem [#allocation26], 0
    %3870 = sst [smem:[%s3869]] %s3868
    %v3871 = vsel %vm3856, %v3852, 0.0
    %v3872 = vsel %vm3856, %v3853, 0.0
    %v3873 = vadd.f32 %v3871, %v3872
    %3874 = vadd.xlane.f32.xlu0 %v3873
    %v3875 = vpop.xlane.xlu0 %3874
    %v3876 = vrot.slane %v3875, 4
    %v3877 = vadd.f32 %v3875, %v3876
    %v3878 = vrot.slane %v3877, 2
    %v3879 = vadd.f32 %v3877, %v3878
    %v3880 = vrot.slane %v3879, 1
    %v3881 = vadd.f32 %v3879, %v3880
    %s3882 = vtos %v3881
    %s3883 = scalar_lea.smem [#allocation27], 0
    %3884 = sst [smem:[%s3883]] %s3882
    // Predicated region
    $region154: #{tpu_custom_call.1} parent=1 // pred_check
      _
    $region155: #{tpu_custom_call.1} parent=1 // pred_check_branch
      %3886 = sbr.rel (0) target = $region157
    $region156: #{tpu_custom_call.1} parent=1 // pred_region
      %3888 = vsyncadd [#allocation4], 0
      %s3890 = sshll.u32 %s23, 4
      %s3891 = int_to_ptr.hbm [resolvable:$true] %s3890
      %3893 = dma.smem_to_hbm [#allocation26], 16, %s3891, [#allocation4]
    $region157: #{tpu_custom_call.1} parent=1 // pred_fallthru
      _
    // Predicated region
    $region158: #{tpu_custom_call.1} parent=1 // pred_check
      _
    $region159: #{tpu_custom_call.1} parent=1 // pred_check_branch
      %3895 = sbr.rel (0) target = $region161
    $region160: #{tpu_custom_call.1} parent=1 // pred_region
      %3897 = vsyncadd [#allocation28], 0
      %s3899 = sshll.u32 %s24, 4
      %s3900 = int_to_ptr.hbm [resolvable:$true] %s3899
      %3902 = dma.smem_to_hbm [#allocation27], 16, %s3900, [#allocation28]
    $region161: #{tpu_custom_call.1} parent=1 // pred_fallthru
      _
    // Predicated region
    $region162: #{tpu_custom_call.1} parent=1 // pred_check
      _
    $region163: #{tpu_custom_call.1} parent=1 // pred_check_branch
      %3904 = sbr.rel (0) target = $region165
    $region164: #{tpu_custom_call.1} parent=1 // pred_region
      %3906 = dma.done [#allocation4], 16
    $region165: #{tpu_custom_call.1} parent=1 // pred_fallthru
      _
    // Predicated region
    $region166: #{tpu_custom_call.1} parent=1 // pred_check
      _
    $region167: #{tpu_custom_call.1} parent=1 // pred_check_branch
      %3908 = sbr.rel (0) target = $region169
    $region168: #{tpu_custom_call.1} parent=1 // pred_region
      %3910 = dma.done [#allocation28], 16
    $region169: #{tpu_custom_call.1} parent=1 // pred_fallthru
      _
    %3911 = sfence
    %3912 = vsyncpa [#allocation3], 1
    %3913 = vsyncpa [#allocation6], 1
    %3914 = vsyncpa [#allocation9], 1
    %3915 = vsyncpa [#allocation12], 1
    %3916 = vsyncpa [#allocation15], 1
    %3917 = vsyncpa [#allocation18], 1
    %3918 = vsyncpa [#allocation21], 1
    %3919 = vsyncpa [#allocation24], 1
    %3920 = vsyncpa [#allocation4], 1
    %3921 = vsyncpa [#allocation28], 1

</llo_original>
